<compile_context>
chip_gen: v7x
topology: tpu7x:2x2x1
jax: 0.10.0
libtpu: 0.0.40
codegen_flags: <defaults>
</compile_context>

<pallas_src>
import functools

import jax
import jax.numpy as jnp
from jax import lax
from jax.experimental import pallas as pl
from jax.experimental.pallas import tpu as pltpu


def _elstm_kernel(x_ref, wih0_ref, whh0_ref, b0_ref, wih1_ref, whh1_ref, b1_ref,
                  h_out_ref, c_out_ref,
                  gx_ref, h0_ref, c0_ref, h1_ref, c1_ref,
                  *, hidden_size, batch, chunk):
    H, B, T = hidden_size, batch, chunk
    chunk_idx = pl.program_id(0)

    # Zero-init the carried (h, c) state on the first time-chunk (PyTorch default).
    @pl.when(chunk_idx == 0)
    def _():
        h0_ref[...] = jnp.zeros_like(h0_ref)
        c0_ref[...] = jnp.zeros_like(c0_ref)
        h1_ref[...] = jnp.zeros_like(h1_ref)
        c1_ref[...] = jnp.zeros_like(c1_ref)

    # Hoisted loop-invariant loads / broadcasts (JAX does not CSE broadcast_in_dim).
    whh0 = whh0_ref[...]                                   # (H, 4H) f32
    wih1 = wih1_ref[...]                                   # (H, 4H) f32
    whh1 = whh1_ref[...]                                   # (H, 4H) f32
    b1 = jnp.broadcast_to(b1_ref[...], (B, 4 * H))         # (B, 4H) f32

    # Hoist the layer-0 input projection out of the recurrence: one chunk-wide
    # (T*B, H) @ (H, 4H) bf16 matmul with f32 accumulation, into VMEM scratch.
    gx_ref[...] = (
        jnp.dot(x_ref[...], wih0_ref[...], preferred_element_type=jnp.float32)
        + jnp.broadcast_to(b0_ref[...], (T * B, 4 * H)))

    def cell(gates, c):
        # One sigmoid pass + one tanh pass over the whole (B, 4H) gate tensor
        # (4H = 128 lanes = exactly one vreg row at H = 32); slice afterwards.
        sg = jax.nn.sigmoid(gates)
        th = jnp.tanh(gates)
        i_g = sg[:, 0 * H:1 * H]
        f_g = sg[:, 1 * H:2 * H]
        g_g = th[:, 2 * H:3 * H]
        o_g = sg[:, 3 * H:4 * H]
        c_new = f_g * c + i_g * g_g
        h_new = o_g * jnp.tanh(c_new)
        return h_new, c_new

    def step(t, carry):
        h0, c0, h1, c1 = carry
        # Layer 0: precomputed x-side gates + f32 recurrent matmul (K = H = 32).
        gates0 = gx_ref[pl.ds(t * B, B), :] + jnp.dot(
            h0, whh0, preferred_element_type=jnp.float32)
        h0, c0 = cell(gates0, c0)
        # Layer 1: two independent K=32 matmuls (no per-step concatenate).
        gates1 = (jnp.dot(h0, wih1, preferred_element_type=jnp.float32)
                  + jnp.dot(h1, whh1, preferred_element_type=jnp.float32) + b1)
        h1, c1 = cell(gates1, c1)
        return (h0, c0, h1, c1)

    carry0 = (h0_ref[...], c0_ref[...], h1_ref[...], c1_ref[...])
    h0, c0, h1, c1 = lax.fori_loop(0, T, step, carry0, unroll=min(T, 8))

    # Persist the carried state for the next time-chunk.
    h0_ref[...] = h0
    c0_ref[...] = c0
    h1_ref[...] = h1
    c1_ref[...] = c1

    @pl.when(chunk_idx == pl.num_programs(0) - 1)
    def _():
        h_out_ref[0] = h0
        h_out_ref[1] = h1
        c_out_ref[0] = c0
        c_out_ref[1] = c1


def _pick_chunk(seq_len, batch, max_chunk=256):
    """Largest T <= max_chunk dividing seq_len with (T*batch) % 8 == 0, else seq_len."""
    if seq_len <= max_chunk:
        return seq_len
    for cand in range(max_chunk, 0, -1):
        if seq_len % cand == 0 and (cand * batch) % 8 == 0:
            return cand
    return seq_len


def elstm_forward(frame_features, params):
    """frame_features: (seq_len, B, H) f32.  Returns (h_last, c_last), each (2, B, H) f32."""
    seq_len, B, H = frame_features.shape
    assert params["wih0"].shape == (H, 4 * H), "module is used with input_size == hidden_size"

    T = _pick_chunk(seq_len, B)
    num_chunks = seq_len // T

    # Time-major, lane/sublane-dense 2-D layout: row index = t*B + b.
    x2d = frame_features.reshape(seq_len * B, H).astype(jnp.bfloat16)

    kernel = functools.partial(_elstm_kernel, hidden_size=H, batch=B, chunk=T)
    full2 = lambda i: (0, 0)
    full3 = lambda i: (0, 0, 0)

    h_last, c_last = pl.pallas_call(
        kernel,
        out_shape=(jax.ShapeDtypeStruct((2, B, H), jnp.float32),
                   jax.ShapeDtypeStruct((2, B, H), jnp.float32)),
        grid_spec=pltpu.PrefetchScalarGridSpec(
            num_scalar_prefetch=0,
            grid=(num_chunks,),                          # time chunks, streamed
            in_specs=[
                pl.BlockSpec((T * B, H), lambda i: (i, 0)),   # x chunk (bf16)
                pl.BlockSpec((H, 4 * H), full2),              # W_ih layer 0 (bf16)
                pl.BlockSpec((H, 4 * H), full2),              # W_hh layer 0 (f32)
                pl.BlockSpec((1, 4 * H), full2),              # summed bias layer 0 (f32)
                pl.BlockSpec((H, 4 * H), full2),              # W_ih layer 1 (f32)
                pl.BlockSpec((H, 4 * H), full2),              # W_hh layer 1 (f32)
                pl.BlockSpec((1, 4 * H), full2),              # summed bias layer 1 (f32)
            ],
            out_specs=[pl.BlockSpec((2, B, H), full3),
                       pl.BlockSpec((2, B, H), full3)],
            scratch_shapes=[
                pltpu.VMEM((T * B, 4 * H), jnp.float32),   # precomputed layer-0 gates
                pltpu.VMEM((B, H), jnp.float32),           # h0 carry
                pltpu.VMEM((B, H), jnp.float32),           # c0 carry
                pltpu.VMEM((B, H), jnp.float32),           # h1 carry
                pltpu.VMEM((B, H), jnp.float32),           # c1 carry
            ]),
        compiler_params=pltpu.CompilerParams(
            dimension_semantics=("arbitrary",)),           # serial recurrence over time
    )(x2d, params["wih0"], params["whh0"], params["b0"],
      params["wih1"], params["whh1"], params["b1"])
    return h_last, c_last


def pack_params(pt):
    """Pack PyTorch-layout nn.LSTM weights (gate order i, f, g, o) into kernel layout."""
    return {
        "wih0": pt["wih0"].T.astype(jnp.bfloat16),                     # (H, 4H) bf16
        "whh0": pt["whh0"].T.astype(jnp.float32),                      # (H, 4H) f32
        "b0":   (pt["bih0"] + pt["bhh0"])[None, :].astype(jnp.float32),
        "wih1": pt["wih1"].T.astype(jnp.float32),                      # (H, 4H) f32
        "whh1": pt["whh1"].T.astype(jnp.float32),                      # (H, 4H) f32
        "b1":   (pt["bih1"] + pt["bhh1"])[None, :].astype(jnp.float32),
    }


def ref_forward(frame_features, pt):
    """Pure-JAX f32 reference mirroring PyTorch nn.LSTM (2 layers, zero init)."""
    seq_len, B, H = frame_features.shape
    h = [jnp.zeros((B, H), jnp.float32), jnp.zeros((B, H), jnp.float32)]
    c = [jnp.zeros((B, H), jnp.float32), jnp.zeros((B, H), jnp.float32)]
    layers = [("wih0", "whh0", "bih0", "bhh0"), ("wih1", "whh1", "bih1", "bhh1")]
    for t in range(seq_len):
        inp = frame_features[t]
        for l, (wih, whh, bih, bhh) in enumerate(layers):
            gates = inp @ pt[wih].T + pt[bih] + h[l] @ pt[whh].T + pt[bhh]
            i = jax.nn.sigmoid(gates[:, :H])
            f = jax.nn.sigmoid(gates[:, H:2 * H])
            g = jnp.tanh(gates[:, 2 * H:3 * H])
            o = jax.nn.sigmoid(gates[:, 3 * H:])
            c[l] = f * c[l] + i * g
            h[l] = o * jnp.tanh(c[l])
            inp = h[l]
    return jnp.stack(h, axis=0), jnp.stack(c, axis=0)


if __name__ == "__main__":
    # Small shapes consistent with the module: frame_features is [seq_len, 1, hidden_size].
    SEQ_LEN = 8
    B = 1
    H = 32          # hidden_size == input_size

    key = jax.random.PRNGKey(0)
    ks = jax.random.split(key, 9)
    scale = 1.0 / jnp.sqrt(H)

    def u(k, shape):
        return jax.random.uniform(k, shape, jnp.float32, -scale, scale)

    # PyTorch-layout nn.LSTM parameters (gate order i, f, g, o).
    pt = {
        "wih0": u(ks[0], (4 * H, H)), "whh0": u(ks[1], (4 * H, H)),
        "bih0": u(ks[2], (4 * H,)),   "bhh0": u(ks[3], (4 * H,)),
        "wih1": u(ks[4], (4 * H, H)), "whh1": u(ks[5], (4 * H, H)),
        "bih1": u(ks[6], (4 * H,)),   "bhh1": u(ks[7], (4 * H,)),
    }
    frame_features = jax.random.normal(ks[8], (SEQ_LEN, B, H), jnp.float32)

    params = pack_params(pt)
    h_last, c_last = elstm_forward(frame_features, params)
    h_last, c_last = jax.block_until_ready((h_last, c_last))

    h_ref, c_ref = ref_forward(frame_features, pt)
    assert h_last.shape == (2, B, H) and c_last.shape == (2, B, H)
    # Only the (non-recurrent) x-side projection uses bf16 operands; the
    # recurrent path is f32, so errors no longer compound through time.
    assert jnp.allclose(h_last, h_ref, atol=2e-2, rtol=2e-2), "h_last mismatch vs reference"
    assert jnp.allclose(c_last, c_ref, atol=2e-2, rtol=2e-2), "c_last mismatch vs reference"

    print("KERNEL_OK")
</pallas_src>

<mosaic_0001>
module attributes {stable_mosaic.version = 11 : i64} {
  func.func @_elstm_kernel(%arg0: i32, %arg1: memref<8x32xbf16, #tpu.memory_space<vmem>>, %arg2: memref<32x128xbf16, #tpu.memory_space<vmem>>, %arg3: memref<32x128xf32, #tpu.memory_space<vmem>>, %arg4: memref<1x128xf32, #tpu.memory_space<vmem>>, %arg5: memref<32x128xf32, #tpu.memory_space<vmem>>, %arg6: memref<32x128xf32, #tpu.memory_space<vmem>>, %arg7: memref<1x128xf32, #tpu.memory_space<vmem>>, %arg8: memref<2x1x32xf32, #tpu.memory_space<vmem>>, %arg9: memref<2x1x32xf32, #tpu.memory_space<vmem>>, %arg10: memref<8x128xf32, #tpu.memory_space<vmem>>, %arg11: memref<1x32xf32, #tpu.memory_space<vmem>>, %arg12: memref<1x32xf32, #tpu.memory_space<vmem>>, %arg13: memref<1x32xf32, #tpu.memory_space<vmem>>, %arg14: memref<1x32xf32, #tpu.memory_space<vmem>>) attributes {dimension_semantics = [#tpu.dimension_semantics<arbitrary>], iteration_bounds = array<i64: 1>, scalar_prefetch = 0 : i64, scratch_operands = 5 : i64, tpu.core_type = #tpu.core_type<tc>, window_params = [{transform_indices = @transform_0, window_bounds = array<i64: 8, 32>}, {pipeline_mode = #tpu.pipeline_mode<synchronous>, transform_indices = @transform_1, window_bounds = array<i64: 32, 128>}, {pipeline_mode = #tpu.pipeline_mode<synchronous>, transform_indices = @transform_2, window_bounds = array<i64: 32, 128>}, {pipeline_mode = #tpu.pipeline_mode<synchronous>, transform_indices = @transform_3, window_bounds = array<i64: 1, 128>}, {pipeline_mode = #tpu.pipeline_mode<synchronous>, transform_indices = @transform_4, window_bounds = array<i64: 32, 128>}, {pipeline_mode = #tpu.pipeline_mode<synchronous>, transform_indices = @transform_5, window_bounds = array<i64: 32, 128>}, {pipeline_mode = #tpu.pipeline_mode<synchronous>, transform_indices = @transform_6, window_bounds = array<i64: 1, 128>}, {pipeline_mode = #tpu.pipeline_mode<synchronous>, transform_indices = @transform_7, window_bounds = array<i64: 2, 1, 32>}, {pipeline_mode = #tpu.pipeline_mode<synchronous>, transform_indices = @transform_8, window_bounds = array<i64: 2, 1, 32>}]} {
    %c0_i32 = arith.constant 0 : i32
    %0 = arith.cmpi eq, %arg0, %c0_i32 : i32
    %1 = arith.extui %0 : i1 to i32
    %c0_i32_0 = arith.constant 0 : i32
    %2 = arith.cmpi ne, %1, %c0_i32_0 : i32
    scf.if %2 {
      %cst_91 = arith.constant 0.000000e+00 : f32
      %338 = vector.broadcast %cst_91 : f32 to vector<1x32xf32>
      %c0_92 = arith.constant 0 : index
      %c0_93 = arith.constant 0 : index
      %339 = vector.load %arg11[%c0_92, %c0_93] : memref<1x32xf32, #tpu.memory_space<vmem>>, vector<1x32xf32>
      tpu.vector_store %arg11[%c0_92, %c0_93], %338 {strides = array<i32>} : memref<1x32xf32, #tpu.memory_space<vmem>>, vector<1x32xf32>,
      %cst_94 = arith.constant 0.000000e+00 : f32
      %340 = vector.broadcast %cst_94 : f32 to vector<1x32xf32>
      %c0_95 = arith.constant 0 : index
      %c0_96 = arith.constant 0 : index
      %341 = vector.load %arg12[%c0_95, %c0_96] : memref<1x32xf32, #tpu.memory_space<vmem>>, vector<1x32xf32>
      tpu.vector_store %arg12[%c0_95, %c0_96], %340 {strides = array<i32>} : memref<1x32xf32, #tpu.memory_space<vmem>>, vector<1x32xf32>,
      %cst_97 = arith.constant 0.000000e+00 : f32
      %342 = vector.broadcast %cst_97 : f32 to vector<1x32xf32>
      %c0_98 = arith.constant 0 : index
      %c0_99 = arith.constant 0 : index
      %343 = vector.load %arg13[%c0_98, %c0_99] : memref<1x32xf32, #tpu.memory_space<vmem>>, vector<1x32xf32>
      tpu.vector_store %arg13[%c0_98, %c0_99], %342 {strides = array<i32>} : memref<1x32xf32, #tpu.memory_space<vmem>>, vector<1x32xf32>,
      %cst_100 = arith.constant 0.000000e+00 : f32
      %344 = vector.broadcast %cst_100 : f32 to vector<1x32xf32>
      %c0_101 = arith.constant 0 : index
      %c0_102 = arith.constant 0 : index
      %345 = vector.load %arg14[%c0_101, %c0_102] : memref<1x32xf32, #tpu.memory_space<vmem>>, vector<1x32xf32>
      tpu.vector_store %arg14[%c0_101, %c0_102], %344 {strides = array<i32>} : memref<1x32xf32, #tpu.memory_space<vmem>>, vector<1x32xf32>,
    } else {
    }
    %c0 = arith.constant 0 : index
    %c0_1 = arith.constant 0 : index
    %3 = vector.load %arg3[%c0, %c0_1] : memref<32x128xf32, #tpu.memory_space<vmem>>, vector<32x128xf32>
    %c0_2 = arith.constant 0 : index
    %c0_3 = arith.constant 0 : index
    %4 = vector.load %arg5[%c0_2, %c0_3] : memref<32x128xf32, #tpu.memory_space<vmem>>, vector<32x128xf32>
    %c0_4 = arith.constant 0 : index
    %c0_5 = arith.constant 0 : index
    %5 = vector.load %arg6[%c0_4, %c0_5] : memref<32x128xf32, #tpu.memory_space<vmem>>, vector<32x128xf32>
    %c0_6 = arith.constant 0 : index
    %c0_7 = arith.constant 0 : index
    %6 = vector.load %arg7[%c0_6, %c0_7] : memref<1x128xf32, #tpu.memory_space<vmem>>, vector<1x128xf32>
    %c0_8 = arith.constant 0 : index
    %c0_9 = arith.constant 0 : index
    %7 = vector.load %arg1[%c0_8, %c0_9] : memref<8x32xbf16, #tpu.memory_space<vmem>>, vector<8x32xbf16>
    %c0_10 = arith.constant 0 : index
    %c0_11 = arith.constant 0 : index
    %8 = vector.load %arg2[%c0_10, %c0_11] : memref<32x128xbf16, #tpu.memory_space<vmem>>, vector<32x128xbf16>
    %cst = arith.constant dense<0.000000e+00> : vector<8x128xf32>
    %9 = tpu.matmul %7, %8, %cst {dimension_numbers = #tpu.dot_dimension_numbers<[1], [0], [0], [1], [0, 0, 1, 1], [], []>} : vector<8x32xbf16>, vector<32x128xbf16>, vector<8x128xf32> -> vector<8x128xf32>
    %c0_12 = arith.constant 0 : index
    %c0_13 = arith.constant 0 : index
    %10 = vector.load %arg4[%c0_12, %c0_13] : memref<1x128xf32, #tpu.memory_space<vmem>>, vector<1x128xf32>
    %11 = vector.shape_cast %10 : vector<1x128xf32> to vector<1x128xf32>
    %12 = vector.broadcast %11 : vector<1x128xf32> to vector<8x128xf32>
    %13 = arith.addf %9, %12 : vector<8x128xf32>
    %c0_14 = arith.constant 0 : index
    %c0_15 = arith.constant 0 : index
    %14 = vector.load %arg10[%c0_14, %c0_15] : memref<8x128xf32, #tpu.memory_space<vmem>>, vector<8x128xf32>
    tpu.vector_store %arg10[%c0_14, %c0_15], %13 {strides = array<i32>} : memref<8x128xf32, #tpu.memory_space<vmem>>, vector<8x128xf32>,
    %c0_16 = arith.constant 0 : index
    %c0_17 = arith.constant 0 : index
    %15 = vector.load %arg11[%c0_16, %c0_17] : memref<1x32xf32, #tpu.memory_space<vmem>>, vector<1x32xf32>
    %c0_18 = arith.constant 0 : index
    %c0_19 = arith.constant 0 : index
    %16 = vector.load %arg12[%c0_18, %c0_19] : memref<1x32xf32, #tpu.memory_space<vmem>>, vector<1x32xf32>
    %c0_20 = arith.constant 0 : index
    %c0_21 = arith.constant 0 : index
    %17 = vector.load %arg13[%c0_20, %c0_21] : memref<1x32xf32, #tpu.memory_space<vmem>>, vector<1x32xf32>
    %c0_22 = arith.constant 0 : index
    %c0_23 = arith.constant 0 : index
    %18 = vector.load %arg14[%c0_22, %c0_23] : memref<1x32xf32, #tpu.memory_space<vmem>>, vector<1x32xf32>
    %c0_i32_24 = arith.constant 0 : i32
    %c1_i32 = arith.constant 1 : i32
    %19 = arith.muli %c0_i32_24, %c1_i32 : i32
    %20 = arith.index_cast %19 : i32 to index
    %c0_25 = arith.constant 0 : index
    %21 = vector.load %arg10[%20, %c0_25] : memref<8x128xf32, #tpu.memory_space<vmem>>, vector<1x128xf32>
    %cst_26 = arith.constant dense<0.000000e+00> : vector<1x128xf32>
    %22 = tpu.matmul %15, %3, %cst_26 {dimension_numbers = #tpu.dot_dimension_numbers<[1], [0], [0], [1], [0, 0, 1, 1], [], []>} : vector<1x32xf32>, vector<32x128xf32>, vector<1x128xf32> -> vector<1x128xf32>
    %23 = arith.addf %21, %22 : vector<1x128xf32>
    %24 = arith.negf %23 : vector<1x128xf32>
    %25 = math.exp %24 : vector<1x128xf32>
    %cst_27 = arith.constant 1.000000e+00 : f32
    %26 = vector.broadcast %cst_27 : f32 to vector<1x128xf32>
    %27 = arith.addf %26, %25 : vector<1x128xf32>
    %28 = arith.divf %26, %27 : vector<1x128xf32>
    %29 = math.tanh %23 : vector<1x128xf32>
    %30 = vector.extract_strided_slice %28 {offsets = [0, 0], sizes = [1, 32], strides = [1, 1]} : vector<1x128xf32> to vector<1x32xf32>
    %31 = vector.extract_strided_slice %28 {offsets = [0, 32], sizes = [1, 32], strides = [1, 1]} : vector<1x128xf32> to vector<1x32xf32>
    %32 = vector.extract_strided_slice %29 {offsets = [0, 64], sizes = [1, 32], strides = [1, 1]} : vector<1x128xf32> to vector<1x32xf32>
    %33 = vector.extract_strided_slice %28 {offsets = [0, 96], sizes = [1, 32], strides = [1, 1]} : vector<1x128xf32> to vector<1x32xf32>
    %34 = arith.mulf %31, %16 : vector<1x32xf32>
    %35 = arith.mulf %30, %32 : vector<1x32xf32>
    %36 = arith.addf %34, %35 : vector<1x32xf32>
    %37 = math.tanh %36 : vector<1x32xf32>
    %38 = arith.mulf %33, %37 : vector<1x32xf32>
    %cst_28 = arith.constant dense<0.000000e+00> : vector<1x128xf32>
    %39 = tpu.matmul %38, %4, %cst_28 {dimension_numbers = #tpu.dot_dimension_numbers<[1], [0], [0], [1], [0, 0, 1, 1], [], []>} : vector<1x32xf32>, vector<32x128xf32>, vector<1x128xf32> -> vector<1x128xf32>
    %cst_29 = arith.constant dense<0.000000e+00> : vector<1x128xf32>
    %40 = tpu.matmul %17, %5, %cst_29 {dimension_numbers = #tpu.dot_dimension_numbers<[1], [0], [0], [1], [0, 0, 1, 1], [], []>} : vector<1x32xf32>, vector<32x128xf32>, vector<1x128xf32> -> vector<1x128xf32>
    %41 = arith.addf %39, %40 : vector<1x128xf32>
    %42 = arith.addf %41, %6 : vector<1x128xf32>
    %43 = arith.negf %42 : vector<1x128xf32>
    %44 = math.exp %43 : vector<1x128xf32>
    %cst_30 = arith.constant 1.000000e+00 : f32
    %45 = vector.broadcast %cst_30 : f32 to vector<1x128xf32>
    %46 = arith.addf %45, %44 : vector<1x128xf32>
    %47 = arith.divf %45, %46 : vector<1x128xf32>
    %48 = math.tanh %42 : vector<1x128xf32>
    %49 = vector.extract_strided_slice %47 {offsets = [0, 0], sizes = [1, 32], strides = [1, 1]} : vector<1x128xf32> to vector<1x32xf32>
    %50 = vector.extract_strided_slice %47 {offsets = [0, 32], sizes = [1, 32], strides = [1, 1]} : vector<1x128xf32> to vector<1x32xf32>
    %51 = vector.extract_strided_slice %48 {offsets = [0, 64], sizes = [1, 32], strides = [1, 1]} : vector<1x128xf32> to vector<1x32xf32>
    %52 = vector.extract_strided_slice %47 {offsets = [0, 96], sizes = [1, 32], strides = [1, 1]} : vector<1x128xf32> to vector<1x32xf32>
    %53 = arith.mulf %50, %18 : vector<1x32xf32>
    %54 = arith.mulf %49, %51 : vector<1x32xf32>
    %55 = arith.addf %53, %54 : vector<1x32xf32>
    %56 = math.tanh %55 : vector<1x32xf32>
    %57 = arith.mulf %52, %56 : vector<1x32xf32>
    %c1_i32_31 = arith.constant 1 : i32
    %c1_i32_32 = arith.constant 1 : i32
    %58 = arith.muli %c1_i32_31, %c1_i32_32 : i32
    %59 = arith.index_cast %58 : i32 to index
    %c0_33 = arith.constant 0 : index
    %60 = vector.load %arg10[%59, %c0_33] : memref<8x128xf32, #tpu.memory_space<vmem>>, vector<1x128xf32>
    %cst_34 = arith.constant dense<0.000000e+00> : vector<1x128xf32>
    %61 = tpu.matmul %38, %3, %cst_34 {dimension_numbers = #tpu.dot_dimension_numbers<[1], [0], [0], [1], [0, 0, 1, 1], [], []>} : vector<1x32xf32>, vector<32x128xf32>, vector<1x128xf32> -> vector<1x128xf32>
    %62 = arith.addf %60, %61 : vector<1x128xf32>
    %63 = arith.negf %62 : vector<1x128xf32>
    %64 = math.exp %63 : vector<1x128xf32>
    %cst_35 = arith.constant 1.000000e+00 : f32
    %65 = vector.broadcast %cst_35 : f32 to vector<1x128xf32>
    %66 = arith.addf %65, %64 : vector<1x128xf32>
    %67 = arith.divf %65, %66 : vector<1x128xf32>
    %68 = math.tanh %62 : vector<1x128xf32>
    %69 = vector.extract_strided_slice %67 {offsets = [0, 0], sizes = [1, 32], strides = [1, 1]} : vector<1x128xf32> to vector<1x32xf32>
    %70 = vector.extract_strided_slice %67 {offsets = [0, 32], sizes = [1, 32], strides = [1, 1]} : vector<1x128xf32> to vector<1x32xf32>
    %71 = vector.extract_strided_slice %68 {offsets = [0, 64], sizes = [1, 32], strides = [1, 1]} : vector<1x128xf32> to vector<1x32xf32>
    %72 = vector.extract_strided_slice %67 {offsets = [0, 96], sizes = [1, 32], strides = [1, 1]} : vector<1x128xf32> to vector<1x32xf32>
    %73 = arith.mulf %70, %36 : vector<1x32xf32>
    %74 = arith.mulf %69, %71 : vector<1x32xf32>
    %75 = arith.addf %73, %74 : vector<1x32xf32>
    %76 = math.tanh %75 : vector<1x32xf32>
    %77 = arith.mulf %72, %76 : vector<1x32xf32>
    %cst_36 = arith.constant dense<0.000000e+00> : vector<1x128xf32>
    %78 = tpu.matmul %77, %4, %cst_36 {dimension_numbers = #tpu.dot_dimension_numbers<[1], [0], [0], [1], [0, 0, 1, 1], [], []>} : vector<1x32xf32>, vector<32x128xf32>, vector<1x128xf32> -> vector<1x128xf32>
    %cst_37 = arith.constant dense<0.000000e+00> : vector<1x128xf32>
    %79 = tpu.matmul %57, %5, %cst_37 {dimension_numbers = #tpu.dot_dimension_numbers<[1], [0], [0], [1], [0, 0, 1, 1], [], []>} : vector<1x32xf32>, vector<32x128xf32>, vector<1x128xf32> -> vector<1x128xf32>
    %80 = arith.addf %78, %79 : vector<1x128xf32>
    %81 = arith.addf %80, %6 : vector<1x128xf32>
    %82 = arith.negf %81 : vector<1x128xf32>
    %83 = math.exp %82 : vector<1x128xf32>
    %cst_38 = arith.constant 1.000000e+00 : f32
    %84 = vector.broadcast %cst_38 : f32 to vector<1x128xf32>
    %85 = arith.addf %84, %83 : vector<1x128xf32>
    %86 = arith.divf %84, %85 : vector<1x128xf32>
    %87 = math.tanh %81 : vector<1x128xf32>
    %88 = vector.extract_strided_slice %86 {offsets = [0, 0], sizes = [1, 32], strides = [1, 1]} : vector<1x128xf32> to vector<1x32xf32>
    %89 = vector.extract_strided_slice %86 {offsets = [0, 32], sizes = [1, 32], strides = [1, 1]} : vector<1x128xf32> to vector<1x32xf32>
    %90 = vector.extract_strided_slice %87 {offsets = [0, 64], sizes = [1, 32], strides = [1, 1]} : vector<1x128xf32> to vector<1x32xf32>
    %91 = vector.extract_strided_slice %86 {offsets = [0, 96], sizes = [1, 32], strides = [1, 1]} : vector<1x128xf32> to vector<1x32xf32>
    %92 = arith.mulf %89, %55 : vector<1x32xf32>
    %93 = arith.mulf %88, %90 : vector<1x32xf32>
    %94 = arith.addf %92, %93 : vector<1x32xf32>
    %95 = math.tanh %94 : vector<1x32xf32>
    %96 = arith.mulf %91, %95 : vector<1x32xf32>
    %c2_i32 = arith.constant 2 : i32
    %c1_i32_39 = arith.constant 1 : i32
    %97 = arith.muli %c2_i32, %c1_i32_39 : i32
    %98 = arith.index_cast %97 : i32 to index
    %c0_40 = arith.constant 0 : index
    %99 = vector.load %arg10[%98, %c0_40] : memref<8x128xf32, #tpu.memory_space<vmem>>, vector<1x128xf32>
    %cst_41 = arith.constant dense<0.000000e+00> : vector<1x128xf32>
    %100 = tpu.matmul %77, %3, %cst_41 {dimension_numbers = #tpu.dot_dimension_numbers<[1], [0], [0], [1], [0, 0, 1, 1], [], []>} : vector<1x32xf32>, vector<32x128xf32>, vector<1x128xf32> -> vector<1x128xf32>
    %101 = arith.addf %99, %100 : vector<1x128xf32>
    %102 = arith.negf %101 : vector<1x128xf32>
    %103 = math.exp %102 : vector<1x128xf32>
    %cst_42 = arith.constant 1.000000e+00 : f32
    %104 = vector.broadcast %cst_42 : f32 to vector<1x128xf32>
    %105 = arith.addf %104, %103 : vector<1x128xf32>
    %106 = arith.divf %104, %105 : vector<1x128xf32>
    %107 = math.tanh %101 : vector<1x128xf32>
    %108 = vector.extract_strided_slice %106 {offsets = [0, 0], sizes = [1, 32], strides = [1, 1]} : vector<1x128xf32> to vector<1x32xf32>
    %109 = vector.extract_strided_slice %106 {offsets = [0, 32], sizes = [1, 32], strides = [1, 1]} : vector<1x128xf32> to vector<1x32xf32>
    %110 = vector.extract_strided_slice %107 {offsets = [0, 64], sizes = [1, 32], strides = [1, 1]} : vector<1x128xf32> to vector<1x32xf32>
    %111 = vector.extract_strided_slice %106 {offsets = [0, 96], sizes = [1, 32], strides = [1, 1]} : vector<1x128xf32> to vector<1x32xf32>
    %112 = arith.mulf %109, %75 : vector<1x32xf32>
    %113 = arith.mulf %108, %110 : vector<1x32xf32>
    %114 = arith.addf %112, %113 : vector<1x32xf32>
    %115 = math.tanh %114 : vector<1x32xf32>
    %116 = arith.mulf %111, %115 : vector<1x32xf32>
    %cst_43 = arith.constant dense<0.000000e+00> : vector<1x128xf32>
    %117 = tpu.matmul %116, %4, %cst_43 {dimension_numbers = #tpu.dot_dimension_numbers<[1], [0], [0], [1], [0, 0, 1, 1], [], []>} : vector<1x32xf32>, vector<32x128xf32>, vector<1x128xf32> -> vector<1x128xf32>
    %cst_44 = arith.constant dense<0.000000e+00> : vector<1x128xf32>
    %118 = tpu.matmul %96, %5, %cst_44 {dimension_numbers = #tpu.dot_dimension_numbers<[1], [0], [0], [1], [0, 0, 1, 1], [], []>} : vector<1x32xf32>, vector<32x128xf32>, vector<1x128xf32> -> vector<1x128xf32>
    %119 = arith.addf %117, %118 : vector<1x128xf32>
    %120 = arith.addf %119, %6 : vector<1x128xf32>
    %121 = arith.negf %120 : vector<1x128xf32>
    %122 = math.exp %121 : vector<1x128xf32>
    %cst_45 = arith.constant 1.000000e+00 : f32
    %123 = vector.broadcast %cst_45 : f32 to vector<1x128xf32>
    %124 = arith.addf %123, %122 : vector<1x128xf32>
    %125 = arith.divf %123, %124 : vector<1x128xf32>
    %126 = math.tanh %120 : vector<1x128xf32>
    %127 = vector.extract_strided_slice %125 {offsets = [0, 0], sizes = [1, 32], strides = [1, 1]} : vector<1x128xf32> to vector<1x32xf32>
    %128 = vector.extract_strided_slice %125 {offsets = [0, 32], sizes = [1, 32], strides = [1, 1]} : vector<1x128xf32> to vector<1x32xf32>
    %129 = vector.extract_strided_slice %126 {offsets = [0, 64], sizes = [1, 32], strides = [1, 1]} : vector<1x128xf32> to vector<1x32xf32>
    %130 = vector.extract_strided_slice %125 {offsets = [0, 96], sizes = [1, 32], strides = [1, 1]} : vector<1x128xf32> to vector<1x32xf32>
    %131 = arith.mulf %128, %94 : vector<1x32xf32>
    %132 = arith.mulf %127, %129 : vector<1x32xf32>
    %133 = arith.addf %131, %132 : vector<1x32xf32>
    %134 = math.tanh %133 : vector<1x32xf32>
    %135 = arith.mulf %130, %134 : vector<1x32xf32>
    %c3_i32 = arith.constant 3 : i32
    %c1_i32_46 = arith.constant 1 : i32
    %136 = arith.muli %c3_i32, %c1_i32_46 : i32
    %137 = arith.index_cast %136 : i32 to index
    %c0_47 = arith.constant 0 : index
    %138 = vector.load %arg10[%137, %c0_47] : memref<8x128xf32, #tpu.memory_space<vmem>>, vector<1x128xf32>
    %cst_48 = arith.constant dense<0.000000e+00> : vector<1x128xf32>
    %139 = tpu.matmul %116, %3, %cst_48 {dimension_numbers = #tpu.dot_dimension_numbers<[1], [0], [0], [1], [0, 0, 1, 1], [], []>} : vector<1x32xf32>, vector<32x128xf32>, vector<1x128xf32> -> vector<1x128xf32>
    %140 = arith.addf %138, %139 : vector<1x128xf32>
    %141 = arith.negf %140 : vector<1x128xf32>
    %142 = math.exp %141 : vector<1x128xf32>
    %cst_49 = arith.constant 1.000000e+00 : f32
    %143 = vector.broadcast %cst_49 : f32 to vector<1x128xf32>
    %144 = arith.addf %143, %142 : vector<1x128xf32>
    %145 = arith.divf %143, %144 : vector<1x128xf32>
    %146 = math.tanh %140 : vector<1x128xf32>
    %147 = vector.extract_strided_slice %145 {offsets = [0, 0], sizes = [1, 32], strides = [1, 1]} : vector<1x128xf32> to vector<1x32xf32>
    %148 = vector.extract_strided_slice %145 {offsets = [0, 32], sizes = [1, 32], strides = [1, 1]} : vector<1x128xf32> to vector<1x32xf32>
    %149 = vector.extract_strided_slice %146 {offsets = [0, 64], sizes = [1, 32], strides = [1, 1]} : vector<1x128xf32> to vector<1x32xf32>
    %150 = vector.extract_strided_slice %145 {offsets = [0, 96], sizes = [1, 32], strides = [1, 1]} : vector<1x128xf32> to vector<1x32xf32>
    %151 = arith.mulf %148, %114 : vector<1x32xf32>
    %152 = arith.mulf %147, %149 : vector<1x32xf32>
    %153 = arith.addf %151, %152 : vector<1x32xf32>
    %154 = math.tanh %153 : vector<1x32xf32>
    %155 = arith.mulf %150, %154 : vector<1x32xf32>
    %cst_50 = arith.constant dense<0.000000e+00> : vector<1x128xf32>
    %156 = tpu.matmul %155, %4, %cst_50 {dimension_numbers = #tpu.dot_dimension_numbers<[1], [0], [0], [1], [0, 0, 1, 1], [], []>} : vector<1x32xf32>, vector<32x128xf32>, vector<1x128xf32> -> vector<1x128xf32>
    %cst_51 = arith.constant dense<0.000000e+00> : vector<1x128xf32>
    %157 = tpu.matmul %135, %5, %cst_51 {dimension_numbers = #tpu.dot_dimension_numbers<[1], [0], [0], [1], [0, 0, 1, 1], [], []>} : vector<1x32xf32>, vector<32x128xf32>, vector<1x128xf32> -> vector<1x128xf32>
    %158 = arith.addf %156, %157 : vector<1x128xf32>
    %159 = arith.addf %158, %6 : vector<1x128xf32>
    %160 = arith.negf %159 : vector<1x128xf32>
    %161 = math.exp %160 : vector<1x128xf32>
    %cst_52 = arith.constant 1.000000e+00 : f32
    %162 = vector.broadcast %cst_52 : f32 to vector<1x128xf32>
    %163 = arith.addf %162, %161 : vector<1x128xf32>
    %164 = arith.divf %162, %163 : vector<1x128xf32>
    %165 = math.tanh %159 : vector<1x128xf32>
    %166 = vector.extract_strided_slice %164 {offsets = [0, 0], sizes = [1, 32], strides = [1, 1]} : vector<1x128xf32> to vector<1x32xf32>
    %167 = vector.extract_strided_slice %164 {offsets = [0, 32], sizes = [1, 32], strides = [1, 1]} : vector<1x128xf32> to vector<1x32xf32>
    %168 = vector.extract_strided_slice %165 {offsets = [0, 64], sizes = [1, 32], strides = [1, 1]} : vector<1x128xf32> to vector<1x32xf32>
    %169 = vector.extract_strided_slice %164 {offsets = [0, 96], sizes = [1, 32], strides = [1, 1]} : vector<1x128xf32> to vector<1x32xf32>
    %170 = arith.mulf %167, %133 : vector<1x32xf32>
    %171 = arith.mulf %166, %168 : vector<1x32xf32>
    %172 = arith.addf %170, %171 : vector<1x32xf32>
    %173 = math.tanh %172 : vector<1x32xf32>
    %174 = arith.mulf %169, %173 : vector<1x32xf32>
    %c4_i32 = arith.constant 4 : i32
    %c1_i32_53 = arith.constant 1 : i32
    %175 = arith.muli %c4_i32, %c1_i32_53 : i32
    %176 = arith.index_cast %175 : i32 to index
    %c0_54 = arith.constant 0 : index
    %177 = vector.load %arg10[%176, %c0_54] : memref<8x128xf32, #tpu.memory_space<vmem>>, vector<1x128xf32>
    %cst_55 = arith.constant dense<0.000000e+00> : vector<1x128xf32>
    %178 = tpu.matmul %155, %3, %cst_55 {dimension_numbers = #tpu.dot_dimension_numbers<[1], [0], [0], [1], [0, 0, 1, 1], [], []>} : vector<1x32xf32>, vector<32x128xf32>, vector<1x128xf32> -> vector<1x128xf32>
    %179 = arith.addf %177, %178 : vector<1x128xf32>
    %180 = arith.negf %179 : vector<1x128xf32>
    %181 = math.exp %180 : vector<1x128xf32>
    %cst_56 = arith.constant 1.000000e+00 : f32
    %182 = vector.broadcast %cst_56 : f32 to vector<1x128xf32>
    %183 = arith.addf %182, %181 : vector<1x128xf32>
    %184 = arith.divf %182, %183 : vector<1x128xf32>
    %185 = math.tanh %179 : vector<1x128xf32>
    %186 = vector.extract_strided_slice %184 {offsets = [0, 0], sizes = [1, 32], strides = [1, 1]} : vector<1x128xf32> to vector<1x32xf32>
    %187 = vector.extract_strided_slice %184 {offsets = [0, 32], sizes = [1, 32], strides = [1, 1]} : vector<1x128xf32> to vector<1x32xf32>
    %188 = vector.extract_strided_slice %185 {offsets = [0, 64], sizes = [1, 32], strides = [1, 1]} : vector<1x128xf32> to vector<1x32xf32>
    %189 = vector.extract_strided_slice %184 {offsets = [0, 96], sizes = [1, 32], strides = [1, 1]} : vector<1x128xf32> to vector<1x32xf32>
    %190 = arith.mulf %187, %153 : vector<1x32xf32>
    %191 = arith.mulf %186, %188 : vector<1x32xf32>
    %192 = arith.addf %190, %191 : vector<1x32xf32>
    %193 = math.tanh %192 : vector<1x32xf32>
    %194 = arith.mulf %189, %193 : vector<1x32xf32>
    %cst_57 = arith.constant dense<0.000000e+00> : vector<1x128xf32>
    %195 = tpu.matmul %194, %4, %cst_57 {dimension_numbers = #tpu.dot_dimension_numbers<[1], [0], [0], [1], [0, 0, 1, 1], [], []>} : vector<1x32xf32>, vector<32x128xf32>, vector<1x128xf32> -> vector<1x128xf32>
    %cst_58 = arith.constant dense<0.000000e+00> : vector<1x128xf32>
    %196 = tpu.matmul %174, %5, %cst_58 {dimension_numbers = #tpu.dot_dimension_numbers<[1], [0], [0], [1], [0, 0, 1, 1], [], []>} : vector<1x32xf32>, vector<32x128xf32>, vector<1x128xf32> -> vector<1x128xf32>
    %197 = arith.addf %195, %196 : vector<1x128xf32>
    %198 = arith.addf %197, %6 : vector<1x128xf32>
    %199 = arith.negf %198 : vector<1x128xf32>
    %200 = math.exp %199 : vector<1x128xf32>
    %cst_59 = arith.constant 1.000000e+00 : f32
    %201 = vector.broadcast %cst_59 : f32 to vector<1x128xf32>
    %202 = arith.addf %201, %200 : vector<1x128xf32>
    %203 = arith.divf %201, %202 : vector<1x128xf32>
    %204 = math.tanh %198 : vector<1x128xf32>
    %205 = vector.extract_strided_slice %203 {offsets = [0, 0], sizes = [1, 32], strides = [1, 1]} : vector<1x128xf32> to vector<1x32xf32>
    %206 = vector.extract_strided_slice %203 {offsets = [0, 32], sizes = [1, 32], strides = [1, 1]} : vector<1x128xf32> to vector<1x32xf32>
    %207 = vector.extract_strided_slice %204 {offsets = [0, 64], sizes = [1, 32], strides = [1, 1]} : vector<1x128xf32> to vector<1x32xf32>
    %208 = vector.extract_strided_slice %203 {offsets = [0, 96], sizes = [1, 32], strides = [1, 1]} : vector<1x128xf32> to vector<1x32xf32>
    %209 = arith.mulf %206, %172 : vector<1x32xf32>
    %210 = arith.mulf %205, %207 : vector<1x32xf32>
    %211 = arith.addf %209, %210 : vector<1x32xf32>
    %212 = math.tanh %211 : vector<1x32xf32>
    %213 = arith.mulf %208, %212 : vector<1x32xf32>
    %c5_i32 = arith.constant 5 : i32
    %c1_i32_60 = arith.constant 1 : i32
    %214 = arith.muli %c5_i32, %c1_i32_60 : i32
    %215 = arith.index_cast %214 : i32 to index
    %c0_61 = arith.constant 0 : index
    %216 = vector.load %arg10[%215, %c0_61] : memref<8x128xf32, #tpu.memory_space<vmem>>, vector<1x128xf32>
    %cst_62 = arith.constant dense<0.000000e+00> : vector<1x128xf32>
    %217 = tpu.matmul %194, %3, %cst_62 {dimension_numbers = #tpu.dot_dimension_numbers<[1], [0], [0], [1], [0, 0, 1, 1], [], []>} : vector<1x32xf32>, vector<32x128xf32>, vector<1x128xf32> -> vector<1x128xf32>
    %218 = arith.addf %216, %217 : vector<1x128xf32>
    %219 = arith.negf %218 : vector<1x128xf32>
    %220 = math.exp %219 : vector<1x128xf32>
    %cst_63 = arith.constant 1.000000e+00 : f32
    %221 = vector.broadcast %cst_63 : f32 to vector<1x128xf32>
    %222 = arith.addf %221, %220 : vector<1x128xf32>
    %223 = arith.divf %221, %222 : vector<1x128xf32>
    %224 = math.tanh %218 : vector<1x128xf32>
    %225 = vector.extract_strided_slice %223 {offsets = [0, 0], sizes = [1, 32], strides = [1, 1]} : vector<1x128xf32> to vector<1x32xf32>
    %226 = vector.extract_strided_slice %223 {offsets = [0, 32], sizes = [1, 32], strides = [1, 1]} : vector<1x128xf32> to vector<1x32xf32>
    %227 = vector.extract_strided_slice %224 {offsets = [0, 64], sizes = [1, 32], strides = [1, 1]} : vector<1x128xf32> to vector<1x32xf32>
    %228 = vector.extract_strided_slice %223 {offsets = [0, 96], sizes = [1, 32], strides = [1, 1]} : vector<1x128xf32> to vector<1x32xf32>
    %229 = arith.mulf %226, %192 : vector<1x32xf32>
    %230 = arith.mulf %225, %227 : vector<1x32xf32>
    %231 = arith.addf %229, %230 : vector<1x32xf32>
    %232 = math.tanh %231 : vector<1x32xf32>
    %233 = arith.mulf %228, %232 : vector<1x32xf32>
    %cst_64 = arith.constant dense<0.000000e+00> : vector<1x128xf32>
    %234 = tpu.matmul %233, %4, %cst_64 {dimension_numbers = #tpu.dot_dimension_numbers<[1], [0], [0], [1], [0, 0, 1, 1], [], []>} : vector<1x32xf32>, vector<32x128xf32>, vector<1x128xf32> -> vector<1x128xf32>
    %cst_65 = arith.constant dense<0.000000e+00> : vector<1x128xf32>
    %235 = tpu.matmul %213, %5, %cst_65 {dimension_numbers = #tpu.dot_dimension_numbers<[1], [0], [0], [1], [0, 0, 1, 1], [], []>} : vector<1x32xf32>, vector<32x128xf32>, vector<1x128xf32> -> vector<1x128xf32>
    %236 = arith.addf %234, %235 : vector<1x128xf32>
    %237 = arith.addf %236, %6 : vector<1x128xf32>
    %238 = arith.negf %237 : vector<1x128xf32>
    %239 = math.exp %238 : vector<1x128xf32>
    %cst_66 = arith.constant 1.000000e+00 : f32
    %240 = vector.broadcast %cst_66 : f32 to vector<1x128xf32>
    %241 = arith.addf %240, %239 : vector<1x128xf32>
    %242 = arith.divf %240, %241 : vector<1x128xf32>
    %243 = math.tanh %237 : vector<1x128xf32>
    %244 = vector.extract_strided_slice %242 {offsets = [0, 0], sizes = [1, 32], strides = [1, 1]} : vector<1x128xf32> to vector<1x32xf32>
    %245 = vector.extract_strided_slice %242 {offsets = [0, 32], sizes = [1, 32], strides = [1, 1]} : vector<1x128xf32> to vector<1x32xf32>
    %246 = vector.extract_strided_slice %243 {offsets = [0, 64], sizes = [1, 32], strides = [1, 1]} : vector<1x128xf32> to vector<1x32xf32>
    %247 = vector.extract_strided_slice %242 {offsets = [0, 96], sizes = [1, 32], strides = [1, 1]} : vector<1x128xf32> to vector<1x32xf32>
    %248 = arith.mulf %245, %211 : vector<1x32xf32>
    %249 = arith.mulf %244, %246 : vector<1x32xf32>
    %250 = arith.addf %248, %249 : vector<1x32xf32>
    %251 = math.tanh %250 : vector<1x32xf32>
    %252 = arith.mulf %247, %251 : vector<1x32xf32>
    %c6_i32 = arith.constant 6 : i32
    %c1_i32_67 = arith.constant 1 : i32
    %253 = arith.muli %c6_i32, %c1_i32_67 : i32
    %254 = arith.index_cast %253 : i32 to index
    %c0_68 = arith.constant 0 : index
    %255 = vector.load %arg10[%254, %c0_68] : memref<8x128xf32, #tpu.memory_space<vmem>>, vector<1x128xf32>
    %cst_69 = arith.constant dense<0.000000e+00> : vector<1x128xf32>
    %256 = tpu.matmul %233, %3, %cst_69 {dimension_numbers = #tpu.dot_dimension_numbers<[1], [0], [0], [1], [0, 0, 1, 1], [], []>} : vector<1x32xf32>, vector<32x128xf32>, vector<1x128xf32> -> vector<1x128xf32>
    %257 = arith.addf %255, %256 : vector<1x128xf32>
    %258 = arith.negf %257 : vector<1x128xf32>
    %259 = math.exp %258 : vector<1x128xf32>
    %cst_70 = arith.constant 1.000000e+00 : f32
    %260 = vector.broadcast %cst_70 : f32 to vector<1x128xf32>
    %261 = arith.addf %260, %259 : vector<1x128xf32>
    %262 = arith.divf %260, %261 : vector<1x128xf32>
    %263 = math.tanh %257 : vector<1x128xf32>
    %264 = vector.extract_strided_slice %262 {offsets = [0, 0], sizes = [1, 32], strides = [1, 1]} : vector<1x128xf32> to vector<1x32xf32>
    %265 = vector.extract_strided_slice %262 {offsets = [0, 32], sizes = [1, 32], strides = [1, 1]} : vector<1x128xf32> to vector<1x32xf32>
    %266 = vector.extract_strided_slice %263 {offsets = [0, 64], sizes = [1, 32], strides = [1, 1]} : vector<1x128xf32> to vector<1x32xf32>
    %267 = vector.extract_strided_slice %262 {offsets = [0, 96], sizes = [1, 32], strides = [1, 1]} : vector<1x128xf32> to vector<1x32xf32>
    %268 = arith.mulf %265, %231 : vector<1x32xf32>
    %269 = arith.mulf %264, %266 : vector<1x32xf32>
    %270 = arith.addf %268, %269 : vector<1x32xf32>
    %271 = math.tanh %270 : vector<1x32xf32>
    %272 = arith.mulf %267, %271 : vector<1x32xf32>
    %cst_71 = arith.constant dense<0.000000e+00> : vector<1x128xf32>
    %273 = tpu.matmul %272, %4, %cst_71 {dimension_numbers = #tpu.dot_dimension_numbers<[1], [0], [0], [1], [0, 0, 1, 1], [], []>} : vector<1x32xf32>, vector<32x128xf32>, vector<1x128xf32> -> vector<1x128xf32>
    %cst_72 = arith.constant dense<0.000000e+00> : vector<1x128xf32>
    %274 = tpu.matmul %252, %5, %cst_72 {dimension_numbers = #tpu.dot_dimension_numbers<[1], [0], [0], [1], [0, 0, 1, 1], [], []>} : vector<1x32xf32>, vector<32x128xf32>, vector<1x128xf32> -> vector<1x128xf32>
    %275 = arith.addf %273, %274 : vector<1x128xf32>
    %276 = arith.addf %275, %6 : vector<1x128xf32>
    %277 = arith.negf %276 : vector<1x128xf32>
    %278 = math.exp %277 : vector<1x128xf32>
    %cst_73 = arith.constant 1.000000e+00 : f32
    %279 = vector.broadcast %cst_73 : f32 to vector<1x128xf32>
    %280 = arith.addf %279, %278 : vector<1x128xf32>
    %281 = arith.divf %279, %280 : vector<1x128xf32>
    %282 = math.tanh %276 : vector<1x128xf32>
    %283 = vector.extract_strided_slice %281 {offsets = [0, 0], sizes = [1, 32], strides = [1, 1]} : vector<1x128xf32> to vector<1x32xf32>
    %284 = vector.extract_strided_slice %281 {offsets = [0, 32], sizes = [1, 32], strides = [1, 1]} : vector<1x128xf32> to vector<1x32xf32>
    %285 = vector.extract_strided_slice %282 {offsets = [0, 64], sizes = [1, 32], strides = [1, 1]} : vector<1x128xf32> to vector<1x32xf32>
    %286 = vector.extract_strided_slice %281 {offsets = [0, 96], sizes = [1, 32], strides = [1, 1]} : vector<1x128xf32> to vector<1x32xf32>
    %287 = arith.mulf %284, %250 : vector<1x32xf32>
    %288 = arith.mulf %283, %285 : vector<1x32xf32>
    %289 = arith.addf %287, %288 : vector<1x32xf32>
    %290 = math.tanh %289 : vector<1x32xf32>
    %291 = arith.mulf %286, %290 : vector<1x32xf32>
    %c7_i32 = arith.constant 7 : i32
    %c1_i32_74 = arith.constant 1 : i32
    %292 = arith.muli %c7_i32, %c1_i32_74 : i32
    %293 = arith.index_cast %292 : i32 to index
    %c0_75 = arith.constant 0 : index
    %294 = vector.load %arg10[%293, %c0_75] : memref<8x128xf32, #tpu.memory_space<vmem>>, vector<1x128xf32>
    %cst_76 = arith.constant dense<0.000000e+00> : vector<1x128xf32>
    %295 = tpu.matmul %272, %3, %cst_76 {dimension_numbers = #tpu.dot_dimension_numbers<[1], [0], [0], [1], [0, 0, 1, 1], [], []>} : vector<1x32xf32>, vector<32x128xf32>, vector<1x128xf32> -> vector<1x128xf32>
    %296 = arith.addf %294, %295 : vector<1x128xf32>
    %297 = arith.negf %296 : vector<1x128xf32>
    %298 = math.exp %297 : vector<1x128xf32>
    %cst_77 = arith.constant 1.000000e+00 : f32
    %299 = vector.broadcast %cst_77 : f32 to vector<1x128xf32>
    %300 = arith.addf %299, %298 : vector<1x128xf32>
    %301 = arith.divf %299, %300 : vector<1x128xf32>
    %302 = math.tanh %296 : vector<1x128xf32>
    %303 = vector.extract_strided_slice %301 {offsets = [0, 0], sizes = [1, 32], strides = [1, 1]} : vector<1x128xf32> to vector<1x32xf32>
    %304 = vector.extract_strided_slice %301 {offsets = [0, 32], sizes = [1, 32], strides = [1, 1]} : vector<1x128xf32> to vector<1x32xf32>
    %305 = vector.extract_strided_slice %302 {offsets = [0, 64], sizes = [1, 32], strides = [1, 1]} : vector<1x128xf32> to vector<1x32xf32>
    %306 = vector.extract_strided_slice %301 {offsets = [0, 96], sizes = [1, 32], strides = [1, 1]} : vector<1x128xf32> to vector<1x32xf32>
    %307 = arith.mulf %304, %270 : vector<1x32xf32>
    %308 = arith.mulf %303, %305 : vector<1x32xf32>
    %309 = arith.addf %307, %308 : vector<1x32xf32>
    %310 = math.tanh %309 : vector<1x32xf32>
    %311 = arith.mulf %306, %310 : vector<1x32xf32>
    %cst_78 = arith.constant dense<0.000000e+00> : vector<1x128xf32>
    %312 = tpu.matmul %311, %4, %cst_78 {dimension_numbers = #tpu.dot_dimension_numbers<[1], [0], [0], [1], [0, 0, 1, 1], [], []>} : vector<1x32xf32>, vector<32x128xf32>, vector<1x128xf32> -> vector<1x128xf32>
    %cst_79 = arith.constant dense<0.000000e+00> : vector<1x128xf32>
    %313 = tpu.matmul %291, %5, %cst_79 {dimension_numbers = #tpu.dot_dimension_numbers<[1], [0], [0], [1], [0, 0, 1, 1], [], []>} : vector<1x32xf32>, vector<32x128xf32>, vector<1x128xf32> -> vector<1x128xf32>
    %314 = arith.addf %312, %313 : vector<1x128xf32>
    %315 = arith.addf %314, %6 : vector<1x128xf32>
    %316 = arith.negf %315 : vector<1x128xf32>
    %317 = math.exp %316 : vector<1x128xf32>
    %cst_80 = arith.constant 1.000000e+00 : f32
    %318 = vector.broadcast %cst_80 : f32 to vector<1x128xf32>
    %319 = arith.addf %318, %317 : vector<1x128xf32>
    %320 = arith.divf %318, %319 : vector<1x128xf32>
    %321 = math.tanh %315 : vector<1x128xf32>
    %322 = vector.extract_strided_slice %320 {offsets = [0, 0], sizes = [1, 32], strides = [1, 1]} : vector<1x128xf32> to vector<1x32xf32>
    %323 = vector.extract_strided_slice %320 {offsets = [0, 32], sizes = [1, 32], strides = [1, 1]} : vector<1x128xf32> to vector<1x32xf32>
    %324 = vector.extract_strided_slice %321 {offsets = [0, 64], sizes = [1, 32], strides = [1, 1]} : vector<1x128xf32> to vector<1x32xf32>
    %325 = vector.extract_strided_slice %320 {offsets = [0, 96], sizes = [1, 32], strides = [1, 1]} : vector<1x128xf32> to vector<1x32xf32>
    %326 = arith.mulf %323, %289 : vector<1x32xf32>
    %327 = arith.mulf %322, %324 : vector<1x32xf32>
    %328 = arith.addf %326, %327 : vector<1x32xf32>
    %329 = math.tanh %328 : vector<1x32xf32>
    %330 = arith.mulf %325, %329 : vector<1x32xf32>
    %c8_i32 = arith.constant 8 : i32
    %c0_81 = arith.constant 0 : index
    %c0_82 = arith.constant 0 : index
    %331 = vector.load %arg11[%c0_81, %c0_82] : memref<1x32xf32, #tpu.memory_space<vmem>>, vector<1x32xf32>
    tpu.vector_store %arg11[%c0_81, %c0_82], %311 {strides = array<i32>} : memref<1x32xf32, #tpu.memory_space<vmem>>, vector<1x32xf32>,
    %c0_83 = arith.constant 0 : index
    %c0_84 = arith.constant 0 : index
    %332 = vector.load %arg12[%c0_83, %c0_84] : memref<1x32xf32, #tpu.memory_space<vmem>>, vector<1x32xf32>
    tpu.vector_store %arg12[%c0_83, %c0_84], %309 {strides = array<i32>} : memref<1x32xf32, #tpu.memory_space<vmem>>, vector<1x32xf32>,
    %c0_85 = arith.constant 0 : index
    %c0_86 = arith.constant 0 : index
    %333 = vector.load %arg13[%c0_85, %c0_86] : memref<1x32xf32, #tpu.memory_space<vmem>>, vector<1x32xf32>
    tpu.vector_store %arg13[%c0_85, %c0_86], %330 {strides = array<i32>} : memref<1x32xf32, #tpu.memory_space<vmem>>, vector<1x32xf32>,
    %c0_87 = arith.constant 0 : index
    %c0_88 = arith.constant 0 : index
    %334 = vector.load %arg14[%c0_87, %c0_88] : memref<1x32xf32, #tpu.memory_space<vmem>>, vector<1x32xf32>
    tpu.vector_store %arg14[%c0_87, %c0_88], %328 {strides = array<i32>} : memref<1x32xf32, #tpu.memory_space<vmem>>, vector<1x32xf32>,
    %c0_i32_89 = arith.constant 0 : i32
    %335 = arith.cmpi eq, %arg0, %c0_i32_89 : i32
    %336 = arith.extui %335 : i1 to i32
    %c0_i32_90 = arith.constant 0 : i32
    %337 = arith.cmpi ne, %336, %c0_i32_90 : i32
    scf.if %337 {
      %c0_91 = arith.constant 0 : index
      %c0_92 = arith.constant 0 : index
      %c0_93 = arith.constant 0 : index
      %338 = vector.load %arg8[%c0_91, %c0_92, %c0_93] : memref<2x1x32xf32, #tpu.memory_space<vmem>>, vector<1x1x32xf32>
      %339 = vector.shape_cast %338 : vector<1x1x32xf32> to vector<1x32xf32>
      %340 = vector.shape_cast %311 : vector<1x32xf32> to vector<1x1x32xf32>
      tpu.vector_store %arg8[%c0_91, %c0_92, %c0_93], %340 {strides = array<i32>} : memref<2x1x32xf32, #tpu.memory_space<vmem>>, vector<1x1x32xf32>,
      %c1 = arith.constant 1 : index
      %c0_94 = arith.constant 0 : index
      %c0_95 = arith.constant 0 : index
      %341 = vector.load %arg8[%c1, %c0_94, %c0_95] : memref<2x1x32xf32, #tpu.memory_space<vmem>>, vector<1x1x32xf32>
      %342 = vector.shape_cast %341 : vector<1x1x32xf32> to vector<1x32xf32>
      %343 = vector.shape_cast %330 : vector<1x32xf32> to vector<1x1x32xf32>
      tpu.vector_store %arg8[%c1, %c0_94, %c0_95], %343 {strides = array<i32>} : memref<2x1x32xf32, #tpu.memory_space<vmem>>, vector<1x1x32xf32>,
      %c0_96 = arith.constant 0 : index
      %c0_97 = arith.constant 0 : index
      %c0_98 = arith.constant 0 : index
      %344 = vector.load %arg9[%c0_96, %c0_97, %c0_98] : memref<2x1x32xf32, #tpu.memory_space<vmem>>, vector<1x1x32xf32>
      %345 = vector.shape_cast %344 : vector<1x1x32xf32> to vector<1x32xf32>
      %346 = vector.shape_cast %309 : vector<1x32xf32> to vector<1x1x32xf32>
      tpu.vector_store %arg9[%c0_96, %c0_97, %c0_98], %346 {strides = array<i32>} : memref<2x1x32xf32, #tpu.memory_space<vmem>>, vector<1x1x32xf32>,
      %c1_99 = arith.constant 1 : index
      %c0_100 = arith.constant 0 : index
      %c0_101 = arith.constant 0 : index
      %347 = vector.load %arg9[%c1_99, %c0_100, %c0_101] : memref<2x1x32xf32, #tpu.memory_space<vmem>>, vector<1x1x32xf32>
      %348 = vector.shape_cast %347 : vector<1x1x32xf32> to vector<1x32xf32>
      %349 = vector.shape_cast %328 : vector<1x32xf32> to vector<1x1x32xf32>
      tpu.vector_store %arg9[%c1_99, %c0_100, %c0_101], %349 {strides = array<i32>} : memref<2x1x32xf32, #tpu.memory_space<vmem>>, vector<1x1x32xf32>,
    } else {
    }
    return
  }
  func.func @transform_0(%arg0: i32) -> (i32, i32) {
    %c0_i32 = arith.constant 0 : i32
    %c0_i32_0 = arith.constant 0 : i32
    return %arg0, %c0_i32 : i32, i32
  }
  func.func @transform_1(%arg0: i32) -> (i32, i32) {
    %c0_i32 = arith.constant 0 : i32
    %c0_i32_0 = arith.constant 0 : i32
    %c0_i32_1 = arith.constant 0 : i32
    return %c0_i32, %c0_i32_0 : i32, i32
  }
  func.func @transform_2(%arg0: i32) -> (i32, i32) {
    %c0_i32 = arith.constant 0 : i32
    %c0_i32_0 = arith.constant 0 : i32
    %c0_i32_1 = arith.constant 0 : i32
    return %c0_i32, %c0_i32_0 : i32, i32
  }
  func.func @transform_3(%arg0: i32) -> (i32, i32) {
    %c0_i32 = arith.constant 0 : i32
    %c0_i32_0 = arith.constant 0 : i32
    %c0_i32_1 = arith.constant 0 : i32
    return %c0_i32, %c0_i32_0 : i32, i32
  }
  func.func @transform_4(%arg0: i32) -> (i32, i32) {
    %c0_i32 = arith.constant 0 : i32
    %c0_i32_0 = arith.constant 0 : i32
    %c0_i32_1 = arith.constant 0 : i32
    return %c0_i32, %c0_i32_0 : i32, i32
  }
  func.func @transform_5(%arg0: i32) -> (i32, i32) {
    %c0_i32 = arith.constant 0 : i32
    %c0_i32_0 = arith.constant 0 : i32
    %c0_i32_1 = arith.constant 0 : i32
    return %c0_i32, %c0_i32_0 : i32, i32
  }
  func.func @transform_6(%arg0: i32) -> (i32, i32) {
    %c0_i32 = arith.constant 0 : i32
    %c0_i32_0 = arith.constant 0 : i32
    %c0_i32_1 = arith.constant 0 : i32
    return %c0_i32, %c0_i32_0 : i32, i32
  }
  func.func @transform_7(%arg0: i32) -> (i32, i32, i32) {
    %c0_i32 = arith.constant 0 : i32
    %c0_i32_0 = arith.constant 0 : i32
    %c0_i32_1 = arith.constant 0 : i32
    %c0_i32_2 = arith.constant 0 : i32
    return %c0_i32, %c0_i32_0, %c0_i32_1 : i32, i32, i32
  }
  func.func @transform_8(%arg0: i32) -> (i32, i32, i32) {
    %c0_i32 = arith.constant 0 : i32
    %c0_i32_0 = arith.constant 0 : i32
    %c0_i32_1 = arith.constant 0 : i32
    %c0_i32_2 = arith.constant 0 : i32
    return %c0_i32, %c0_i32_0, %c0_i32_1 : i32, i32, i32
  }
}

</mosaic_0001>

<llo_original>
// kernel: tpu_custom_call.1
$region0: #{tpu_custom_call.1}
  #allocation0 [shape = 'u32[]', space=smem, size = 0x4, offset = 0x4, fixed_abs, tag = 'smem constant byte address 0x4 - core index']
  #allocation1 [shape = 'u32[144,128]{1,0:T(1,128)}', space=vmem, size = 0x12000, scoped, tag = 'internal scratch']
  #allocation2 [shape = 'f32[8,128]{1,0:T(8,128)}', space=vmem, size = 0x1000, scoped, tag = 'scratch operand']
  #allocation3 [shape = 'f32[1,32]{1,0:T(1,128)}', space=vmem, size = 0x200, scoped, tag = 'scratch operand']
  #allocation4 [shape = 'f32[1,32]{1,0:T(1,128)}', space=vmem, size = 0x200, scoped, tag = 'scratch operand']
  #allocation5 [shape = 'f32[1,32]{1,0:T(1,128)}', space=vmem, size = 0x200, scoped, tag = 'scratch operand']
  #allocation6 [shape = 'f32[1,32]{1,0:T(1,128)}', space=vmem, size = 0x200, scoped, tag = 'scratch operand']
  %s0 = inlined_call_operand.hbm [shape: bf16[8,32], index: 0, kind: input, shape index: {}]
  %s1 = inlined_call_operand.hbm [shape: bf16[32,128], index: 1, kind: input, shape index: {}]
  %s2 = inlined_call_operand.hbm [shape: f32[32,128], index: 2, kind: input, shape index: {}]
  %s3 = inlined_call_operand.vmem [shape: f32[1,128], index: 3, kind: input, shape index: {}]
  %s4 = inlined_call_operand.hbm [shape: f32[32,128], index: 4, kind: input, shape index: {}]
  %s5 = inlined_call_operand.hbm [shape: f32[32,128], index: 5, kind: input, shape index: {}]
  %s6 = inlined_call_operand.vmem [shape: f32[1,128], index: 6, kind: input, shape index: {}]
  %s7 = inlined_call_operand.hbm [shape: f32[2,1,32], index: 7, kind: output, shape index: {0}]
  %s8 = inlined_call_operand.hbm [shape: f32[2,1,32], index: 8, kind: output, shape index: {1}]
  %9 = xla_tuple %s7, %s8
  %s10 = sld [smem:[#allocation0]]
  $region74: #{tpu_custom_call.1} parent=0
    _
  %s12 = ssub.s32 1, %s10
  %s13 = scalar_select 0, %s12, %s10
  $region1: #{tpu_custom_call.1} parent=0
    #allocation7 [shape = 'u8[2048]{0}', space=vmem, size = 0x800, scoped, tag = 'input window, operand 0, single buffered']
    #allocation8 [shape = 's32[1]{0}', space=sflag, size = 0x4, scoped, tag = 'scoped memory for tpu_custom_call.1']
    #allocation9 [shape = 's32[1]{0}', space=sflag, size = 0x4, scoped, tag = 'scoped memory for tpu_custom_call.1']
    #allocation10 [shape = 'u8[8192]{0}', space=vmem, size = 0x2000, scoped, tag = 'input window, operand 1, single buffered']
    #allocation11 [shape = 's32[1]{0}', space=sflag, size = 0x4, scoped, tag = 'scoped memory for tpu_custom_call.1']
    #allocation12 [shape = 'u8[16384]{0}', space=vmem, size = 0x4000, scoped, tag = 'input window, operand 2, single buffered']
    #allocation13 [shape = 'u8[16384]{0}', space=vmem, size = 0x4000, scoped, tag = 'input window, operand 4, single buffered']
    #allocation14 [shape = 's32[1]{0}', space=sflag, size = 0x4, scoped, tag = 'scoped memory for tpu_custom_call.1']
    #allocation15 [shape = 'u8[16384]{0}', space=vmem, size = 0x4000, scoped, tag = 'input window, operand 5, single buffered']
    #allocation16 [shape = 'u8[1024]{0}', space=vmem, size = 0x400, scoped, tag = 'output window, operand 0, single buffered']
    #allocation17 [shape = 'u8[1024]{0}', space=vmem, size = 0x400, scoped, tag = 'output window, operand 1, single buffered']
    #allocation18 [shape = 's32[1]{0}', space=sflag, size = 0x4, scoped, tag = 'scoped memory for tpu_custom_call.1']
    %14 = vsyncpa [#allocation8], 0
    %15 = vsyncpa [#allocation11], 0
    %16 = vsyncpa [#allocation14], 0
    %17 = vsyncpa [#allocation9], 0
    %18 = vsyncpa [#allocation18], 0
    // Predicated region
    $region2: #{tpu_custom_call.1} parent=1 // pred_check
      _
    $region3: #{tpu_custom_call.1} parent=1 // pred_check_branch
      %20 = sbr.rel (0) target = $region5
    $region4: #{tpu_custom_call.1} parent=1 // pred_region
      %s22 = ssub.s32 64, 64
      %23 = vsyncadd [#allocation8], %s22
      %s25 = sshll.u32 [#allocation7], 4
      %s26 = int_to_ptr.vmem [resolvable:$true] %s25
      %28 = dma.hbm_to_vmem [thread:$0]  %s0, 64, %s26, [#allocation8]
    $region5: #{tpu_custom_call.1} parent=1 // pred_fallthru
      _
    // Predicated region
    $region6: #{tpu_custom_call.1} parent=1 // pred_check
      _
    $region7: #{tpu_custom_call.1} parent=1 // pred_check_branch
      %30 = sbr.rel (0) target = $region9
    $region8: #{tpu_custom_call.1} parent=1 // pred_region
      %s32 = ssub.s32 256, 256
      %33 = vsyncadd [#allocation11], %s32
      %s34 = sshll.u32 [#allocation10], 4
      %s35 = int_to_ptr.vmem [resolvable:$true] %s34
      %40 = dma.hbm_to_vmem [thread:$0]  %s1, 256, %s35, [#allocation11], 64, 64, 4
    $region9: #{tpu_custom_call.1} parent=1 // pred_fallthru
      _
    // Predicated region
    $region10: #{tpu_custom_call.1} parent=1 // pred_check
      _
    $region11: #{tpu_custom_call.1} parent=1 // pred_check_branch
      %42 = sbr.rel (0) target = $region13
    $region12: #{tpu_custom_call.1} parent=1 // pred_region
      %s44 = ssub.s32 512, 512
      %45 = vsyncadd [#allocation11], %s44
      %s46 = sshll.u32 [#allocation12], 4
      %s47 = int_to_ptr.vmem [resolvable:$true] %s46
      %52 = dma.hbm_to_vmem [thread:$0]  %s2, 512, %s47, [#allocation11], 128, 128, 8
    $region13: #{tpu_custom_call.1} parent=1 // pred_fallthru
      _
    // Predicated region
    $region14: #{tpu_custom_call.1} parent=1 // pred_check
      _
    $region15: #{tpu_custom_call.1} parent=1 // pred_check_branch
      %54 = sbr.rel (0) target = $region17
    $region16: #{tpu_custom_call.1} parent=1 // pred_region
      _
    $region17: #{tpu_custom_call.1} parent=1 // pred_fallthru
      _
    // Predicated region
    $region18: #{tpu_custom_call.1} parent=1 // pred_check
      _
    $region19: #{tpu_custom_call.1} parent=1 // pred_check_branch
      %56 = sbr.rel (0) target = $region21
    $region20: #{tpu_custom_call.1} parent=1 // pred_region
      %s58 = ssub.s32 512, 512
      %59 = vsyncadd [#allocation14], %s58
      %s60 = sshll.u32 [#allocation13], 4
      %s61 = int_to_ptr.vmem [resolvable:$true] %s60
      %66 = dma.hbm_to_vmem [thread:$0]  %s4, 512, %s61, [#allocation14], 128, 128, 8
    $region21: #{tpu_custom_call.1} parent=1 // pred_fallthru
      _
    // Predicated region
    $region22: #{tpu_custom_call.1} parent=1 // pred_check
      _
    $region23: #{tpu_custom_call.1} parent=1 // pred_check_branch
      %68 = sbr.rel (0) target = $region25
    $region24: #{tpu_custom_call.1} parent=1 // pred_region
      %s70 = ssub.s32 512, 512
      %71 = vsyncadd [#allocation14], %s70
      %s72 = sshll.u32 [#allocation15], 4
      %s73 = int_to_ptr.vmem [resolvable:$true] %s72
      %78 = dma.hbm_to_vmem [thread:$0]  %s5, 512, %s73, [#allocation14], 128, 128, 8
    $region25: #{tpu_custom_call.1} parent=1 // pred_fallthru
      _
    // Predicated region
    $region26: #{tpu_custom_call.1} parent=1 // pred_check
      _
    $region27: #{tpu_custom_call.1} parent=1 // pred_check_branch
      %80 = sbr.rel (0) target = $region29
    $region28: #{tpu_custom_call.1} parent=1 // pred_region
      _
    $region29: #{tpu_custom_call.1} parent=1 // pred_fallthru
      _
    // Predicated region
    $region30: #{tpu_custom_call.1} parent=1 // pred_check
      _
    $region31: #{tpu_custom_call.1} parent=1 // pred_check_branch
      %82 = sbr.rel (0) target = $region33
    $region32: #{tpu_custom_call.1} parent=1 // pred_region
      %83 = dma.done [#allocation8], 64
    $region33: #{tpu_custom_call.1} parent=1 // pred_fallthru
      _
    // Predicated region
    $region34: #{tpu_custom_call.1} parent=1 // pred_check
      _
    $region35: #{tpu_custom_call.1} parent=1 // pred_check_branch
      %85 = sbr.rel (0) target = $region37
    $region36: #{tpu_custom_call.1} parent=1 // pred_region
      %86 = dma.done [#allocation11], 256
    $region37: #{tpu_custom_call.1} parent=1 // pred_fallthru
      _
    // Predicated region
    $region38: #{tpu_custom_call.1} parent=1 // pred_check
      _
    $region39: #{tpu_custom_call.1} parent=1 // pred_check_branch
      %88 = sbr.rel (0) target = $region41
    $region40: #{tpu_custom_call.1} parent=1 // pred_region
      %89 = dma.done [#allocation11], 512
    $region41: #{tpu_custom_call.1} parent=1 // pred_fallthru
      _
    // Predicated region
    $region42: #{tpu_custom_call.1} parent=1 // pred_check
      _
    $region43: #{tpu_custom_call.1} parent=1 // pred_check_branch
      %91 = sbr.rel (0) target = $region45
    $region44: #{tpu_custom_call.1} parent=1 // pred_region
      %92 = dma.done [#allocation14], 512
    $region45: #{tpu_custom_call.1} parent=1 // pred_fallthru
      _
    // Predicated region
    $region46: #{tpu_custom_call.1} parent=1 // pred_check
      _
    $region47: #{tpu_custom_call.1} parent=1 // pred_check_branch
      %94 = sbr.rel (0) target = $region49
    $region48: #{tpu_custom_call.1} parent=1 // pred_region
      %95 = dma.done [#allocation14], 512
    $region49: #{tpu_custom_call.1} parent=1 // pred_fallthru
      _
    %p97 = scmp.eq.s32.totalorder 0, 0
    // Predicated region
    $region50: #{tpu_custom_call.1} parent=1 // pred_check
      %p98 = pneg %p97
    $region51: #{tpu_custom_call.1} parent=1 // pred_check_branch
      %100 = sbr.rel (%p98) target = $region53
    $region52: #{tpu_custom_call.1} parent=1 // pred_region
      %vm101 = vcmask 253952
      %102 = vst.msk [vmem:[#allocation3] sm:$0x1] %vm101, 0.0
      %103 = vst.msk [vmem:[#allocation4] sm:$0x1] %vm101, 0.0
      %104 = vst.msk [vmem:[#allocation5] sm:$0x1] %vm101, 0.0
      %105 = vst.msk [vmem:[#allocation6] sm:$0x1] %vm101, 0.0
    $region53: #{tpu_custom_call.1} parent=1 // pred_fallthru
      _
    %v106 = vld [vmem:[#allocation12] sm:$0xff]
    %v107 = vld [vmem:[#allocation12 + $0x8] sm:$0xff]
    %v108 = vld [vmem:[#allocation12 + $0x10] sm:$0xff]
    %v109 = vld [vmem:[#allocation12 + $0x18] sm:$0xff]
    %v110 = vld [vmem:[#allocation13] sm:$0xff]
    %v111 = vld [vmem:[#allocation13 + $0x8] sm:$0xff]
    %v112 = vld [vmem:[#allocation13 + $0x10] sm:$0xff]
    %v113 = vld [vmem:[#allocation13 + $0x18] sm:$0xff]
    %v114 = vld [vmem:[#allocation15] sm:$0xff]
    %v115 = vld [vmem:[#allocation15 + $0x8] sm:$0xff]
    %v116 = vld [vmem:[#allocation15 + $0x10] sm:$0xff]
    %v117 = vld [vmem:[#allocation15 + $0x18] sm:$0xff]
    %v118 = vld [vmem:[%s6] sm:$0x1]
    %v119 = vld [vmem:[#allocation7] sm:$0xf]
    %v120 = vld [vmem:[#allocation10] sm:$0xf]
    %v121 = vld [vmem:[#allocation10 + $0x4] sm:$0xf]
    %v122 = vld [vmem:[#allocation10 + $0x8] sm:$0xf]
    %v123 = vld [vmem:[#allocation10 + $0xc] sm:$0xf]
    %v124 = vld [vmem:[%s3] sm:$0x1]
    %v126 = vlaneseq
    %v127 = vshrl.u32 %v126, 7
    %v128 = vsub.s32 0, %v127
    %v129 = vrot.slane %v124, %v128
    %v135 = vunpack.c.l.b16 %v120
    %v136 = vunpack.c.l.b16 %v121
    %v137 = vunpack.c.l.b16 %v122
    %v138 = vunpack.c.l.b16 %v123
    %v139 = vpack.c.b16 %v136, %v135
    %v140 = vpack.c.b16 %v138, %v137
    %vm143 = vcmask 261120
    %v145 = vsel %vm143, %v119, 0
    %147 = vmatprep.subr.bf16.mxu0 0
    %148 = vmatpush1.bf16.msra.mxu0 %v139
    %149 = vmatprep.subr.bf16.mxu0 0
    %150 = vmatpush1.bf16.msra.mxu0 %v140
    %151 = vmatprep.subr.bf16.mxu0 0
    %152 = vmatpush1.bf16.msra.mxu0 0
    %153 = vmatprep.subr.bf16.mxu0 0
    %154 = vmatpush1.bf16.msra.mxu0 0
    %155 = vmatprep.subr.bf16.mxu0 0
    %156 = vmatpush1.bf16.msra.mxu0 0
    %157 = vmatprep.subr.bf16.mxu0 0
    %158 = vmatpush1.bf16.msra.mxu0 0
    %159 = vmatprep.subr.bf16.mxu0 0
    %160 = vmatpush1.bf16.msra.mxu0 0
    %161 = vmatprep.subr.bf16.mxu0 0
    %162 = vmatpush1.bf16.msra.mxu0 0
    %163 = vmatprep.subr.bf16.mxu0 0
    %164 = vmatpush1.bf16.msra.mxu0 0
    %165 = vmatprep.subr.bf16.mxu0 0
    %166 = vmatpush1.bf16.msra.mxu0 0
    %167 = vmatprep.subr.bf16.mxu0 0
    %168 = vmatpush1.bf16.msra.mxu0 0
    %169 = vmatprep.subr.bf16.mxu0 0
    %170 = vmatpush1.bf16.msra.mxu0 0
    %171 = vmatprep.subr.bf16.mxu0 0
    %172 = vmatpush1.bf16.msra.mxu0 0
    %173 = vmatprep.subr.bf16.mxu0 0
    %174 = vmatpush1.bf16.msra.mxu0 0
    %175 = vmatprep.subr.bf16.mxu0 0
    %176 = vmatpush1.bf16.msra.mxu0 0
    %177 = vmatprep.subr.bf16.mxu0 0
    %178 = vmatpush1.bf16.msra.mxu0 0
    %179 = vmatprep.mubr.bf16.mxu0 0
    %180 = vmatmul.mubr.bf16.gmra.mrb[0].mxu0 %v145
    %v181 = vpop.f32.mrb[0].mxu0
    %v182 = vadd.f32 %v129, %v181
    %v183 = vpop.f32.mrb[0].mxu0
    %v184 = vpop.f32.mrb[0].mxu0
    %v185 = vpop.f32.mrb[0].mxu0
    %186 = vdwg.mxu0
    %187 = vst [vmem:[#allocation2] sm:$0xff] %v182
    %v188 = vld [vmem:[#allocation3] sm:$0x1]
    %v189 = vld [vmem:[#allocation4] sm:$0x1]
    %v190 = vld [vmem:[#allocation5] sm:$0x1]
    %v191 = vld [vmem:[#allocation6] sm:$0x1]
    %v192 = vld [vmem:[#allocation2] sm:$0x1]
    %v194 = vsel %vm143, %v188, 0
    %196 = vmatprep.subr.mxu0 0.0
    %197 = vmatpush1.msra.mxu0 %v106
    %198 = vmatprep.subr.mxu0 0.0
    %199 = vmatpush1.msra.mxu0 %v107
    %200 = vmatprep.subr.mxu0 0.0
    %201 = vmatpush1.msra.mxu0 %v108
    %202 = vmatprep.subr.mxu0 0.0
    %203 = vmatpush1.msra.mxu0 %v109
    %204 = vmatprep.subr.mxu0 0.0
    %205 = vmatpush1.msra.mxu0 0.0
    %206 = vmatprep.subr.mxu0 0.0
    %207 = vmatpush1.msra.mxu0 0.0
    %208 = vmatprep.subr.mxu0 0.0
    %209 = vmatpush1.msra.mxu0 0.0
    %210 = vmatprep.subr.mxu0 0.0
    %211 = vmatpush1.msra.mxu0 0.0
    %212 = vmatprep.subr.mxu0 0.0
    %213 = vmatpush1.msra.mxu0 0.0
    %214 = vmatprep.subr.mxu0 0.0
    %215 = vmatpush1.msra.mxu0 0.0
    %216 = vmatprep.subr.mxu0 0.0
    %217 = vmatpush1.msra.mxu0 0.0
    %218 = vmatprep.subr.mxu0 0.0
    %219 = vmatpush1.msra.mxu0 0.0
    %220 = vmatprep.subr.mxu0 0.0
    %221 = vmatpush1.msra.mxu0 0.0
    %222 = vmatprep.subr.mxu0 0.0
    %223 = vmatpush1.msra.mxu0 0.0
    %224 = vmatprep.subr.mxu0 0.0
    %225 = vmatpush1.msra.mxu0 0.0
    %226 = vmatprep.subr.mxu0 0.0
    %227 = vmatpush1.msra.mxu0 0.0
    %228 = vmatprep.subr.mxu0 0.0
    %229 = vmatpush1.msra.mxu0 0.0
    %230 = vmatprep.subr.mxu0 0.0
    %231 = vmatpush1.msra.mxu0 0.0
    %232 = vmatprep.subr.mxu0 0.0
    %233 = vmatpush1.msra.mxu0 0.0
    %234 = vmatprep.subr.mxu0 0.0
    %235 = vmatpush1.msra.mxu0 0.0
    %236 = vmatprep.subr.mxu0 0.0
    %237 = vmatpush1.msra.mxu0 0.0
    %238 = vmatprep.subr.mxu0 0.0
    %239 = vmatpush1.msra.mxu0 0.0
    %240 = vmatprep.subr.mxu0 0.0
    %241 = vmatpush1.msra.mxu0 0.0
    %242 = vmatprep.subr.mxu0 0.0
    %243 = vmatpush1.msra.mxu0 0.0
    %244 = vmatprep.subr.mxu0 0.0
    %245 = vmatpush1.msra.mxu0 0.0
    %246 = vmatprep.subr.mxu0 0.0
    %247 = vmatpush1.msra.mxu0 0.0
    %248 = vmatprep.subr.mxu0 0.0
    %249 = vmatpush1.msra.mxu0 0.0
    %250 = vmatprep.subr.mxu0 0.0
    %251 = vmatpush1.msra.mxu0 0.0
    %252 = vmatprep.subr.mxu0 0.0
    %253 = vmatpush1.msra.mxu0 0.0
    %254 = vmatprep.subr.mxu0 0.0
    %255 = vmatpush1.msra.mxu0 0.0
    %256 = vmatprep.subr.mxu0 0.0
    %257 = vmatpush1.msra.mxu0 0.0
    %258 = vmatprep.subr.mxu0 0.0
    %259 = vmatpush1.msra.mxu0 0.0
    %260 = vmatprep.mubr.f32.mxu0 0.0
    %261 = vmatmul.mubr.f32.gmra.mrb[0].mxu0 %v194
    %v262 = vpop.f32.mrb[0].mxu0
    %v263 = vadd.f32 0.0, %v262
    %v264 = vpop.f32.mrb[0].mxu0
    %265 = vdwg.mxu0
    %v266 = vadd.f32 %v192, %v263
    %v267 = vxor.u32 %v266, 2147483648
    %v268 = vmul.f32 %v267, 1.442695
    %v269 = vpow.pop %v268
    %v270 = vadd.f32 %v269, 1.0
    %v271 = vrcp.pop %v270
    %v272 = vmul.f32 1.0, %v271
    %v273 = vtanh.pop %v266
    %v275 = vlaneseq
    %v276 = vshrl.u32 %v275, 7
    %v277 = vsub.s32 0, %v276
    %v278 = vrot.slane %v189, %v277
    %279 = vrot.lane.b32.xlu0 %v278, 32
    %v280 = vpop.permute.xlu0 %279
    %v282 = vmul.f32 %v272, %v280
    %284 = vrot.lane.b32.xlu0 %v273, 64
    %v285 = vpop.permute.xlu0 %284
    %v287 = vmul.f32 %v272, %v285
    %289 = vrot.lane.b32.xlu0 %v287, 32
    %v290 = vpop.permute.xlu0 %289
    %v292 = vadd.f32 %v282, %v290
    %v293 = vtanh.pop %v292
    %295 = vrot.lane.b32.xlu0 %v293, 64
    %v296 = vpop.permute.xlu0 %295
    %v298 = vmul.f32 %v272, %v296
    %v300 = vsel %vm143, %v190, 0
    %302 = vmatprep.subr.mxu0 0.0
    %303 = vmatpush1.msra.mxu0 %v114
    %304 = vmatprep.subr.mxu0 0.0
    %305 = vmatpush1.msra.mxu0 %v115
    %306 = vmatprep.subr.mxu0 0.0
    %307 = vmatpush1.msra.mxu0 %v116
    %308 = vmatprep.subr.mxu0 0.0
    %309 = vmatpush1.msra.mxu0 %v117
    %310 = vmatprep.subr.mxu0 0.0
    %311 = vmatpush1.msra.mxu0 0.0
    %312 = vmatprep.subr.mxu0 0.0
    %313 = vmatpush1.msra.mxu0 0.0
    %314 = vmatprep.subr.mxu0 0.0
    %315 = vmatpush1.msra.mxu0 0.0
    %316 = vmatprep.subr.mxu0 0.0
    %317 = vmatpush1.msra.mxu0 0.0
    %318 = vmatprep.subr.mxu0 0.0
    %319 = vmatpush1.msra.mxu0 0.0
    %320 = vmatprep.subr.mxu0 0.0
    %321 = vmatpush1.msra.mxu0 0.0
    %322 = vmatprep.subr.mxu0 0.0
    %323 = vmatpush1.msra.mxu0 0.0
    %324 = vmatprep.subr.mxu0 0.0
    %325 = vmatpush1.msra.mxu0 0.0
    %326 = vmatprep.subr.mxu0 0.0
    %327 = vmatpush1.msra.mxu0 0.0
    %328 = vmatprep.subr.mxu0 0.0
    %329 = vmatpush1.msra.mxu0 0.0
    %330 = vmatprep.subr.mxu0 0.0
    %331 = vmatpush1.msra.mxu0 0.0
    %332 = vmatprep.subr.mxu0 0.0
    %333 = vmatpush1.msra.mxu0 0.0
    %334 = vmatprep.subr.mxu0 0.0
    %335 = vmatpush1.msra.mxu0 0.0
    %336 = vmatprep.subr.mxu0 0.0
    %337 = vmatpush1.msra.mxu0 0.0
    %338 = vmatprep.subr.mxu0 0.0
    %339 = vmatpush1.msra.mxu0 0.0
    %340 = vmatprep.subr.mxu0 0.0
    %341 = vmatpush1.msra.mxu0 0.0
    %342 = vmatprep.subr.mxu0 0.0
    %343 = vmatpush1.msra.mxu0 0.0
    %344 = vmatprep.subr.mxu0 0.0
    %345 = vmatpush1.msra.mxu0 0.0
    %346 = vmatprep.subr.mxu0 0.0
    %347 = vmatpush1.msra.mxu0 0.0
    %348 = vmatprep.subr.mxu0 0.0
    %349 = vmatpush1.msra.mxu0 0.0
    %350 = vmatprep.subr.mxu0 0.0
    %351 = vmatpush1.msra.mxu0 0.0
    %352 = vmatprep.subr.mxu0 0.0
    %353 = vmatpush1.msra.mxu0 0.0
    %354 = vmatprep.subr.mxu0 0.0
    %355 = vmatpush1.msra.mxu0 0.0
    %356 = vmatprep.subr.mxu0 0.0
    %357 = vmatpush1.msra.mxu0 0.0
    %358 = vmatprep.subr.mxu0 0.0
    %359 = vmatpush1.msra.mxu0 0.0
    %360 = vmatprep.subr.mxu0 0.0
    %361 = vmatpush1.msra.mxu0 0.0
    %362 = vmatprep.subr.mxu0 0.0
    %363 = vmatpush1.msra.mxu0 0.0
    %364 = vmatprep.subr.mxu0 0.0
    %365 = vmatpush1.msra.mxu0 0.0
    %366 = vmatprep.mubr.f32.mxu0 0.0
    %367 = vmatmul.mubr.f32.gmra.mrb[0].mxu0 %v300
    %v368 = vpop.f32.mrb[0].mxu0
    %v369 = vadd.f32 0.0, %v368
    %v370 = vpop.f32.mrb[0].mxu0
    %371 = vdwg.mxu0
    %373 = vrot.lane.b32.xlu0 %v298, 32
    %v374 = vpop.permute.xlu0 %373
    %v375 = vsel %vm143, %v374, 0
    %377 = vmatprep.subr.mxu0 0.0
    %378 = vmatpush1.msra.mxu0 %v110
    %379 = vmatprep.subr.mxu0 0.0
    %380 = vmatpush1.msra.mxu0 %v111
    %381 = vmatprep.subr.mxu0 0.0
    %382 = vmatpush1.msra.mxu0 %v112
    %383 = vmatprep.subr.mxu0 0.0
    %384 = vmatpush1.msra.mxu0 %v113
    %385 = vmatprep.subr.mxu0 0.0
    %386 = vmatpush1.msra.mxu0 0.0
    %387 = vmatprep.subr.mxu0 0.0
    %388 = vmatpush1.msra.mxu0 0.0
    %389 = vmatprep.subr.mxu0 0.0
    %390 = vmatpush1.msra.mxu0 0.0
    %391 = vmatprep.subr.mxu0 0.0
    %392 = vmatpush1.msra.mxu0 0.0
    %393 = vmatprep.subr.mxu0 0.0
    %394 = vmatpush1.msra.mxu0 0.0
    %395 = vmatprep.subr.mxu0 0.0
    %396 = vmatpush1.msra.mxu0 0.0
    %397 = vmatprep.subr.mxu0 0.0
    %398 = vmatpush1.msra.mxu0 0.0
    %399 = vmatprep.subr.mxu0 0.0
    %400 = vmatpush1.msra.mxu0 0.0
    %401 = vmatprep.subr.mxu0 0.0
    %402 = vmatpush1.msra.mxu0 0.0
    %403 = vmatprep.subr.mxu0 0.0
    %404 = vmatpush1.msra.mxu0 0.0
    %405 = vmatprep.subr.mxu0 0.0
    %406 = vmatpush1.msra.mxu0 0.0
    %407 = vmatprep.subr.mxu0 0.0
    %408 = vmatpush1.msra.mxu0 0.0
    %409 = vmatprep.subr.mxu0 0.0
    %410 = vmatpush1.msra.mxu0 0.0
    %411 = vmatprep.subr.mxu0 0.0
    %412 = vmatpush1.msra.mxu0 0.0
    %413 = vmatprep.subr.mxu0 0.0
    %414 = vmatpush1.msra.mxu0 0.0
    %415 = vmatprep.subr.mxu0 0.0
    %416 = vmatpush1.msra.mxu0 0.0
    %417 = vmatprep.subr.mxu0 0.0
    %418 = vmatpush1.msra.mxu0 0.0
    %419 = vmatprep.subr.mxu0 0.0
    %420 = vmatpush1.msra.mxu0 0.0
    %421 = vmatprep.subr.mxu0 0.0
    %422 = vmatpush1.msra.mxu0 0.0
    %423 = vmatprep.subr.mxu0 0.0
    %424 = vmatpush1.msra.mxu0 0.0
    %425 = vmatprep.subr.mxu0 0.0
    %426 = vmatpush1.msra.mxu0 0.0
    %427 = vmatprep.subr.mxu0 0.0
    %428 = vmatpush1.msra.mxu0 0.0
    %429 = vmatprep.subr.mxu0 0.0
    %430 = vmatpush1.msra.mxu0 0.0
    %431 = vmatprep.subr.mxu0 0.0
    %432 = vmatpush1.msra.mxu0 0.0
    %433 = vmatprep.subr.mxu0 0.0
    %434 = vmatpush1.msra.mxu0 0.0
    %435 = vmatprep.subr.mxu0 0.0
    %436 = vmatpush1.msra.mxu0 0.0
    %437 = vmatprep.subr.mxu0 0.0
    %438 = vmatpush1.msra.mxu0 0.0
    %439 = vmatprep.subr.mxu0 0.0
    %440 = vmatpush1.msra.mxu0 0.0
    %441 = vmatprep.mubr.f32.mxu0 0.0
    %442 = vmatmul.mubr.f32.gmra.mrb[0].mxu0 %v375
    %v443 = vpop.f32.mrb[0].mxu0
    %v444 = vadd.f32 %v369, %v443
    %v445 = vpop.f32.mrb[0].mxu0
    %446 = vdwg.mxu0
    %v447 = vadd.f32 %v444, %v118
    %v448 = vxor.u32 %v447, 2147483648
    %v449 = vmul.f32 %v448, 1.442695
    %v450 = vpow.pop %v449
    %v451 = vadd.f32 %v450, 1.0
    %v452 = vrcp.pop %v451
    %v453 = vmul.f32 1.0, %v452
    %v454 = vtanh.pop %v447
    %v456 = vlaneseq
    %v457 = vshrl.u32 %v456, 7
    %v458 = vsub.s32 0, %v457
    %v459 = vrot.slane %v191, %v458
    %460 = vrot.lane.b32.xlu0 %v459, 32
    %v461 = vpop.permute.xlu0 %460
    %v463 = vmul.f32 %v453, %v461
    %465 = vrot.lane.b32.xlu0 %v454, 64
    %v466 = vpop.permute.xlu0 %465
    %v468 = vmul.f32 %v453, %v466
    %470 = vrot.lane.b32.xlu0 %v468, 32
    %v471 = vpop.permute.xlu0 %470
    %v473 = vadd.f32 %v463, %v471
    %v474 = vtanh.pop %v473
    %476 = vrot.lane.b32.xlu0 %v474, 64
    %v477 = vpop.permute.xlu0 %476
    %v479 = vmul.f32 %v453, %v477
    %v480 = vld [vmem:[#allocation2 + $0x1] sm:$0x1]
    %481 = vmatprep.subr.mxu0 0.0
    %482 = vmatpush1.msra.mxu0 %v106
    %483 = vmatprep.subr.mxu0 0.0
    %484 = vmatpush1.msra.mxu0 %v107
    %485 = vmatprep.subr.mxu0 0.0
    %486 = vmatpush1.msra.mxu0 %v108
    %487 = vmatprep.subr.mxu0 0.0
    %488 = vmatpush1.msra.mxu0 %v109
    %489 = vmatprep.subr.mxu0 0.0
    %490 = vmatpush1.msra.mxu0 0.0
    %491 = vmatprep.subr.mxu0 0.0
    %492 = vmatpush1.msra.mxu0 0.0
    %493 = vmatprep.subr.mxu0 0.0
    %494 = vmatpush1.msra.mxu0 0.0
    %495 = vmatprep.subr.mxu0 0.0
    %496 = vmatpush1.msra.mxu0 0.0
    %497 = vmatprep.subr.mxu0 0.0
    %498 = vmatpush1.msra.mxu0 0.0
    %499 = vmatprep.subr.mxu0 0.0
    %500 = vmatpush1.msra.mxu0 0.0
    %501 = vmatprep.subr.mxu0 0.0
    %502 = vmatpush1.msra.mxu0 0.0
    %503 = vmatprep.subr.mxu0 0.0
    %504 = vmatpush1.msra.mxu0 0.0
    %505 = vmatprep.subr.mxu0 0.0
    %506 = vmatpush1.msra.mxu0 0.0
    %507 = vmatprep.subr.mxu0 0.0
    %508 = vmatpush1.msra.mxu0 0.0
    %509 = vmatprep.subr.mxu0 0.0
    %510 = vmatpush1.msra.mxu0 0.0
    %511 = vmatprep.subr.mxu0 0.0
    %512 = vmatpush1.msra.mxu0 0.0
    %513 = vmatprep.subr.mxu0 0.0
    %514 = vmatpush1.msra.mxu0 0.0
    %515 = vmatprep.subr.mxu0 0.0
    %516 = vmatpush1.msra.mxu0 0.0
    %517 = vmatprep.subr.mxu0 0.0
    %518 = vmatpush1.msra.mxu0 0.0
    %519 = vmatprep.subr.mxu0 0.0
    %520 = vmatpush1.msra.mxu0 0.0
    %521 = vmatprep.subr.mxu0 0.0
    %522 = vmatpush1.msra.mxu0 0.0
    %523 = vmatprep.subr.mxu0 0.0
    %524 = vmatpush1.msra.mxu0 0.0
    %525 = vmatprep.subr.mxu0 0.0
    %526 = vmatpush1.msra.mxu0 0.0
    %527 = vmatprep.subr.mxu0 0.0
    %528 = vmatpush1.msra.mxu0 0.0
    %529 = vmatprep.subr.mxu0 0.0
    %530 = vmatpush1.msra.mxu0 0.0
    %531 = vmatprep.subr.mxu0 0.0
    %532 = vmatpush1.msra.mxu0 0.0
    %533 = vmatprep.subr.mxu0 0.0
    %534 = vmatpush1.msra.mxu0 0.0
    %535 = vmatprep.subr.mxu0 0.0
    %536 = vmatpush1.msra.mxu0 0.0
    %537 = vmatprep.subr.mxu0 0.0
    %538 = vmatpush1.msra.mxu0 0.0
    %539 = vmatprep.subr.mxu0 0.0
    %540 = vmatpush1.msra.mxu0 0.0
    %541 = vmatprep.subr.mxu0 0.0
    %542 = vmatpush1.msra.mxu0 0.0
    %543 = vmatprep.subr.mxu0 0.0
    %544 = vmatpush1.msra.mxu0 0.0
    %545 = vmatprep.mubr.f32.mxu0 0.0
    %546 = vmatmul.mubr.f32.gmra.mrb[0].mxu0 %v375
    %v547 = vpop.f32.mrb[0].mxu0
    %v548 = vadd.f32 0.0, %v547
    %v549 = vpop.f32.mrb[0].mxu0
    %550 = vdwg.mxu0
    %v551 = vadd.f32 %v480, %v548
    %v552 = vxor.u32 %v551, 2147483648
    %v553 = vmul.f32 %v552, 1.442695
    %v554 = vpow.pop %v553
    %v555 = vadd.f32 %v554, 1.0
    %v556 = vrcp.pop %v555
    %v557 = vmul.f32 1.0, %v556
    %v558 = vtanh.pop %v551
    %v559 = vmul.f32 %v557, %v292
    %561 = vrot.lane.b32.xlu0 %v558, 64
    %v562 = vpop.permute.xlu0 %561
    %v564 = vmul.f32 %v557, %v562
    %566 = vrot.lane.b32.xlu0 %v564, 32
    %v567 = vpop.permute.xlu0 %566
    %v569 = vadd.f32 %v559, %v567
    %v570 = vtanh.pop %v569
    %572 = vrot.lane.b32.xlu0 %v570, 64
    %v573 = vpop.permute.xlu0 %572
    %v575 = vmul.f32 %v557, %v573
    %577 = vrot.lane.b32.xlu0 %v479, 32
    %v578 = vpop.permute.xlu0 %577
    %v579 = vsel %vm143, %v578, 0
    %581 = vmatprep.subr.mxu0 0.0
    %582 = vmatpush1.msra.mxu0 %v114
    %583 = vmatprep.subr.mxu0 0.0
    %584 = vmatpush1.msra.mxu0 %v115
    %585 = vmatprep.subr.mxu0 0.0
    %586 = vmatpush1.msra.mxu0 %v116
    %587 = vmatprep.subr.mxu0 0.0
    %588 = vmatpush1.msra.mxu0 %v117
    %589 = vmatprep.subr.mxu0 0.0
    %590 = vmatpush1.msra.mxu0 0.0
    %591 = vmatprep.subr.mxu0 0.0
    %592 = vmatpush1.msra.mxu0 0.0
    %593 = vmatprep.subr.mxu0 0.0
    %594 = vmatpush1.msra.mxu0 0.0
    %595 = vmatprep.subr.mxu0 0.0
    %596 = vmatpush1.msra.mxu0 0.0
    %597 = vmatprep.subr.mxu0 0.0
    %598 = vmatpush1.msra.mxu0 0.0
    %599 = vmatprep.subr.mxu0 0.0
    %600 = vmatpush1.msra.mxu0 0.0
    %601 = vmatprep.subr.mxu0 0.0
    %602 = vmatpush1.msra.mxu0 0.0
    %603 = vmatprep.subr.mxu0 0.0
    %604 = vmatpush1.msra.mxu0 0.0
    %605 = vmatprep.subr.mxu0 0.0
    %606 = vmatpush1.msra.mxu0 0.0
    %607 = vmatprep.subr.mxu0 0.0
    %608 = vmatpush1.msra.mxu0 0.0
    %609 = vmatprep.subr.mxu0 0.0
    %610 = vmatpush1.msra.mxu0 0.0
    %611 = vmatprep.subr.mxu0 0.0
    %612 = vmatpush1.msra.mxu0 0.0
    %613 = vmatprep.subr.mxu0 0.0
    %614 = vmatpush1.msra.mxu0 0.0
    %615 = vmatprep.subr.mxu0 0.0
    %616 = vmatpush1.msra.mxu0 0.0
    %617 = vmatprep.subr.mxu0 0.0
    %618 = vmatpush1.msra.mxu0 0.0
    %619 = vmatprep.subr.mxu0 0.0
    %620 = vmatpush1.msra.mxu0 0.0
    %621 = vmatprep.subr.mxu0 0.0
    %622 = vmatpush1.msra.mxu0 0.0
    %623 = vmatprep.subr.mxu0 0.0
    %624 = vmatpush1.msra.mxu0 0.0
    %625 = vmatprep.subr.mxu0 0.0
    %626 = vmatpush1.msra.mxu0 0.0
    %627 = vmatprep.subr.mxu0 0.0
    %628 = vmatpush1.msra.mxu0 0.0
    %629 = vmatprep.subr.mxu0 0.0
    %630 = vmatpush1.msra.mxu0 0.0
    %631 = vmatprep.subr.mxu0 0.0
    %632 = vmatpush1.msra.mxu0 0.0
    %633 = vmatprep.subr.mxu0 0.0
    %634 = vmatpush1.msra.mxu0 0.0
    %635 = vmatprep.subr.mxu0 0.0
    %636 = vmatpush1.msra.mxu0 0.0
    %637 = vmatprep.subr.mxu0 0.0
    %638 = vmatpush1.msra.mxu0 0.0
    %639 = vmatprep.subr.mxu0 0.0
    %640 = vmatpush1.msra.mxu0 0.0
    %641 = vmatprep.subr.mxu0 0.0
    %642 = vmatpush1.msra.mxu0 0.0
    %643 = vmatprep.subr.mxu0 0.0
    %644 = vmatpush1.msra.mxu0 0.0
    %645 = vmatprep.mubr.f32.mxu0 0.0
    %646 = vmatmul.mubr.f32.gmra.mrb[0].mxu0 %v579
    %v647 = vpop.f32.mrb[0].mxu0
    %v648 = vadd.f32 0.0, %v647
    %v649 = vpop.f32.mrb[0].mxu0
    %650 = vdwg.mxu0
    %652 = vrot.lane.b32.xlu0 %v575, 32
    %v653 = vpop.permute.xlu0 %652
    %v654 = vsel %vm143, %v653, 0
    %656 = vmatprep.subr.mxu0 0.0
    %657 = vmatpush1.msra.mxu0 %v110
    %658 = vmatprep.subr.mxu0 0.0
    %659 = vmatpush1.msra.mxu0 %v111
    %660 = vmatprep.subr.mxu0 0.0
    %661 = vmatpush1.msra.mxu0 %v112
    %662 = vmatprep.subr.mxu0 0.0
    %663 = vmatpush1.msra.mxu0 %v113
    %664 = vmatprep.subr.mxu0 0.0
    %665 = vmatpush1.msra.mxu0 0.0
    %666 = vmatprep.subr.mxu0 0.0
    %667 = vmatpush1.msra.mxu0 0.0
    %668 = vmatprep.subr.mxu0 0.0
    %669 = vmatpush1.msra.mxu0 0.0
    %670 = vmatprep.subr.mxu0 0.0
    %671 = vmatpush1.msra.mxu0 0.0
    %672 = vmatprep.subr.mxu0 0.0
    %673 = vmatpush1.msra.mxu0 0.0
    %674 = vmatprep.subr.mxu0 0.0
    %675 = vmatpush1.msra.mxu0 0.0
    %676 = vmatprep.subr.mxu0 0.0
    %677 = vmatpush1.msra.mxu0 0.0
    %678 = vmatprep.subr.mxu0 0.0
    %679 = vmatpush1.msra.mxu0 0.0
    %680 = vmatprep.subr.mxu0 0.0
    %681 = vmatpush1.msra.mxu0 0.0
    %682 = vmatprep.subr.mxu0 0.0
    %683 = vmatpush1.msra.mxu0 0.0
    %684 = vmatprep.subr.mxu0 0.0
    %685 = vmatpush1.msra.mxu0 0.0
    %686 = vmatprep.subr.mxu0 0.0
    %687 = vmatpush1.msra.mxu0 0.0
    %688 = vmatprep.subr.mxu0 0.0
    %689 = vmatpush1.msra.mxu0 0.0
    %690 = vmatprep.subr.mxu0 0.0
    %691 = vmatpush1.msra.mxu0 0.0
    %692 = vmatprep.subr.mxu0 0.0
    %693 = vmatpush1.msra.mxu0 0.0
    %694 = vmatprep.subr.mxu0 0.0
    %695 = vmatpush1.msra.mxu0 0.0
    %696 = vmatprep.subr.mxu0 0.0
    %697 = vmatpush1.msra.mxu0 0.0
    %698 = vmatprep.subr.mxu0 0.0
    %699 = vmatpush1.msra.mxu0 0.0
    %700 = vmatprep.subr.mxu0 0.0
    %701 = vmatpush1.msra.mxu0 0.0
    %702 = vmatprep.subr.mxu0 0.0
    %703 = vmatpush1.msra.mxu0 0.0
    %704 = vmatprep.subr.mxu0 0.0
    %705 = vmatpush1.msra.mxu0 0.0
    %706 = vmatprep.subr.mxu0 0.0
    %707 = vmatpush1.msra.mxu0 0.0
    %708 = vmatprep.subr.mxu0 0.0
    %709 = vmatpush1.msra.mxu0 0.0
    %710 = vmatprep.subr.mxu0 0.0
    %711 = vmatpush1.msra.mxu0 0.0
    %712 = vmatprep.subr.mxu0 0.0
    %713 = vmatpush1.msra.mxu0 0.0
    %714 = vmatprep.subr.mxu0 0.0
    %715 = vmatpush1.msra.mxu0 0.0
    %716 = vmatprep.subr.mxu0 0.0
    %717 = vmatpush1.msra.mxu0 0.0
    %718 = vmatprep.subr.mxu0 0.0
    %719 = vmatpush1.msra.mxu0 0.0
    %720 = vmatprep.mubr.f32.mxu0 0.0
    %721 = vmatmul.mubr.f32.gmra.mrb[0].mxu0 %v654
    %v722 = vpop.f32.mrb[0].mxu0
    %v723 = vadd.f32 %v648, %v722
    %v724 = vpop.f32.mrb[0].mxu0
    %725 = vdwg.mxu0
    %v726 = vadd.f32 %v723, %v118
    %v727 = vxor.u32 %v726, 2147483648
    %v728 = vmul.f32 %v727, 1.442695
    %v729 = vpow.pop %v728
    %v730 = vadd.f32 %v729, 1.0
    %v731 = vrcp.pop %v730
    %v732 = vmul.f32 1.0, %v731
    %v733 = vtanh.pop %v726
    %v734 = vmul.f32 %v732, %v473
    %736 = vrot.lane.b32.xlu0 %v733, 64
    %v737 = vpop.permute.xlu0 %736
    %v739 = vmul.f32 %v732, %v737
    %741 = vrot.lane.b32.xlu0 %v739, 32
    %v742 = vpop.permute.xlu0 %741
    %v744 = vadd.f32 %v734, %v742
    %v745 = vtanh.pop %v744
    %747 = vrot.lane.b32.xlu0 %v745, 64
    %v748 = vpop.permute.xlu0 %747
    %v750 = vmul.f32 %v732, %v748
    %v751 = vld [vmem:[#allocation2 + $0x2] sm:$0x1]
    %752 = vmatprep.subr.mxu0 0.0
    %753 = vmatpush1.msra.mxu0 %v106
    %754 = vmatprep.subr.mxu0 0.0
    %755 = vmatpush1.msra.mxu0 %v107
    %756 = vmatprep.subr.mxu0 0.0
    %757 = vmatpush1.msra.mxu0 %v108
    %758 = vmatprep.subr.mxu0 0.0
    %759 = vmatpush1.msra.mxu0 %v109
    %760 = vmatprep.subr.mxu0 0.0
    %761 = vmatpush1.msra.mxu0 0.0
    %762 = vmatprep.subr.mxu0 0.0
    %763 = vmatpush1.msra.mxu0 0.0
    %764 = vmatprep.subr.mxu0 0.0
    %765 = vmatpush1.msra.mxu0 0.0
    %766 = vmatprep.subr.mxu0 0.0
    %767 = vmatpush1.msra.mxu0 0.0
    %768 = vmatprep.subr.mxu0 0.0
    %769 = vmatpush1.msra.mxu0 0.0
    %770 = vmatprep.subr.mxu0 0.0
    %771 = vmatpush1.msra.mxu0 0.0
    %772 = vmatprep.subr.mxu0 0.0
    %773 = vmatpush1.msra.mxu0 0.0
    %774 = vmatprep.subr.mxu0 0.0
    %775 = vmatpush1.msra.mxu0 0.0
    %776 = vmatprep.subr.mxu0 0.0
    %777 = vmatpush1.msra.mxu0 0.0
    %778 = vmatprep.subr.mxu0 0.0
    %779 = vmatpush1.msra.mxu0 0.0
    %780 = vmatprep.subr.mxu0 0.0
    %781 = vmatpush1.msra.mxu0 0.0
    %782 = vmatprep.subr.mxu0 0.0
    %783 = vmatpush1.msra.mxu0 0.0
    %784 = vmatprep.subr.mxu0 0.0
    %785 = vmatpush1.msra.mxu0 0.0
    %786 = vmatprep.subr.mxu0 0.0
    %787 = vmatpush1.msra.mxu0 0.0
    %788 = vmatprep.subr.mxu0 0.0
    %789 = vmatpush1.msra.mxu0 0.0
    %790 = vmatprep.subr.mxu0 0.0
    %791 = vmatpush1.msra.mxu0 0.0
    %792 = vmatprep.subr.mxu0 0.0
    %793 = vmatpush1.msra.mxu0 0.0
    %794 = vmatprep.subr.mxu0 0.0
    %795 = vmatpush1.msra.mxu0 0.0
    %796 = vmatprep.subr.mxu0 0.0
    %797 = vmatpush1.msra.mxu0 0.0
    %798 = vmatprep.subr.mxu0 0.0
    %799 = vmatpush1.msra.mxu0 0.0
    %800 = vmatprep.subr.mxu0 0.0
    %801 = vmatpush1.msra.mxu0 0.0
    %802 = vmatprep.subr.mxu0 0.0
    %803 = vmatpush1.msra.mxu0 0.0
    %804 = vmatprep.subr.mxu0 0.0
    %805 = vmatpush1.msra.mxu0 0.0
    %806 = vmatprep.subr.mxu0 0.0
    %807 = vmatpush1.msra.mxu0 0.0
    %808 = vmatprep.subr.mxu0 0.0
    %809 = vmatpush1.msra.mxu0 0.0
    %810 = vmatprep.subr.mxu0 0.0
    %811 = vmatpush1.msra.mxu0 0.0
    %812 = vmatprep.subr.mxu0 0.0
    %813 = vmatpush1.msra.mxu0 0.0
    %814 = vmatprep.subr.mxu0 0.0
    %815 = vmatpush1.msra.mxu0 0.0
    %816 = vmatprep.mubr.f32.mxu0 0.0
    %817 = vmatmul.mubr.f32.gmra.mrb[0].mxu0 %v654
    %v818 = vpop.f32.mrb[0].mxu0
    %v819 = vadd.f32 0.0, %v818
    %v820 = vpop.f32.mrb[0].mxu0
    %821 = vdwg.mxu0
    %v822 = vadd.f32 %v751, %v819
    %v823 = vxor.u32 %v822, 2147483648
    %v824 = vmul.f32 %v823, 1.442695
    %v825 = vpow.pop %v824
    %v826 = vadd.f32 %v825, 1.0
    %v827 = vrcp.pop %v826
    %v828 = vmul.f32 1.0, %v827
    %v829 = vtanh.pop %v822
    %v830 = vmul.f32 %v828, %v569
    %832 = vrot.lane.b32.xlu0 %v829, 64
    %v833 = vpop.permute.xlu0 %832
    %v835 = vmul.f32 %v828, %v833
    %837 = vrot.lane.b32.xlu0 %v835, 32
    %v838 = vpop.permute.xlu0 %837
    %v840 = vadd.f32 %v830, %v838
    %v841 = vtanh.pop %v840
    %843 = vrot.lane.b32.xlu0 %v841, 64
    %v844 = vpop.permute.xlu0 %843
    %v846 = vmul.f32 %v828, %v844
    %848 = vrot.lane.b32.xlu0 %v750, 32
    %v849 = vpop.permute.xlu0 %848
    %v850 = vsel %vm143, %v849, 0
    %852 = vmatprep.subr.mxu0 0.0
    %853 = vmatpush1.msra.mxu0 %v114
    %854 = vmatprep.subr.mxu0 0.0
    %855 = vmatpush1.msra.mxu0 %v115
    %856 = vmatprep.subr.mxu0 0.0
    %857 = vmatpush1.msra.mxu0 %v116
    %858 = vmatprep.subr.mxu0 0.0
    %859 = vmatpush1.msra.mxu0 %v117
    %860 = vmatprep.subr.mxu0 0.0
    %861 = vmatpush1.msra.mxu0 0.0
    %862 = vmatprep.subr.mxu0 0.0
    %863 = vmatpush1.msra.mxu0 0.0
    %864 = vmatprep.subr.mxu0 0.0
    %865 = vmatpush1.msra.mxu0 0.0
    %866 = vmatprep.subr.mxu0 0.0
    %867 = vmatpush1.msra.mxu0 0.0
    %868 = vmatprep.subr.mxu0 0.0
    %869 = vmatpush1.msra.mxu0 0.0
    %870 = vmatprep.subr.mxu0 0.0
    %871 = vmatpush1.msra.mxu0 0.0
    %872 = vmatprep.subr.mxu0 0.0
    %873 = vmatpush1.msra.mxu0 0.0
    %874 = vmatprep.subr.mxu0 0.0
    %875 = vmatpush1.msra.mxu0 0.0
    %876 = vmatprep.subr.mxu0 0.0
    %877 = vmatpush1.msra.mxu0 0.0
    %878 = vmatprep.subr.mxu0 0.0
    %879 = vmatpush1.msra.mxu0 0.0
    %880 = vmatprep.subr.mxu0 0.0
    %881 = vmatpush1.msra.mxu0 0.0
    %882 = vmatprep.subr.mxu0 0.0
    %883 = vmatpush1.msra.mxu0 0.0
    %884 = vmatprep.subr.mxu0 0.0
    %885 = vmatpush1.msra.mxu0 0.0
    %886 = vmatprep.subr.mxu0 0.0
    %887 = vmatpush1.msra.mxu0 0.0
    %888 = vmatprep.subr.mxu0 0.0
    %889 = vmatpush1.msra.mxu0 0.0
    %890 = vmatprep.subr.mxu0 0.0
    %891 = vmatpush1.msra.mxu0 0.0
    %892 = vmatprep.subr.mxu0 0.0
    %893 = vmatpush1.msra.mxu0 0.0
    %894 = vmatprep.subr.mxu0 0.0
    %895 = vmatpush1.msra.mxu0 0.0
    %896 = vmatprep.subr.mxu0 0.0
    %897 = vmatpush1.msra.mxu0 0.0
    %898 = vmatprep.subr.mxu0 0.0
    %899 = vmatpush1.msra.mxu0 0.0
    %900 = vmatprep.subr.mxu0 0.0
    %901 = vmatpush1.msra.mxu0 0.0
    %902 = vmatprep.subr.mxu0 0.0
    %903 = vmatpush1.msra.mxu0 0.0
    %904 = vmatprep.subr.mxu0 0.0
    %905 = vmatpush1.msra.mxu0 0.0
    %906 = vmatprep.subr.mxu0 0.0
    %907 = vmatpush1.msra.mxu0 0.0
    %908 = vmatprep.subr.mxu0 0.0
    %909 = vmatpush1.msra.mxu0 0.0
    %910 = vmatprep.subr.mxu0 0.0
    %911 = vmatpush1.msra.mxu0 0.0
    %912 = vmatprep.subr.mxu0 0.0
    %913 = vmatpush1.msra.mxu0 0.0
    %914 = vmatprep.subr.mxu0 0.0
    %915 = vmatpush1.msra.mxu0 0.0
    %916 = vmatprep.mubr.f32.mxu0 0.0
    %917 = vmatmul.mubr.f32.gmra.mrb[0].mxu0 %v850
    %v918 = vpop.f32.mrb[0].mxu0
    %v919 = vadd.f32 0.0, %v918
    %v920 = vpop.f32.mrb[0].mxu0
    %921 = vdwg.mxu0
    %923 = vrot.lane.b32.xlu0 %v846, 32
    %v924 = vpop.permute.xlu0 %923
    %v925 = vsel %vm143, %v924, 0
    %927 = vmatprep.subr.mxu0 0.0
    %928 = vmatpush1.msra.mxu0 %v110
    %929 = vmatprep.subr.mxu0 0.0
    %930 = vmatpush1.msra.mxu0 %v111
    %931 = vmatprep.subr.mxu0 0.0
    %932 = vmatpush1.msra.mxu0 %v112
    %933 = vmatprep.subr.mxu0 0.0
    %934 = vmatpush1.msra.mxu0 %v113
    %935 = vmatprep.subr.mxu0 0.0
    %936 = vmatpush1.msra.mxu0 0.0
    %937 = vmatprep.subr.mxu0 0.0
    %938 = vmatpush1.msra.mxu0 0.0
    %939 = vmatprep.subr.mxu0 0.0
    %940 = vmatpush1.msra.mxu0 0.0
    %941 = vmatprep.subr.mxu0 0.0
    %942 = vmatpush1.msra.mxu0 0.0
    %943 = vmatprep.subr.mxu0 0.0
    %944 = vmatpush1.msra.mxu0 0.0
    %945 = vmatprep.subr.mxu0 0.0
    %946 = vmatpush1.msra.mxu0 0.0
    %947 = vmatprep.subr.mxu0 0.0
    %948 = vmatpush1.msra.mxu0 0.0
    %949 = vmatprep.subr.mxu0 0.0
    %950 = vmatpush1.msra.mxu0 0.0
    %951 = vmatprep.subr.mxu0 0.0
    %952 = vmatpush1.msra.mxu0 0.0
    %953 = vmatprep.subr.mxu0 0.0
    %954 = vmatpush1.msra.mxu0 0.0
    %955 = vmatprep.subr.mxu0 0.0
    %956 = vmatpush1.msra.mxu0 0.0
    %957 = vmatprep.subr.mxu0 0.0
    %958 = vmatpush1.msra.mxu0 0.0
    %959 = vmatprep.subr.mxu0 0.0
    %960 = vmatpush1.msra.mxu0 0.0
    %961 = vmatprep.subr.mxu0 0.0
    %962 = vmatpush1.msra.mxu0 0.0
    %963 = vmatprep.subr.mxu0 0.0
    %964 = vmatpush1.msra.mxu0 0.0
    %965 = vmatprep.subr.mxu0 0.0
    %966 = vmatpush1.msra.mxu0 0.0
    %967 = vmatprep.subr.mxu0 0.0
    %968 = vmatpush1.msra.mxu0 0.0
    %969 = vmatprep.subr.mxu0 0.0
    %970 = vmatpush1.msra.mxu0 0.0
    %971 = vmatprep.subr.mxu0 0.0
    %972 = vmatpush1.msra.mxu0 0.0
    %973 = vmatprep.subr.mxu0 0.0
    %974 = vmatpush1.msra.mxu0 0.0
    %975 = vmatprep.subr.mxu0 0.0
    %976 = vmatpush1.msra.mxu0 0.0
    %977 = vmatprep.subr.mxu0 0.0
    %978 = vmatpush1.msra.mxu0 0.0
    %979 = vmatprep.subr.mxu0 0.0
    %980 = vmatpush1.msra.mxu0 0.0
    %981 = vmatprep.subr.mxu0 0.0
    %982 = vmatpush1.msra.mxu0 0.0
    %983 = vmatprep.subr.mxu0 0.0
    %984 = vmatpush1.msra.mxu0 0.0
    %985 = vmatprep.subr.mxu0 0.0
    %986 = vmatpush1.msra.mxu0 0.0
    %987 = vmatprep.subr.mxu0 0.0
    %988 = vmatpush1.msra.mxu0 0.0
    %989 = vmatprep.subr.mxu0 0.0
    %990 = vmatpush1.msra.mxu0 0.0
    %991 = vmatprep.mubr.f32.mxu0 0.0
    %992 = vmatmul.mubr.f32.gmra.mrb[0].mxu0 %v925
    %v993 = vpop.f32.mrb[0].mxu0
    %v994 = vadd.f32 %v919, %v993
    %v995 = vpop.f32.mrb[0].mxu0
    %996 = vdwg.mxu0
    %v997 = vadd.f32 %v994, %v118
    %v998 = vxor.u32 %v997, 2147483648
    %v999 = vmul.f32 %v998, 1.442695
    %v1000 = vpow.pop %v999
    %v1001 = vadd.f32 %v1000, 1.0
    %v1002 = vrcp.pop %v1001
    %v1003 = vmul.f32 1.0, %v1002
    %v1004 = vtanh.pop %v997
    %v1005 = vmul.f32 %v1003, %v744
    %1007 = vrot.lane.b32.xlu0 %v1004, 64
    %v1008 = vpop.permute.xlu0 %1007
    %v1010 = vmul.f32 %v1003, %v1008
    %1012 = vrot.lane.b32.xlu0 %v1010, 32
    %v1013 = vpop.permute.xlu0 %1012
    %v1015 = vadd.f32 %v1005, %v1013
    %v1016 = vtanh.pop %v1015
    %1018 = vrot.lane.b32.xlu0 %v1016, 64
    %v1019 = vpop.permute.xlu0 %1018
    %v1021 = vmul.f32 %v1003, %v1019
    %v1022 = vld [vmem:[#allocation2 + $0x3] sm:$0x1]
    %1023 = vmatprep.subr.mxu0 0.0
    %1024 = vmatpush1.msra.mxu0 %v106
    %1025 = vmatprep.subr.mxu0 0.0
    %1026 = vmatpush1.msra.mxu0 %v107
    %1027 = vmatprep.subr.mxu0 0.0
    %1028 = vmatpush1.msra.mxu0 %v108
    %1029 = vmatprep.subr.mxu0 0.0
    %1030 = vmatpush1.msra.mxu0 %v109
    %1031 = vmatprep.subr.mxu0 0.0
    %1032 = vmatpush1.msra.mxu0 0.0
    %1033 = vmatprep.subr.mxu0 0.0
    %1034 = vmatpush1.msra.mxu0 0.0
    %1035 = vmatprep.subr.mxu0 0.0
    %1036 = vmatpush1.msra.mxu0 0.0
    %1037 = vmatprep.subr.mxu0 0.0
    %1038 = vmatpush1.msra.mxu0 0.0
    %1039 = vmatprep.subr.mxu0 0.0
    %1040 = vmatpush1.msra.mxu0 0.0
    %1041 = vmatprep.subr.mxu0 0.0
    %1042 = vmatpush1.msra.mxu0 0.0
    %1043 = vmatprep.subr.mxu0 0.0
    %1044 = vmatpush1.msra.mxu0 0.0
    %1045 = vmatprep.subr.mxu0 0.0
    %1046 = vmatpush1.msra.mxu0 0.0
    %1047 = vmatprep.subr.mxu0 0.0
    %1048 = vmatpush1.msra.mxu0 0.0
    %1049 = vmatprep.subr.mxu0 0.0
    %1050 = vmatpush1.msra.mxu0 0.0
    %1051 = vmatprep.subr.mxu0 0.0
    %1052 = vmatpush1.msra.mxu0 0.0
    %1053 = vmatprep.subr.mxu0 0.0
    %1054 = vmatpush1.msra.mxu0 0.0
    %1055 = vmatprep.subr.mxu0 0.0
    %1056 = vmatpush1.msra.mxu0 0.0
    %1057 = vmatprep.subr.mxu0 0.0
    %1058 = vmatpush1.msra.mxu0 0.0
    %1059 = vmatprep.subr.mxu0 0.0
    %1060 = vmatpush1.msra.mxu0 0.0
    %1061 = vmatprep.subr.mxu0 0.0
    %1062 = vmatpush1.msra.mxu0 0.0
    %1063 = vmatprep.subr.mxu0 0.0
    %1064 = vmatpush1.msra.mxu0 0.0
    %1065 = vmatprep.subr.mxu0 0.0
    %1066 = vmatpush1.msra.mxu0 0.0
    %1067 = vmatprep.subr.mxu0 0.0
    %1068 = vmatpush1.msra.mxu0 0.0
    %1069 = vmatprep.subr.mxu0 0.0
    %1070 = vmatpush1.msra.mxu0 0.0
    %1071 = vmatprep.subr.mxu0 0.0
    %1072 = vmatpush1.msra.mxu0 0.0
    %1073 = vmatprep.subr.mxu0 0.0
    %1074 = vmatpush1.msra.mxu0 0.0
    %1075 = vmatprep.subr.mxu0 0.0
    %1076 = vmatpush1.msra.mxu0 0.0
    %1077 = vmatprep.subr.mxu0 0.0
    %1078 = vmatpush1.msra.mxu0 0.0
    %1079 = vmatprep.subr.mxu0 0.0
    %1080 = vmatpush1.msra.mxu0 0.0
    %1081 = vmatprep.subr.mxu0 0.0
    %1082 = vmatpush1.msra.mxu0 0.0
    %1083 = vmatprep.subr.mxu0 0.0
    %1084 = vmatpush1.msra.mxu0 0.0
    %1085 = vmatprep.subr.mxu0 0.0
    %1086 = vmatpush1.msra.mxu0 0.0
    %1087 = vmatprep.mubr.f32.mxu0 0.0
    %1088 = vmatmul.mubr.f32.gmra.mrb[0].mxu0 %v925
    %v1089 = vpop.f32.mrb[0].mxu0
    %v1090 = vadd.f32 0.0, %v1089
    %v1091 = vpop.f32.mrb[0].mxu0
    %1092 = vdwg.mxu0
    %v1093 = vadd.f32 %v1022, %v1090
    %v1094 = vxor.u32 %v1093, 2147483648
    %v1095 = vmul.f32 %v1094, 1.442695
    %v1096 = vpow.pop %v1095
    %v1097 = vadd.f32 %v1096, 1.0
    %v1098 = vrcp.pop %v1097
    %v1099 = vmul.f32 1.0, %v1098
    %v1100 = vtanh.pop %v1093
    %v1101 = vmul.f32 %v1099, %v840
    %1103 = vrot.lane.b32.xlu0 %v1100, 64
    %v1104 = vpop.permute.xlu0 %1103
    %v1106 = vmul.f32 %v1099, %v1104
    %1108 = vrot.lane.b32.xlu0 %v1106, 32
    %v1109 = vpop.permute.xlu0 %1108
    %v1111 = vadd.f32 %v1101, %v1109
    %v1112 = vtanh.pop %v1111
    %1114 = vrot.lane.b32.xlu0 %v1112, 64
    %v1115 = vpop.permute.xlu0 %1114
    %v1117 = vmul.f32 %v1099, %v1115
    %1119 = vrot.lane.b32.xlu0 %v1021, 32
    %v1120 = vpop.permute.xlu0 %1119
    %v1121 = vsel %vm143, %v1120, 0
    %1123 = vmatprep.subr.mxu0 0.0
    %1124 = vmatpush1.msra.mxu0 %v114
    %1125 = vmatprep.subr.mxu0 0.0
    %1126 = vmatpush1.msra.mxu0 %v115
    %1127 = vmatprep.subr.mxu0 0.0
    %1128 = vmatpush1.msra.mxu0 %v116
    %1129 = vmatprep.subr.mxu0 0.0
    %1130 = vmatpush1.msra.mxu0 %v117
    %1131 = vmatprep.subr.mxu0 0.0
    %1132 = vmatpush1.msra.mxu0 0.0
    %1133 = vmatprep.subr.mxu0 0.0
    %1134 = vmatpush1.msra.mxu0 0.0
    %1135 = vmatprep.subr.mxu0 0.0
    %1136 = vmatpush1.msra.mxu0 0.0
    %1137 = vmatprep.subr.mxu0 0.0
    %1138 = vmatpush1.msra.mxu0 0.0
    %1139 = vmatprep.subr.mxu0 0.0
    %1140 = vmatpush1.msra.mxu0 0.0
    %1141 = vmatprep.subr.mxu0 0.0
    %1142 = vmatpush1.msra.mxu0 0.0
    %1143 = vmatprep.subr.mxu0 0.0
    %1144 = vmatpush1.msra.mxu0 0.0
    %1145 = vmatprep.subr.mxu0 0.0
    %1146 = vmatpush1.msra.mxu0 0.0
    %1147 = vmatprep.subr.mxu0 0.0
    %1148 = vmatpush1.msra.mxu0 0.0
    %1149 = vmatprep.subr.mxu0 0.0
    %1150 = vmatpush1.msra.mxu0 0.0
    %1151 = vmatprep.subr.mxu0 0.0
    %1152 = vmatpush1.msra.mxu0 0.0
    %1153 = vmatprep.subr.mxu0 0.0
    %1154 = vmatpush1.msra.mxu0 0.0
    %1155 = vmatprep.subr.mxu0 0.0
    %1156 = vmatpush1.msra.mxu0 0.0
    %1157 = vmatprep.subr.mxu0 0.0
    %1158 = vmatpush1.msra.mxu0 0.0
    %1159 = vmatprep.subr.mxu0 0.0
    %1160 = vmatpush1.msra.mxu0 0.0
    %1161 = vmatprep.subr.mxu0 0.0
    %1162 = vmatpush1.msra.mxu0 0.0
    %1163 = vmatprep.subr.mxu0 0.0
    %1164 = vmatpush1.msra.mxu0 0.0
    %1165 = vmatprep.subr.mxu0 0.0
    %1166 = vmatpush1.msra.mxu0 0.0
    %1167 = vmatprep.subr.mxu0 0.0
    %1168 = vmatpush1.msra.mxu0 0.0
    %1169 = vmatprep.subr.mxu0 0.0
    %1170 = vmatpush1.msra.mxu0 0.0
    %1171 = vmatprep.subr.mxu0 0.0
    %1172 = vmatpush1.msra.mxu0 0.0
    %1173 = vmatprep.subr.mxu0 0.0
    %1174 = vmatpush1.msra.mxu0 0.0
    %1175 = vmatprep.subr.mxu0 0.0
    %1176 = vmatpush1.msra.mxu0 0.0
    %1177 = vmatprep.subr.mxu0 0.0
    %1178 = vmatpush1.msra.mxu0 0.0
    %1179 = vmatprep.subr.mxu0 0.0
    %1180 = vmatpush1.msra.mxu0 0.0
    %1181 = vmatprep.subr.mxu0 0.0
    %1182 = vmatpush1.msra.mxu0 0.0
    %1183 = vmatprep.subr.mxu0 0.0
    %1184 = vmatpush1.msra.mxu0 0.0
    %1185 = vmatprep.subr.mxu0 0.0
    %1186 = vmatpush1.msra.mxu0 0.0
    %1187 = vmatprep.mubr.f32.mxu0 0.0
    %1188 = vmatmul.mubr.f32.gmra.mrb[0].mxu0 %v1121
    %v1189 = vpop.f32.mrb[0].mxu0
    %v1190 = vadd.f32 0.0, %v1189
    %v1191 = vpop.f32.mrb[0].mxu0
    %1192 = vdwg.mxu0
    %1194 = vrot.lane.b32.xlu0 %v1117, 32
    %v1195 = vpop.permute.xlu0 %1194
    %v1196 = vsel %vm143, %v1195, 0
    %1198 = vmatprep.subr.mxu0 0.0
    %1199 = vmatpush1.msra.mxu0 %v110
    %1200 = vmatprep.subr.mxu0 0.0
    %1201 = vmatpush1.msra.mxu0 %v111
    %1202 = vmatprep.subr.mxu0 0.0
    %1203 = vmatpush1.msra.mxu0 %v112
    %1204 = vmatprep.subr.mxu0 0.0
    %1205 = vmatpush1.msra.mxu0 %v113
    %1206 = vmatprep.subr.mxu0 0.0
    %1207 = vmatpush1.msra.mxu0 0.0
    %1208 = vmatprep.subr.mxu0 0.0
    %1209 = vmatpush1.msra.mxu0 0.0
    %1210 = vmatprep.subr.mxu0 0.0
    %1211 = vmatpush1.msra.mxu0 0.0
    %1212 = vmatprep.subr.mxu0 0.0
    %1213 = vmatpush1.msra.mxu0 0.0
    %1214 = vmatprep.subr.mxu0 0.0
    %1215 = vmatpush1.msra.mxu0 0.0
    %1216 = vmatprep.subr.mxu0 0.0
    %1217 = vmatpush1.msra.mxu0 0.0
    %1218 = vmatprep.subr.mxu0 0.0
    %1219 = vmatpush1.msra.mxu0 0.0
    %1220 = vmatprep.subr.mxu0 0.0
    %1221 = vmatpush1.msra.mxu0 0.0
    %1222 = vmatprep.subr.mxu0 0.0
    %1223 = vmatpush1.msra.mxu0 0.0
    %1224 = vmatprep.subr.mxu0 0.0
    %1225 = vmatpush1.msra.mxu0 0.0
    %1226 = vmatprep.subr.mxu0 0.0
    %1227 = vmatpush1.msra.mxu0 0.0
    %1228 = vmatprep.subr.mxu0 0.0
    %1229 = vmatpush1.msra.mxu0 0.0
    %1230 = vmatprep.subr.mxu0 0.0
    %1231 = vmatpush1.msra.mxu0 0.0
    %1232 = vmatprep.subr.mxu0 0.0
    %1233 = vmatpush1.msra.mxu0 0.0
    %1234 = vmatprep.subr.mxu0 0.0
    %1235 = vmatpush1.msra.mxu0 0.0
    %1236 = vmatprep.subr.mxu0 0.0
    %1237 = vmatpush1.msra.mxu0 0.0
    %1238 = vmatprep.subr.mxu0 0.0
    %1239 = vmatpush1.msra.mxu0 0.0
    %1240 = vmatprep.subr.mxu0 0.0
    %1241 = vmatpush1.msra.mxu0 0.0
    %1242 = vmatprep.subr.mxu0 0.0
    %1243 = vmatpush1.msra.mxu0 0.0
    %1244 = vmatprep.subr.mxu0 0.0
    %1245 = vmatpush1.msra.mxu0 0.0
    %1246 = vmatprep.subr.mxu0 0.0
    %1247 = vmatpush1.msra.mxu0 0.0
    %1248 = vmatprep.subr.mxu0 0.0
    %1249 = vmatpush1.msra.mxu0 0.0
    %1250 = vmatprep.subr.mxu0 0.0
    %1251 = vmatpush1.msra.mxu0 0.0
    %1252 = vmatprep.subr.mxu0 0.0
    %1253 = vmatpush1.msra.mxu0 0.0
    %1254 = vmatprep.subr.mxu0 0.0
    %1255 = vmatpush1.msra.mxu0 0.0
    %1256 = vmatprep.subr.mxu0 0.0
    %1257 = vmatpush1.msra.mxu0 0.0
    %1258 = vmatprep.subr.mxu0 0.0
    %1259 = vmatpush1.msra.mxu0 0.0
    %1260 = vmatprep.subr.mxu0 0.0
    %1261 = vmatpush1.msra.mxu0 0.0
    %1262 = vmatprep.mubr.f32.mxu0 0.0
    %1263 = vmatmul.mubr.f32.gmra.mrb[0].mxu0 %v1196
    %v1264 = vpop.f32.mrb[0].mxu0
    %v1265 = vadd.f32 %v1190, %v1264
    %v1266 = vpop.f32.mrb[0].mxu0
    %1267 = vdwg.mxu0
    %v1268 = vadd.f32 %v1265, %v118
    %v1269 = vxor.u32 %v1268, 2147483648
    %v1270 = vmul.f32 %v1269, 1.442695
    %v1271 = vpow.pop %v1270
    %v1272 = vadd.f32 %v1271, 1.0
    %v1273 = vrcp.pop %v1272
    %v1274 = vmul.f32 1.0, %v1273
    %v1275 = vtanh.pop %v1268
    %v1276 = vmul.f32 %v1274, %v1015
    %1278 = vrot.lane.b32.xlu0 %v1275, 64
    %v1279 = vpop.permute.xlu0 %1278
    %v1281 = vmul.f32 %v1274, %v1279
    %1283 = vrot.lane.b32.xlu0 %v1281, 32
    %v1284 = vpop.permute.xlu0 %1283
    %v1286 = vadd.f32 %v1276, %v1284
    %v1287 = vtanh.pop %v1286
    %1289 = vrot.lane.b32.xlu0 %v1287, 64
    %v1290 = vpop.permute.xlu0 %1289
    %v1292 = vmul.f32 %v1274, %v1290
    %v1293 = vld [vmem:[#allocation2 + $0x4] sm:$0x1]
    %1294 = vmatprep.subr.mxu0 0.0
    %1295 = vmatpush1.msra.mxu0 %v106
    %1296 = vmatprep.subr.mxu0 0.0
    %1297 = vmatpush1.msra.mxu0 %v107
    %1298 = vmatprep.subr.mxu0 0.0
    %1299 = vmatpush1.msra.mxu0 %v108
    %1300 = vmatprep.subr.mxu0 0.0
    %1301 = vmatpush1.msra.mxu0 %v109
    %1302 = vmatprep.subr.mxu0 0.0
    %1303 = vmatpush1.msra.mxu0 0.0
    %1304 = vmatprep.subr.mxu0 0.0
    %1305 = vmatpush1.msra.mxu0 0.0
    %1306 = vmatprep.subr.mxu0 0.0
    %1307 = vmatpush1.msra.mxu0 0.0
    %1308 = vmatprep.subr.mxu0 0.0
    %1309 = vmatpush1.msra.mxu0 0.0
    %1310 = vmatprep.subr.mxu0 0.0
    %1311 = vmatpush1.msra.mxu0 0.0
    %1312 = vmatprep.subr.mxu0 0.0
    %1313 = vmatpush1.msra.mxu0 0.0
    %1314 = vmatprep.subr.mxu0 0.0
    %1315 = vmatpush1.msra.mxu0 0.0
    %1316 = vmatprep.subr.mxu0 0.0
    %1317 = vmatpush1.msra.mxu0 0.0
    %1318 = vmatprep.subr.mxu0 0.0
    %1319 = vmatpush1.msra.mxu0 0.0
    %1320 = vmatprep.subr.mxu0 0.0
    %1321 = vmatpush1.msra.mxu0 0.0
    %1322 = vmatprep.subr.mxu0 0.0
    %1323 = vmatpush1.msra.mxu0 0.0
    %1324 = vmatprep.subr.mxu0 0.0
    %1325 = vmatpush1.msra.mxu0 0.0
    %1326 = vmatprep.subr.mxu0 0.0
    %1327 = vmatpush1.msra.mxu0 0.0
    %1328 = vmatprep.subr.mxu0 0.0
    %1329 = vmatpush1.msra.mxu0 0.0
    %1330 = vmatprep.subr.mxu0 0.0
    %1331 = vmatpush1.msra.mxu0 0.0
    %1332 = vmatprep.subr.mxu0 0.0
    %1333 = vmatpush1.msra.mxu0 0.0
    %1334 = vmatprep.subr.mxu0 0.0
    %1335 = vmatpush1.msra.mxu0 0.0
    %1336 = vmatprep.subr.mxu0 0.0
    %1337 = vmatpush1.msra.mxu0 0.0
    %1338 = vmatprep.subr.mxu0 0.0
    %1339 = vmatpush1.msra.mxu0 0.0
    %1340 = vmatprep.subr.mxu0 0.0
    %1341 = vmatpush1.msra.mxu0 0.0
    %1342 = vmatprep.subr.mxu0 0.0
    %1343 = vmatpush1.msra.mxu0 0.0
    %1344 = vmatprep.subr.mxu0 0.0
    %1345 = vmatpush1.msra.mxu0 0.0
    %1346 = vmatprep.subr.mxu0 0.0
    %1347 = vmatpush1.msra.mxu0 0.0
    %1348 = vmatprep.subr.mxu0 0.0
    %1349 = vmatpush1.msra.mxu0 0.0
    %1350 = vmatprep.subr.mxu0 0.0
    %1351 = vmatpush1.msra.mxu0 0.0
    %1352 = vmatprep.subr.mxu0 0.0
    %1353 = vmatpush1.msra.mxu0 0.0
    %1354 = vmatprep.subr.mxu0 0.0
    %1355 = vmatpush1.msra.mxu0 0.0
    %1356 = vmatprep.subr.mxu0 0.0
    %1357 = vmatpush1.msra.mxu0 0.0
    %1358 = vmatprep.mubr.f32.mxu0 0.0
    %1359 = vmatmul.mubr.f32.gmra.mrb[0].mxu0 %v1196
    %v1360 = vpop.f32.mrb[0].mxu0
    %v1361 = vadd.f32 0.0, %v1360
    %v1362 = vpop.f32.mrb[0].mxu0
    %1363 = vdwg.mxu0
    %v1364 = vadd.f32 %v1293, %v1361
    %v1365 = vxor.u32 %v1364, 2147483648
    %v1366 = vmul.f32 %v1365, 1.442695
    %v1367 = vpow.pop %v1366
    %v1368 = vadd.f32 %v1367, 1.0
    %v1369 = vrcp.pop %v1368
    %v1370 = vmul.f32 1.0, %v1369
    %v1371 = vtanh.pop %v1364
    %v1372 = vmul.f32 %v1370, %v1111
    %1374 = vrot.lane.b32.xlu0 %v1371, 64
    %v1375 = vpop.permute.xlu0 %1374
    %v1377 = vmul.f32 %v1370, %v1375
    %1379 = vrot.lane.b32.xlu0 %v1377, 32
    %v1380 = vpop.permute.xlu0 %1379
    %v1382 = vadd.f32 %v1372, %v1380
    %v1383 = vtanh.pop %v1382
    %1385 = vrot.lane.b32.xlu0 %v1383, 64
    %v1386 = vpop.permute.xlu0 %1385
    %v1388 = vmul.f32 %v1370, %v1386
    %1390 = vrot.lane.b32.xlu0 %v1292, 32
    %v1391 = vpop.permute.xlu0 %1390
    %v1392 = vsel %vm143, %v1391, 0
    %1394 = vmatprep.subr.mxu0 0.0
    %1395 = vmatpush1.msra.mxu0 %v114
    %1396 = vmatprep.subr.mxu0 0.0
    %1397 = vmatpush1.msra.mxu0 %v115
    %1398 = vmatprep.subr.mxu0 0.0
    %1399 = vmatpush1.msra.mxu0 %v116
    %1400 = vmatprep.subr.mxu0 0.0
    %1401 = vmatpush1.msra.mxu0 %v117
    %1402 = vmatprep.subr.mxu0 0.0
    %1403 = vmatpush1.msra.mxu0 0.0
    %1404 = vmatprep.subr.mxu0 0.0
    %1405 = vmatpush1.msra.mxu0 0.0
    %1406 = vmatprep.subr.mxu0 0.0
    %1407 = vmatpush1.msra.mxu0 0.0
    %1408 = vmatprep.subr.mxu0 0.0
    %1409 = vmatpush1.msra.mxu0 0.0
    %1410 = vmatprep.subr.mxu0 0.0
    %1411 = vmatpush1.msra.mxu0 0.0
    %1412 = vmatprep.subr.mxu0 0.0
    %1413 = vmatpush1.msra.mxu0 0.0
    %1414 = vmatprep.subr.mxu0 0.0
    %1415 = vmatpush1.msra.mxu0 0.0
    %1416 = vmatprep.subr.mxu0 0.0
    %1417 = vmatpush1.msra.mxu0 0.0
    %1418 = vmatprep.subr.mxu0 0.0
    %1419 = vmatpush1.msra.mxu0 0.0
    %1420 = vmatprep.subr.mxu0 0.0
    %1421 = vmatpush1.msra.mxu0 0.0
    %1422 = vmatprep.subr.mxu0 0.0
    %1423 = vmatpush1.msra.mxu0 0.0
    %1424 = vmatprep.subr.mxu0 0.0
    %1425 = vmatpush1.msra.mxu0 0.0
    %1426 = vmatprep.subr.mxu0 0.0
    %1427 = vmatpush1.msra.mxu0 0.0
    %1428 = vmatprep.subr.mxu0 0.0
    %1429 = vmatpush1.msra.mxu0 0.0
    %1430 = vmatprep.subr.mxu0 0.0
    %1431 = vmatpush1.msra.mxu0 0.0
    %1432 = vmatprep.subr.mxu0 0.0
    %1433 = vmatpush1.msra.mxu0 0.0
    %1434 = vmatprep.subr.mxu0 0.0
    %1435 = vmatpush1.msra.mxu0 0.0
    %1436 = vmatprep.subr.mxu0 0.0
    %1437 = vmatpush1.msra.mxu0 0.0
    %1438 = vmatprep.subr.mxu0 0.0
    %1439 = vmatpush1.msra.mxu0 0.0
    %1440 = vmatprep.subr.mxu0 0.0
    %1441 = vmatpush1.msra.mxu0 0.0
    %1442 = vmatprep.subr.mxu0 0.0
    %1443 = vmatpush1.msra.mxu0 0.0
    %1444 = vmatprep.subr.mxu0 0.0
    %1445 = vmatpush1.msra.mxu0 0.0
    %1446 = vmatprep.subr.mxu0 0.0
    %1447 = vmatpush1.msra.mxu0 0.0
    %1448 = vmatprep.subr.mxu0 0.0
    %1449 = vmatpush1.msra.mxu0 0.0
    %1450 = vmatprep.subr.mxu0 0.0
    %1451 = vmatpush1.msra.mxu0 0.0
    %1452 = vmatprep.subr.mxu0 0.0
    %1453 = vmatpush1.msra.mxu0 0.0
    %1454 = vmatprep.subr.mxu0 0.0
    %1455 = vmatpush1.msra.mxu0 0.0
    %1456 = vmatprep.subr.mxu0 0.0
    %1457 = vmatpush1.msra.mxu0 0.0
    %1458 = vmatprep.mubr.f32.mxu0 0.0
    %1459 = vmatmul.mubr.f32.gmra.mrb[0].mxu0 %v1392
    %v1460 = vpop.f32.mrb[0].mxu0
    %v1461 = vadd.f32 0.0, %v1460
    %v1462 = vpop.f32.mrb[0].mxu0
    %1463 = vdwg.mxu0
    %1465 = vrot.lane.b32.xlu0 %v1388, 32
    %v1466 = vpop.permute.xlu0 %1465
    %v1467 = vsel %vm143, %v1466, 0
    %1469 = vmatprep.subr.mxu0 0.0
    %1470 = vmatpush1.msra.mxu0 %v110
    %1471 = vmatprep.subr.mxu0 0.0
    %1472 = vmatpush1.msra.mxu0 %v111
    %1473 = vmatprep.subr.mxu0 0.0
    %1474 = vmatpush1.msra.mxu0 %v112
    %1475 = vmatprep.subr.mxu0 0.0
    %1476 = vmatpush1.msra.mxu0 %v113
    %1477 = vmatprep.subr.mxu0 0.0
    %1478 = vmatpush1.msra.mxu0 0.0
    %1479 = vmatprep.subr.mxu0 0.0
    %1480 = vmatpush1.msra.mxu0 0.0
    %1481 = vmatprep.subr.mxu0 0.0
    %1482 = vmatpush1.msra.mxu0 0.0
    %1483 = vmatprep.subr.mxu0 0.0
    %1484 = vmatpush1.msra.mxu0 0.0
    %1485 = vmatprep.subr.mxu0 0.0
    %1486 = vmatpush1.msra.mxu0 0.0
    %1487 = vmatprep.subr.mxu0 0.0
    %1488 = vmatpush1.msra.mxu0 0.0
    %1489 = vmatprep.subr.mxu0 0.0
    %1490 = vmatpush1.msra.mxu0 0.0
    %1491 = vmatprep.subr.mxu0 0.0
    %1492 = vmatpush1.msra.mxu0 0.0
    %1493 = vmatprep.subr.mxu0 0.0
    %1494 = vmatpush1.msra.mxu0 0.0
    %1495 = vmatprep.subr.mxu0 0.0
    %1496 = vmatpush1.msra.mxu0 0.0
    %1497 = vmatprep.subr.mxu0 0.0
    %1498 = vmatpush1.msra.mxu0 0.0
    %1499 = vmatprep.subr.mxu0 0.0
    %1500 = vmatpush1.msra.mxu0 0.0
    %1501 = vmatprep.subr.mxu0 0.0
    %1502 = vmatpush1.msra.mxu0 0.0
    %1503 = vmatprep.subr.mxu0 0.0
    %1504 = vmatpush1.msra.mxu0 0.0
    %1505 = vmatprep.subr.mxu0 0.0
    %1506 = vmatpush1.msra.mxu0 0.0
    %1507 = vmatprep.subr.mxu0 0.0
    %1508 = vmatpush1.msra.mxu0 0.0
    %1509 = vmatprep.subr.mxu0 0.0
    %1510 = vmatpush1.msra.mxu0 0.0
    %1511 = vmatprep.subr.mxu0 0.0
    %1512 = vmatpush1.msra.mxu0 0.0
    %1513 = vmatprep.subr.mxu0 0.0
    %1514 = vmatpush1.msra.mxu0 0.0
    %1515 = vmatprep.subr.mxu0 0.0
    %1516 = vmatpush1.msra.mxu0 0.0
    %1517 = vmatprep.subr.mxu0 0.0
    %1518 = vmatpush1.msra.mxu0 0.0
    %1519 = vmatprep.subr.mxu0 0.0
    %1520 = vmatpush1.msra.mxu0 0.0
    %1521 = vmatprep.subr.mxu0 0.0
    %1522 = vmatpush1.msra.mxu0 0.0
    %1523 = vmatprep.subr.mxu0 0.0
    %1524 = vmatpush1.msra.mxu0 0.0
    %1525 = vmatprep.subr.mxu0 0.0
    %1526 = vmatpush1.msra.mxu0 0.0
    %1527 = vmatprep.subr.mxu0 0.0
    %1528 = vmatpush1.msra.mxu0 0.0
    %1529 = vmatprep.subr.mxu0 0.0
    %1530 = vmatpush1.msra.mxu0 0.0
    %1531 = vmatprep.subr.mxu0 0.0
    %1532 = vmatpush1.msra.mxu0 0.0
    %1533 = vmatprep.mubr.f32.mxu0 0.0
    %1534 = vmatmul.mubr.f32.gmra.mrb[0].mxu0 %v1467
    %v1535 = vpop.f32.mrb[0].mxu0
    %v1536 = vadd.f32 %v1461, %v1535
    %v1537 = vpop.f32.mrb[0].mxu0
    %1538 = vdwg.mxu0
    %v1539 = vadd.f32 %v1536, %v118
    %v1540 = vxor.u32 %v1539, 2147483648
    %v1541 = vmul.f32 %v1540, 1.442695
    %v1542 = vpow.pop %v1541
    %v1543 = vadd.f32 %v1542, 1.0
    %v1544 = vrcp.pop %v1543
    %v1545 = vmul.f32 1.0, %v1544
    %v1546 = vtanh.pop %v1539
    %v1547 = vmul.f32 %v1545, %v1286
    %1549 = vrot.lane.b32.xlu0 %v1546, 64
    %v1550 = vpop.permute.xlu0 %1549
    %v1552 = vmul.f32 %v1545, %v1550
    %1554 = vrot.lane.b32.xlu0 %v1552, 32
    %v1555 = vpop.permute.xlu0 %1554
    %v1557 = vadd.f32 %v1547, %v1555
    %v1558 = vtanh.pop %v1557
    %1560 = vrot.lane.b32.xlu0 %v1558, 64
    %v1561 = vpop.permute.xlu0 %1560
    %v1563 = vmul.f32 %v1545, %v1561
    %v1564 = vld [vmem:[#allocation2 + $0x5] sm:$0x1]
    %1565 = vmatprep.subr.mxu0 0.0
    %1566 = vmatpush1.msra.mxu0 %v106
    %1567 = vmatprep.subr.mxu0 0.0
    %1568 = vmatpush1.msra.mxu0 %v107
    %1569 = vmatprep.subr.mxu0 0.0
    %1570 = vmatpush1.msra.mxu0 %v108
    %1571 = vmatprep.subr.mxu0 0.0
    %1572 = vmatpush1.msra.mxu0 %v109
    %1573 = vmatprep.subr.mxu0 0.0
    %1574 = vmatpush1.msra.mxu0 0.0
    %1575 = vmatprep.subr.mxu0 0.0
    %1576 = vmatpush1.msra.mxu0 0.0
    %1577 = vmatprep.subr.mxu0 0.0
    %1578 = vmatpush1.msra.mxu0 0.0
    %1579 = vmatprep.subr.mxu0 0.0
    %1580 = vmatpush1.msra.mxu0 0.0
    %1581 = vmatprep.subr.mxu0 0.0
    %1582 = vmatpush1.msra.mxu0 0.0
    %1583 = vmatprep.subr.mxu0 0.0
    %1584 = vmatpush1.msra.mxu0 0.0
    %1585 = vmatprep.subr.mxu0 0.0
    %1586 = vmatpush1.msra.mxu0 0.0
    %1587 = vmatprep.subr.mxu0 0.0
    %1588 = vmatpush1.msra.mxu0 0.0
    %1589 = vmatprep.subr.mxu0 0.0
    %1590 = vmatpush1.msra.mxu0 0.0
    %1591 = vmatprep.subr.mxu0 0.0
    %1592 = vmatpush1.msra.mxu0 0.0
    %1593 = vmatprep.subr.mxu0 0.0
    %1594 = vmatpush1.msra.mxu0 0.0
    %1595 = vmatprep.subr.mxu0 0.0
    %1596 = vmatpush1.msra.mxu0 0.0
    %1597 = vmatprep.subr.mxu0 0.0
    %1598 = vmatpush1.msra.mxu0 0.0
    %1599 = vmatprep.subr.mxu0 0.0
    %1600 = vmatpush1.msra.mxu0 0.0
    %1601 = vmatprep.subr.mxu0 0.0
    %1602 = vmatpush1.msra.mxu0 0.0
    %1603 = vmatprep.subr.mxu0 0.0
    %1604 = vmatpush1.msra.mxu0 0.0
    %1605 = vmatprep.subr.mxu0 0.0
    %1606 = vmatpush1.msra.mxu0 0.0
    %1607 = vmatprep.subr.mxu0 0.0
    %1608 = vmatpush1.msra.mxu0 0.0
    %1609 = vmatprep.subr.mxu0 0.0
    %1610 = vmatpush1.msra.mxu0 0.0
    %1611 = vmatprep.subr.mxu0 0.0
    %1612 = vmatpush1.msra.mxu0 0.0
    %1613 = vmatprep.subr.mxu0 0.0
    %1614 = vmatpush1.msra.mxu0 0.0
    %1615 = vmatprep.subr.mxu0 0.0
    %1616 = vmatpush1.msra.mxu0 0.0
    %1617 = vmatprep.subr.mxu0 0.0
    %1618 = vmatpush1.msra.mxu0 0.0
    %1619 = vmatprep.subr.mxu0 0.0
    %1620 = vmatpush1.msra.mxu0 0.0
    %1621 = vmatprep.subr.mxu0 0.0
    %1622 = vmatpush1.msra.mxu0 0.0
    %1623 = vmatprep.subr.mxu0 0.0
    %1624 = vmatpush1.msra.mxu0 0.0
    %1625 = vmatprep.subr.mxu0 0.0
    %1626 = vmatpush1.msra.mxu0 0.0
    %1627 = vmatprep.subr.mxu0 0.0
    %1628 = vmatpush1.msra.mxu0 0.0
    %1629 = vmatprep.mubr.f32.mxu0 0.0
    %1630 = vmatmul.mubr.f32.gmra.mrb[0].mxu0 %v1467
    %v1631 = vpop.f32.mrb[0].mxu0
    %v1632 = vadd.f32 0.0, %v1631
    %v1633 = vpop.f32.mrb[0].mxu0
    %1634 = vdwg.mxu0
    %v1635 = vadd.f32 %v1564, %v1632
    %v1636 = vxor.u32 %v1635, 2147483648
    %v1637 = vmul.f32 %v1636, 1.442695
    %v1638 = vpow.pop %v1637
    %v1639 = vadd.f32 %v1638, 1.0
    %v1640 = vrcp.pop %v1639
    %v1641 = vmul.f32 1.0, %v1640
    %v1642 = vtanh.pop %v1635
    %v1643 = vmul.f32 %v1641, %v1382
    %1645 = vrot.lane.b32.xlu0 %v1642, 64
    %v1646 = vpop.permute.xlu0 %1645
    %v1648 = vmul.f32 %v1641, %v1646
    %1650 = vrot.lane.b32.xlu0 %v1648, 32
    %v1651 = vpop.permute.xlu0 %1650
    %v1653 = vadd.f32 %v1643, %v1651
    %v1654 = vtanh.pop %v1653
    %1656 = vrot.lane.b32.xlu0 %v1654, 64
    %v1657 = vpop.permute.xlu0 %1656
    %v1659 = vmul.f32 %v1641, %v1657
    %1661 = vrot.lane.b32.xlu0 %v1563, 32
    %v1662 = vpop.permute.xlu0 %1661
    %v1663 = vsel %vm143, %v1662, 0
    %1665 = vmatprep.subr.mxu0 0.0
    %1666 = vmatpush1.msra.mxu0 %v114
    %1667 = vmatprep.subr.mxu0 0.0
    %1668 = vmatpush1.msra.mxu0 %v115
    %1669 = vmatprep.subr.mxu0 0.0
    %1670 = vmatpush1.msra.mxu0 %v116
    %1671 = vmatprep.subr.mxu0 0.0
    %1672 = vmatpush1.msra.mxu0 %v117
    %1673 = vmatprep.subr.mxu0 0.0
    %1674 = vmatpush1.msra.mxu0 0.0
    %1675 = vmatprep.subr.mxu0 0.0
    %1676 = vmatpush1.msra.mxu0 0.0
    %1677 = vmatprep.subr.mxu0 0.0
    %1678 = vmatpush1.msra.mxu0 0.0
    %1679 = vmatprep.subr.mxu0 0.0
    %1680 = vmatpush1.msra.mxu0 0.0
    %1681 = vmatprep.subr.mxu0 0.0
    %1682 = vmatpush1.msra.mxu0 0.0
    %1683 = vmatprep.subr.mxu0 0.0
    %1684 = vmatpush1.msra.mxu0 0.0
    %1685 = vmatprep.subr.mxu0 0.0
    %1686 = vmatpush1.msra.mxu0 0.0
    %1687 = vmatprep.subr.mxu0 0.0
    %1688 = vmatpush1.msra.mxu0 0.0
    %1689 = vmatprep.subr.mxu0 0.0
    %1690 = vmatpush1.msra.mxu0 0.0
    %1691 = vmatprep.subr.mxu0 0.0
    %1692 = vmatpush1.msra.mxu0 0.0
    %1693 = vmatprep.subr.mxu0 0.0
    %1694 = vmatpush1.msra.mxu0 0.0
    %1695 = vmatprep.subr.mxu0 0.0
    %1696 = vmatpush1.msra.mxu0 0.0
    %1697 = vmatprep.subr.mxu0 0.0
    %1698 = vmatpush1.msra.mxu0 0.0
    %1699 = vmatprep.subr.mxu0 0.0
    %1700 = vmatpush1.msra.mxu0 0.0
    %1701 = vmatprep.subr.mxu0 0.0
    %1702 = vmatpush1.msra.mxu0 0.0
    %1703 = vmatprep.subr.mxu0 0.0
    %1704 = vmatpush1.msra.mxu0 0.0
    %1705 = vmatprep.subr.mxu0 0.0
    %1706 = vmatpush1.msra.mxu0 0.0
    %1707 = vmatprep.subr.mxu0 0.0
    %1708 = vmatpush1.msra.mxu0 0.0
    %1709 = vmatprep.subr.mxu0 0.0
    %1710 = vmatpush1.msra.mxu0 0.0
    %1711 = vmatprep.subr.mxu0 0.0
    %1712 = vmatpush1.msra.mxu0 0.0
    %1713 = vmatprep.subr.mxu0 0.0
    %1714 = vmatpush1.msra.mxu0 0.0
    %1715 = vmatprep.subr.mxu0 0.0
    %1716 = vmatpush1.msra.mxu0 0.0
    %1717 = vmatprep.subr.mxu0 0.0
    %1718 = vmatpush1.msra.mxu0 0.0
    %1719 = vmatprep.subr.mxu0 0.0
    %1720 = vmatpush1.msra.mxu0 0.0
    %1721 = vmatprep.subr.mxu0 0.0
    %1722 = vmatpush1.msra.mxu0 0.0
    %1723 = vmatprep.subr.mxu0 0.0
    %1724 = vmatpush1.msra.mxu0 0.0
    %1725 = vmatprep.subr.mxu0 0.0
    %1726 = vmatpush1.msra.mxu0 0.0
    %1727 = vmatprep.subr.mxu0 0.0
    %1728 = vmatpush1.msra.mxu0 0.0
    %1729 = vmatprep.mubr.f32.mxu0 0.0
    %1730 = vmatmul.mubr.f32.gmra.mrb[0].mxu0 %v1663
    %v1731 = vpop.f32.mrb[0].mxu0
    %v1732 = vadd.f32 0.0, %v1731
    %v1733 = vpop.f32.mrb[0].mxu0
    %1734 = vdwg.mxu0
    %1736 = vrot.lane.b32.xlu0 %v1659, 32
    %v1737 = vpop.permute.xlu0 %1736
    %v1738 = vsel %vm143, %v1737, 0
    %1740 = vmatprep.subr.mxu0 0.0
    %1741 = vmatpush1.msra.mxu0 %v110
    %1742 = vmatprep.subr.mxu0 0.0
    %1743 = vmatpush1.msra.mxu0 %v111
    %1744 = vmatprep.subr.mxu0 0.0
    %1745 = vmatpush1.msra.mxu0 %v112
    %1746 = vmatprep.subr.mxu0 0.0
    %1747 = vmatpush1.msra.mxu0 %v113
    %1748 = vmatprep.subr.mxu0 0.0
    %1749 = vmatpush1.msra.mxu0 0.0
    %1750 = vmatprep.subr.mxu0 0.0
    %1751 = vmatpush1.msra.mxu0 0.0
    %1752 = vmatprep.subr.mxu0 0.0
    %1753 = vmatpush1.msra.mxu0 0.0
    %1754 = vmatprep.subr.mxu0 0.0
    %1755 = vmatpush1.msra.mxu0 0.0
    %1756 = vmatprep.subr.mxu0 0.0
    %1757 = vmatpush1.msra.mxu0 0.0
    %1758 = vmatprep.subr.mxu0 0.0
    %1759 = vmatpush1.msra.mxu0 0.0
    %1760 = vmatprep.subr.mxu0 0.0
    %1761 = vmatpush1.msra.mxu0 0.0
    %1762 = vmatprep.subr.mxu0 0.0
    %1763 = vmatpush1.msra.mxu0 0.0
    %1764 = vmatprep.subr.mxu0 0.0
    %1765 = vmatpush1.msra.mxu0 0.0
    %1766 = vmatprep.subr.mxu0 0.0
    %1767 = vmatpush1.msra.mxu0 0.0
    %1768 = vmatprep.subr.mxu0 0.0
    %1769 = vmatpush1.msra.mxu0 0.0
    %1770 = vmatprep.subr.mxu0 0.0
    %1771 = vmatpush1.msra.mxu0 0.0
    %1772 = vmatprep.subr.mxu0 0.0
    %1773 = vmatpush1.msra.mxu0 0.0
    %1774 = vmatprep.subr.mxu0 0.0
    %1775 = vmatpush1.msra.mxu0 0.0
    %1776 = vmatprep.subr.mxu0 0.0
    %1777 = vmatpush1.msra.mxu0 0.0
    %1778 = vmatprep.subr.mxu0 0.0
    %1779 = vmatpush1.msra.mxu0 0.0
    %1780 = vmatprep.subr.mxu0 0.0
    %1781 = vmatpush1.msra.mxu0 0.0
    %1782 = vmatprep.subr.mxu0 0.0
    %1783 = vmatpush1.msra.mxu0 0.0
    %1784 = vmatprep.subr.mxu0 0.0
    %1785 = vmatpush1.msra.mxu0 0.0
    %1786 = vmatprep.subr.mxu0 0.0
    %1787 = vmatpush1.msra.mxu0 0.0
    %1788 = vmatprep.subr.mxu0 0.0
    %1789 = vmatpush1.msra.mxu0 0.0
    %1790 = vmatprep.subr.mxu0 0.0
    %1791 = vmatpush1.msra.mxu0 0.0
    %1792 = vmatprep.subr.mxu0 0.0
    %1793 = vmatpush1.msra.mxu0 0.0
    %1794 = vmatprep.subr.mxu0 0.0
    %1795 = vmatpush1.msra.mxu0 0.0
    %1796 = vmatprep.subr.mxu0 0.0
    %1797 = vmatpush1.msra.mxu0 0.0
    %1798 = vmatprep.subr.mxu0 0.0
    %1799 = vmatpush1.msra.mxu0 0.0
    %1800 = vmatprep.subr.mxu0 0.0
    %1801 = vmatpush1.msra.mxu0 0.0
    %1802 = vmatprep.subr.mxu0 0.0
    %1803 = vmatpush1.msra.mxu0 0.0
    %1804 = vmatprep.mubr.f32.mxu0 0.0
    %1805 = vmatmul.mubr.f32.gmra.mrb[0].mxu0 %v1738
    %v1806 = vpop.f32.mrb[0].mxu0
    %v1807 = vadd.f32 %v1732, %v1806
    %v1808 = vpop.f32.mrb[0].mxu0
    %1809 = vdwg.mxu0
    %v1810 = vadd.f32 %v1807, %v118
    %v1811 = vxor.u32 %v1810, 2147483648
    %v1812 = vmul.f32 %v1811, 1.442695
    %v1813 = vpow.pop %v1812
    %v1814 = vadd.f32 %v1813, 1.0
    %v1815 = vrcp.pop %v1814
    %v1816 = vmul.f32 1.0, %v1815
    %v1817 = vtanh.pop %v1810
    %v1818 = vmul.f32 %v1816, %v1557
    %1820 = vrot.lane.b32.xlu0 %v1817, 64
    %v1821 = vpop.permute.xlu0 %1820
    %v1823 = vmul.f32 %v1816, %v1821
    %1825 = vrot.lane.b32.xlu0 %v1823, 32
    %v1826 = vpop.permute.xlu0 %1825
    %v1828 = vadd.f32 %v1818, %v1826
    %v1829 = vtanh.pop %v1828
    %1831 = vrot.lane.b32.xlu0 %v1829, 64
    %v1832 = vpop.permute.xlu0 %1831
    %v1834 = vmul.f32 %v1816, %v1832
    %v1835 = vld [vmem:[#allocation2 + $0x6] sm:$0x1]
    %1836 = vmatprep.subr.mxu0 0.0
    %1837 = vmatpush1.msra.mxu0 %v106
    %1838 = vmatprep.subr.mxu0 0.0
    %1839 = vmatpush1.msra.mxu0 %v107
    %1840 = vmatprep.subr.mxu0 0.0
    %1841 = vmatpush1.msra.mxu0 %v108
    %1842 = vmatprep.subr.mxu0 0.0
    %1843 = vmatpush1.msra.mxu0 %v109
    %1844 = vmatprep.subr.mxu0 0.0
    %1845 = vmatpush1.msra.mxu0 0.0
    %1846 = vmatprep.subr.mxu0 0.0
    %1847 = vmatpush1.msra.mxu0 0.0
    %1848 = vmatprep.subr.mxu0 0.0
    %1849 = vmatpush1.msra.mxu0 0.0
    %1850 = vmatprep.subr.mxu0 0.0
    %1851 = vmatpush1.msra.mxu0 0.0
    %1852 = vmatprep.subr.mxu0 0.0
    %1853 = vmatpush1.msra.mxu0 0.0
    %1854 = vmatprep.subr.mxu0 0.0
    %1855 = vmatpush1.msra.mxu0 0.0
    %1856 = vmatprep.subr.mxu0 0.0
    %1857 = vmatpush1.msra.mxu0 0.0
    %1858 = vmatprep.subr.mxu0 0.0
    %1859 = vmatpush1.msra.mxu0 0.0
    %1860 = vmatprep.subr.mxu0 0.0
    %1861 = vmatpush1.msra.mxu0 0.0
    %1862 = vmatprep.subr.mxu0 0.0
    %1863 = vmatpush1.msra.mxu0 0.0
    %1864 = vmatprep.subr.mxu0 0.0
    %1865 = vmatpush1.msra.mxu0 0.0
    %1866 = vmatprep.subr.mxu0 0.0
    %1867 = vmatpush1.msra.mxu0 0.0
    %1868 = vmatprep.subr.mxu0 0.0
    %1869 = vmatpush1.msra.mxu0 0.0
    %1870 = vmatprep.subr.mxu0 0.0
    %1871 = vmatpush1.msra.mxu0 0.0
    %1872 = vmatprep.subr.mxu0 0.0
    %1873 = vmatpush1.msra.mxu0 0.0
    %1874 = vmatprep.subr.mxu0 0.0
    %1875 = vmatpush1.msra.mxu0 0.0
    %1876 = vmatprep.subr.mxu0 0.0
    %1877 = vmatpush1.msra.mxu0 0.0
    %1878 = vmatprep.subr.mxu0 0.0
    %1879 = vmatpush1.msra.mxu0 0.0
    %1880 = vmatprep.subr.mxu0 0.0
    %1881 = vmatpush1.msra.mxu0 0.0
    %1882 = vmatprep.subr.mxu0 0.0
    %1883 = vmatpush1.msra.mxu0 0.0
    %1884 = vmatprep.subr.mxu0 0.0
    %1885 = vmatpush1.msra.mxu0 0.0
    %1886 = vmatprep.subr.mxu0 0.0
    %1887 = vmatpush1.msra.mxu0 0.0
    %1888 = vmatprep.subr.mxu0 0.0
    %1889 = vmatpush1.msra.mxu0 0.0
    %1890 = vmatprep.subr.mxu0 0.0
    %1891 = vmatpush1.msra.mxu0 0.0
    %1892 = vmatprep.subr.mxu0 0.0
    %1893 = vmatpush1.msra.mxu0 0.0
    %1894 = vmatprep.subr.mxu0 0.0
    %1895 = vmatpush1.msra.mxu0 0.0
    %1896 = vmatprep.subr.mxu0 0.0
    %1897 = vmatpush1.msra.mxu0 0.0
    %1898 = vmatprep.subr.mxu0 0.0
    %1899 = vmatpush1.msra.mxu0 0.0
    %1900 = vmatprep.mubr.f32.mxu0 0.0
    %1901 = vmatmul.mubr.f32.gmra.mrb[0].mxu0 %v1738
    %v1902 = vpop.f32.mrb[0].mxu0
    %v1903 = vadd.f32 0.0, %v1902
    %v1904 = vpop.f32.mrb[0].mxu0
    %1905 = vdwg.mxu0
    %v1906 = vadd.f32 %v1835, %v1903
    %v1907 = vxor.u32 %v1906, 2147483648
    %v1908 = vmul.f32 %v1907, 1.442695
    %v1909 = vpow.pop %v1908
    %v1910 = vadd.f32 %v1909, 1.0
    %v1911 = vrcp.pop %v1910
    %v1912 = vmul.f32 1.0, %v1911
    %v1913 = vtanh.pop %v1906
    %v1914 = vmul.f32 %v1912, %v1653
    %1916 = vrot.lane.b32.xlu0 %v1913, 64
    %v1917 = vpop.permute.xlu0 %1916
    %v1919 = vmul.f32 %v1912, %v1917
    %1921 = vrot.lane.b32.xlu0 %v1919, 32
    %v1922 = vpop.permute.xlu0 %1921
    %v1924 = vadd.f32 %v1914, %v1922
    %v1925 = vtanh.pop %v1924
    %1927 = vrot.lane.b32.xlu0 %v1925, 64
    %v1928 = vpop.permute.xlu0 %1927
    %v1930 = vmul.f32 %v1912, %v1928
    %1932 = vrot.lane.b32.xlu0 %v1834, 32
    %v1933 = vpop.permute.xlu0 %1932
    %v1934 = vsel %vm143, %v1933, 0
    %1936 = vmatprep.subr.mxu0 0.0
    %1937 = vmatpush1.msra.mxu0 %v114
    %1938 = vmatprep.subr.mxu0 0.0
    %1939 = vmatpush1.msra.mxu0 %v115
    %1940 = vmatprep.subr.mxu0 0.0
    %1941 = vmatpush1.msra.mxu0 %v116
    %1942 = vmatprep.subr.mxu0 0.0
    %1943 = vmatpush1.msra.mxu0 %v117
    %1944 = vmatprep.subr.mxu0 0.0
    %1945 = vmatpush1.msra.mxu0 0.0
    %1946 = vmatprep.subr.mxu0 0.0
    %1947 = vmatpush1.msra.mxu0 0.0
    %1948 = vmatprep.subr.mxu0 0.0
    %1949 = vmatpush1.msra.mxu0 0.0
    %1950 = vmatprep.subr.mxu0 0.0
    %1951 = vmatpush1.msra.mxu0 0.0
    %1952 = vmatprep.subr.mxu0 0.0
    %1953 = vmatpush1.msra.mxu0 0.0
    %1954 = vmatprep.subr.mxu0 0.0
    %1955 = vmatpush1.msra.mxu0 0.0
    %1956 = vmatprep.subr.mxu0 0.0
    %1957 = vmatpush1.msra.mxu0 0.0
    %1958 = vmatprep.subr.mxu0 0.0
    %1959 = vmatpush1.msra.mxu0 0.0
    %1960 = vmatprep.subr.mxu0 0.0
    %1961 = vmatpush1.msra.mxu0 0.0
    %1962 = vmatprep.subr.mxu0 0.0
    %1963 = vmatpush1.msra.mxu0 0.0
    %1964 = vmatprep.subr.mxu0 0.0
    %1965 = vmatpush1.msra.mxu0 0.0
    %1966 = vmatprep.subr.mxu0 0.0
    %1967 = vmatpush1.msra.mxu0 0.0
    %1968 = vmatprep.subr.mxu0 0.0
    %1969 = vmatpush1.msra.mxu0 0.0
    %1970 = vmatprep.subr.mxu0 0.0
    %1971 = vmatpush1.msra.mxu0 0.0
    %1972 = vmatprep.subr.mxu0 0.0
    %1973 = vmatpush1.msra.mxu0 0.0
    %1974 = vmatprep.subr.mxu0 0.0
    %1975 = vmatpush1.msra.mxu0 0.0
    %1976 = vmatprep.subr.mxu0 0.0
    %1977 = vmatpush1.msra.mxu0 0.0
    %1978 = vmatprep.subr.mxu0 0.0
    %1979 = vmatpush1.msra.mxu0 0.0
    %1980 = vmatprep.subr.mxu0 0.0
    %1981 = vmatpush1.msra.mxu0 0.0
    %1982 = vmatprep.subr.mxu0 0.0
    %1983 = vmatpush1.msra.mxu0 0.0
    %1984 = vmatprep.subr.mxu0 0.0
    %1985 = vmatpush1.msra.mxu0 0.0
    %1986 = vmatprep.subr.mxu0 0.0
    %1987 = vmatpush1.msra.mxu0 0.0
    %1988 = vmatprep.subr.mxu0 0.0
    %1989 = vmatpush1.msra.mxu0 0.0
    %1990 = vmatprep.subr.mxu0 0.0
    %1991 = vmatpush1.msra.mxu0 0.0
    %1992 = vmatprep.subr.mxu0 0.0
    %1993 = vmatpush1.msra.mxu0 0.0
    %1994 = vmatprep.subr.mxu0 0.0
    %1995 = vmatpush1.msra.mxu0 0.0
    %1996 = vmatprep.subr.mxu0 0.0
    %1997 = vmatpush1.msra.mxu0 0.0
    %1998 = vmatprep.subr.mxu0 0.0
    %1999 = vmatpush1.msra.mxu0 0.0
    %2000 = vmatprep.mubr.f32.mxu0 0.0
    %2001 = vmatmul.mubr.f32.gmra.mrb[0].mxu0 %v1934
    %v2002 = vpop.f32.mrb[0].mxu0
    %v2003 = vadd.f32 0.0, %v2002
    %v2004 = vpop.f32.mrb[0].mxu0
    %2005 = vdwg.mxu0
    %2007 = vrot.lane.b32.xlu0 %v1930, 32
    %v2008 = vpop.permute.xlu0 %2007
    %v2009 = vsel %vm143, %v2008, 0
    %2011 = vmatprep.subr.mxu0 0.0
    %2012 = vmatpush1.msra.mxu0 %v110
    %2013 = vmatprep.subr.mxu0 0.0
    %2014 = vmatpush1.msra.mxu0 %v111
    %2015 = vmatprep.subr.mxu0 0.0
    %2016 = vmatpush1.msra.mxu0 %v112
    %2017 = vmatprep.subr.mxu0 0.0
    %2018 = vmatpush1.msra.mxu0 %v113
    %2019 = vmatprep.subr.mxu0 0.0
    %2020 = vmatpush1.msra.mxu0 0.0
    %2021 = vmatprep.subr.mxu0 0.0
    %2022 = vmatpush1.msra.mxu0 0.0
    %2023 = vmatprep.subr.mxu0 0.0
    %2024 = vmatpush1.msra.mxu0 0.0
    %2025 = vmatprep.subr.mxu0 0.0
    %2026 = vmatpush1.msra.mxu0 0.0
    %2027 = vmatprep.subr.mxu0 0.0
    %2028 = vmatpush1.msra.mxu0 0.0
    %2029 = vmatprep.subr.mxu0 0.0
    %2030 = vmatpush1.msra.mxu0 0.0
    %2031 = vmatprep.subr.mxu0 0.0
    %2032 = vmatpush1.msra.mxu0 0.0
    %2033 = vmatprep.subr.mxu0 0.0
    %2034 = vmatpush1.msra.mxu0 0.0
    %2035 = vmatprep.subr.mxu0 0.0
    %2036 = vmatpush1.msra.mxu0 0.0
    %2037 = vmatprep.subr.mxu0 0.0
    %2038 = vmatpush1.msra.mxu0 0.0
    %2039 = vmatprep.subr.mxu0 0.0
    %2040 = vmatpush1.msra.mxu0 0.0
    %2041 = vmatprep.subr.mxu0 0.0
    %2042 = vmatpush1.msra.mxu0 0.0
    %2043 = vmatprep.subr.mxu0 0.0
    %2044 = vmatpush1.msra.mxu0 0.0
    %2045 = vmatprep.subr.mxu0 0.0
    %2046 = vmatpush1.msra.mxu0 0.0
    %2047 = vmatprep.subr.mxu0 0.0
    %2048 = vmatpush1.msra.mxu0 0.0
    %2049 = vmatprep.subr.mxu0 0.0
    %2050 = vmatpush1.msra.mxu0 0.0
    %2051 = vmatprep.subr.mxu0 0.0
    %2052 = vmatpush1.msra.mxu0 0.0
    %2053 = vmatprep.subr.mxu0 0.0
    %2054 = vmatpush1.msra.mxu0 0.0
    %2055 = vmatprep.subr.mxu0 0.0
    %2056 = vmatpush1.msra.mxu0 0.0
    %2057 = vmatprep.subr.mxu0 0.0
    %2058 = vmatpush1.msra.mxu0 0.0
    %2059 = vmatprep.subr.mxu0 0.0
    %2060 = vmatpush1.msra.mxu0 0.0
    %2061 = vmatprep.subr.mxu0 0.0
    %2062 = vmatpush1.msra.mxu0 0.0
    %2063 = vmatprep.subr.mxu0 0.0
    %2064 = vmatpush1.msra.mxu0 0.0
    %2065 = vmatprep.subr.mxu0 0.0
    %2066 = vmatpush1.msra.mxu0 0.0
    %2067 = vmatprep.subr.mxu0 0.0
    %2068 = vmatpush1.msra.mxu0 0.0
    %2069 = vmatprep.subr.mxu0 0.0
    %2070 = vmatpush1.msra.mxu0 0.0
    %2071 = vmatprep.subr.mxu0 0.0
    %2072 = vmatpush1.msra.mxu0 0.0
    %2073 = vmatprep.subr.mxu0 0.0
    %2074 = vmatpush1.msra.mxu0 0.0
    %2075 = vmatprep.mubr.f32.mxu0 0.0
    %2076 = vmatmul.mubr.f32.gmra.mrb[0].mxu0 %v2009
    %v2077 = vpop.f32.mrb[0].mxu0
    %v2078 = vadd.f32 %v2003, %v2077
    %v2079 = vpop.f32.mrb[0].mxu0
    %2080 = vdwg.mxu0
    %v2081 = vadd.f32 %v2078, %v118
    %v2082 = vxor.u32 %v2081, 2147483648
    %v2083 = vmul.f32 %v2082, 1.442695
    %v2084 = vpow.pop %v2083
    %v2085 = vadd.f32 %v2084, 1.0
    %v2086 = vrcp.pop %v2085
    %v2087 = vmul.f32 1.0, %v2086
    %v2088 = vtanh.pop %v2081
    %v2089 = vmul.f32 %v2087, %v1828
    %2091 = vrot.lane.b32.xlu0 %v2088, 64
    %v2092 = vpop.permute.xlu0 %2091
    %v2094 = vmul.f32 %v2087, %v2092
    %2096 = vrot.lane.b32.xlu0 %v2094, 32
    %v2097 = vpop.permute.xlu0 %2096
    %v2099 = vadd.f32 %v2089, %v2097
    %v2100 = vtanh.pop %v2099
    %2102 = vrot.lane.b32.xlu0 %v2100, 64
    %v2103 = vpop.permute.xlu0 %2102
    %v2105 = vmul.f32 %v2087, %v2103
    %v2106 = vld [vmem:[#allocation2 + $0x7] sm:$0x1]
    %2107 = vmatprep.subr.mxu0 0.0
    %2108 = vmatpush1.msra.mxu0 %v106
    %2109 = vmatprep.subr.mxu0 0.0
    %2110 = vmatpush1.msra.mxu0 %v107
    %2111 = vmatprep.subr.mxu0 0.0
    %2112 = vmatpush1.msra.mxu0 %v108
    %2113 = vmatprep.subr.mxu0 0.0
    %2114 = vmatpush1.msra.mxu0 %v109
    %2115 = vmatprep.subr.mxu0 0.0
    %2116 = vmatpush1.msra.mxu0 0.0
    %2117 = vmatprep.subr.mxu0 0.0
    %2118 = vmatpush1.msra.mxu0 0.0
    %2119 = vmatprep.subr.mxu0 0.0
    %2120 = vmatpush1.msra.mxu0 0.0
    %2121 = vmatprep.subr.mxu0 0.0
    %2122 = vmatpush1.msra.mxu0 0.0
    %2123 = vmatprep.subr.mxu0 0.0
    %2124 = vmatpush1.msra.mxu0 0.0
    %2125 = vmatprep.subr.mxu0 0.0
    %2126 = vmatpush1.msra.mxu0 0.0
    %2127 = vmatprep.subr.mxu0 0.0
    %2128 = vmatpush1.msra.mxu0 0.0
    %2129 = vmatprep.subr.mxu0 0.0
    %2130 = vmatpush1.msra.mxu0 0.0
    %2131 = vmatprep.subr.mxu0 0.0
    %2132 = vmatpush1.msra.mxu0 0.0
    %2133 = vmatprep.subr.mxu0 0.0
    %2134 = vmatpush1.msra.mxu0 0.0
    %2135 = vmatprep.subr.mxu0 0.0
    %2136 = vmatpush1.msra.mxu0 0.0
    %2137 = vmatprep.subr.mxu0 0.0
    %2138 = vmatpush1.msra.mxu0 0.0
    %2139 = vmatprep.subr.mxu0 0.0
    %2140 = vmatpush1.msra.mxu0 0.0
    %2141 = vmatprep.subr.mxu0 0.0
    %2142 = vmatpush1.msra.mxu0 0.0
    %2143 = vmatprep.subr.mxu0 0.0
    %2144 = vmatpush1.msra.mxu0 0.0
    %2145 = vmatprep.subr.mxu0 0.0
    %2146 = vmatpush1.msra.mxu0 0.0
    %2147 = vmatprep.subr.mxu0 0.0
    %2148 = vmatpush1.msra.mxu0 0.0
    %2149 = vmatprep.subr.mxu0 0.0
    %2150 = vmatpush1.msra.mxu0 0.0
    %2151 = vmatprep.subr.mxu0 0.0
    %2152 = vmatpush1.msra.mxu0 0.0
    %2153 = vmatprep.subr.mxu0 0.0
    %2154 = vmatpush1.msra.mxu0 0.0
    %2155 = vmatprep.subr.mxu0 0.0
    %2156 = vmatpush1.msra.mxu0 0.0
    %2157 = vmatprep.subr.mxu0 0.0
    %2158 = vmatpush1.msra.mxu0 0.0
    %2159 = vmatprep.subr.mxu0 0.0
    %2160 = vmatpush1.msra.mxu0 0.0
    %2161 = vmatprep.subr.mxu0 0.0
    %2162 = vmatpush1.msra.mxu0 0.0
    %2163 = vmatprep.subr.mxu0 0.0
    %2164 = vmatpush1.msra.mxu0 0.0
    %2165 = vmatprep.subr.mxu0 0.0
    %2166 = vmatpush1.msra.mxu0 0.0
    %2167 = vmatprep.subr.mxu0 0.0
    %2168 = vmatpush1.msra.mxu0 0.0
    %2169 = vmatprep.subr.mxu0 0.0
    %2170 = vmatpush1.msra.mxu0 0.0
    %2171 = vmatprep.mubr.f32.mxu0 0.0
    %2172 = vmatmul.mubr.f32.gmra.mrb[0].mxu0 %v2009
    %v2173 = vpop.f32.mrb[0].mxu0
    %v2174 = vadd.f32 0.0, %v2173
    %v2175 = vpop.f32.mrb[0].mxu0
    %2176 = vdwg.mxu0
    %v2177 = vadd.f32 %v2106, %v2174
    %v2178 = vxor.u32 %v2177, 2147483648
    %v2179 = vmul.f32 %v2178, 1.442695
    %v2180 = vpow.pop %v2179
    %v2181 = vadd.f32 %v2180, 1.0
    %v2182 = vrcp.pop %v2181
    %v2183 = vmul.f32 1.0, %v2182
    %v2184 = vtanh.pop %v2177
    %v2185 = vmul.f32 %v2183, %v1924
    %2187 = vrot.lane.b32.xlu0 %v2184, 64
    %v2188 = vpop.permute.xlu0 %2187
    %v2190 = vmul.f32 %v2183, %v2188
    %2192 = vrot.lane.b32.xlu0 %v2190, 32
    %v2193 = vpop.permute.xlu0 %2192
    %v2195 = vadd.f32 %v2185, %v2193
    %v2196 = vtanh.pop %v2195
    %2198 = vrot.lane.b32.xlu0 %v2196, 64
    %v2199 = vpop.permute.xlu0 %2198
    %v2201 = vmul.f32 %v2183, %v2199
    %2203 = vrot.lane.b32.xlu0 %v2105, 32
    %v2204 = vpop.permute.xlu0 %2203
    %v2205 = vsel %vm143, %v2204, 0
    %2207 = vmatprep.subr.mxu0 0.0
    %2208 = vmatpush1.msra.mxu0 %v114
    %2209 = vmatprep.subr.mxu0 0.0
    %2210 = vmatpush1.msra.mxu0 %v115
    %2211 = vmatprep.subr.mxu0 0.0
    %2212 = vmatpush1.msra.mxu0 %v116
    %2213 = vmatprep.subr.mxu0 0.0
    %2214 = vmatpush1.msra.mxu0 %v117
    %2215 = vmatprep.subr.mxu0 0.0
    %2216 = vmatpush1.msra.mxu0 0.0
    %2217 = vmatprep.subr.mxu0 0.0
    %2218 = vmatpush1.msra.mxu0 0.0
    %2219 = vmatprep.subr.mxu0 0.0
    %2220 = vmatpush1.msra.mxu0 0.0
    %2221 = vmatprep.subr.mxu0 0.0
    %2222 = vmatpush1.msra.mxu0 0.0
    %2223 = vmatprep.subr.mxu0 0.0
    %2224 = vmatpush1.msra.mxu0 0.0
    %2225 = vmatprep.subr.mxu0 0.0
    %2226 = vmatpush1.msra.mxu0 0.0
    %2227 = vmatprep.subr.mxu0 0.0
    %2228 = vmatpush1.msra.mxu0 0.0
    %2229 = vmatprep.subr.mxu0 0.0
    %2230 = vmatpush1.msra.mxu0 0.0
    %2231 = vmatprep.subr.mxu0 0.0
    %2232 = vmatpush1.msra.mxu0 0.0
    %2233 = vmatprep.subr.mxu0 0.0
    %2234 = vmatpush1.msra.mxu0 0.0
    %2235 = vmatprep.subr.mxu0 0.0
    %2236 = vmatpush1.msra.mxu0 0.0
    %2237 = vmatprep.subr.mxu0 0.0
    %2238 = vmatpush1.msra.mxu0 0.0
    %2239 = vmatprep.subr.mxu0 0.0
    %2240 = vmatpush1.msra.mxu0 0.0
    %2241 = vmatprep.subr.mxu0 0.0
    %2242 = vmatpush1.msra.mxu0 0.0
    %2243 = vmatprep.subr.mxu0 0.0
    %2244 = vmatpush1.msra.mxu0 0.0
    %2245 = vmatprep.subr.mxu0 0.0
    %2246 = vmatpush1.msra.mxu0 0.0
    %2247 = vmatprep.subr.mxu0 0.0
    %2248 = vmatpush1.msra.mxu0 0.0
    %2249 = vmatprep.subr.mxu0 0.0
    %2250 = vmatpush1.msra.mxu0 0.0
    %2251 = vmatprep.subr.mxu0 0.0
    %2252 = vmatpush1.msra.mxu0 0.0
    %2253 = vmatprep.subr.mxu0 0.0
    %2254 = vmatpush1.msra.mxu0 0.0
    %2255 = vmatprep.subr.mxu0 0.0
    %2256 = vmatpush1.msra.mxu0 0.0
    %2257 = vmatprep.subr.mxu0 0.0
    %2258 = vmatpush1.msra.mxu0 0.0
    %2259 = vmatprep.subr.mxu0 0.0
    %2260 = vmatpush1.msra.mxu0 0.0
    %2261 = vmatprep.subr.mxu0 0.0
    %2262 = vmatpush1.msra.mxu0 0.0
    %2263 = vmatprep.subr.mxu0 0.0
    %2264 = vmatpush1.msra.mxu0 0.0
    %2265 = vmatprep.subr.mxu0 0.0
    %2266 = vmatpush1.msra.mxu0 0.0
    %2267 = vmatprep.subr.mxu0 0.0
    %2268 = vmatpush1.msra.mxu0 0.0
    %2269 = vmatprep.subr.mxu0 0.0
    %2270 = vmatpush1.msra.mxu0 0.0
    %2271 = vmatprep.mubr.f32.mxu0 0.0
    %2272 = vmatmul.mubr.f32.gmra.mrb[0].mxu0 %v2205
    %v2273 = vpop.f32.mrb[0].mxu0
    %v2274 = vadd.f32 0.0, %v2273
    %v2275 = vpop.f32.mrb[0].mxu0
    %2276 = vdwg.mxu0
    %2278 = vrot.lane.b32.xlu0 %v2201, 32
    %v2279 = vpop.permute.xlu0 %2278
    %v2280 = vsel %vm143, %v2279, 0
    %2282 = vmatprep.subr.mxu0 0.0
    %2283 = vmatpush1.msra.mxu0 %v110
    %2284 = vmatprep.subr.mxu0 0.0
    %2285 = vmatpush1.msra.mxu0 %v111
    %2286 = vmatprep.subr.mxu0 0.0
    %2287 = vmatpush1.msra.mxu0 %v112
    %2288 = vmatprep.subr.mxu0 0.0
    %2289 = vmatpush1.msra.mxu0 %v113
    %2290 = vmatprep.subr.mxu0 0.0
    %2291 = vmatpush1.msra.mxu0 0.0
    %2292 = vmatprep.subr.mxu0 0.0
    %2293 = vmatpush1.msra.mxu0 0.0
    %2294 = vmatprep.subr.mxu0 0.0
    %2295 = vmatpush1.msra.mxu0 0.0
    %2296 = vmatprep.subr.mxu0 0.0
    %2297 = vmatpush1.msra.mxu0 0.0
    %2298 = vmatprep.subr.mxu0 0.0
    %2299 = vmatpush1.msra.mxu0 0.0
    %2300 = vmatprep.subr.mxu0 0.0
    %2301 = vmatpush1.msra.mxu0 0.0
    %2302 = vmatprep.subr.mxu0 0.0
    %2303 = vmatpush1.msra.mxu0 0.0
    %2304 = vmatprep.subr.mxu0 0.0
    %2305 = vmatpush1.msra.mxu0 0.0
    %2306 = vmatprep.subr.mxu0 0.0
    %2307 = vmatpush1.msra.mxu0 0.0
    %2308 = vmatprep.subr.mxu0 0.0
    %2309 = vmatpush1.msra.mxu0 0.0
    %2310 = vmatprep.subr.mxu0 0.0
    %2311 = vmatpush1.msra.mxu0 0.0
    %2312 = vmatprep.subr.mxu0 0.0
    %2313 = vmatpush1.msra.mxu0 0.0
    %2314 = vmatprep.subr.mxu0 0.0
    %2315 = vmatpush1.msra.mxu0 0.0
    %2316 = vmatprep.subr.mxu0 0.0
    %2317 = vmatpush1.msra.mxu0 0.0
    %2318 = vmatprep.subr.mxu0 0.0
    %2319 = vmatpush1.msra.mxu0 0.0
    %2320 = vmatprep.subr.mxu0 0.0
    %2321 = vmatpush1.msra.mxu0 0.0
    %2322 = vmatprep.subr.mxu0 0.0
    %2323 = vmatpush1.msra.mxu0 0.0
    %2324 = vmatprep.subr.mxu0 0.0
    %2325 = vmatpush1.msra.mxu0 0.0
    %2326 = vmatprep.subr.mxu0 0.0
    %2327 = vmatpush1.msra.mxu0 0.0
    %2328 = vmatprep.subr.mxu0 0.0
    %2329 = vmatpush1.msra.mxu0 0.0
    %2330 = vmatprep.subr.mxu0 0.0
    %2331 = vmatpush1.msra.mxu0 0.0
    %2332 = vmatprep.subr.mxu0 0.0
    %2333 = vmatpush1.msra.mxu0 0.0
    %2334 = vmatprep.subr.mxu0 0.0
    %2335 = vmatpush1.msra.mxu0 0.0
    %2336 = vmatprep.subr.mxu0 0.0
    %2337 = vmatpush1.msra.mxu0 0.0
    %2338 = vmatprep.subr.mxu0 0.0
    %2339 = vmatpush1.msra.mxu0 0.0
    %2340 = vmatprep.subr.mxu0 0.0
    %2341 = vmatpush1.msra.mxu0 0.0
    %2342 = vmatprep.subr.mxu0 0.0
    %2343 = vmatpush1.msra.mxu0 0.0
    %2344 = vmatprep.subr.mxu0 0.0
    %2345 = vmatpush1.msra.mxu0 0.0
    %2346 = vmatprep.mubr.f32.mxu0 0.0
    %2347 = vmatmul.mubr.f32.gmra.mrb[0].mxu0 %v2280
    %v2348 = vpop.f32.mrb[0].mxu0
    %v2349 = vadd.f32 %v2274, %v2348
    %v2350 = vpop.f32.mrb[0].mxu0
    %2351 = vdwg.mxu0
    %v2352 = vadd.f32 %v2349, %v118
    %v2353 = vxor.u32 %v2352, 2147483648
    %v2354 = vmul.f32 %v2353, 1.442695
    %v2355 = vpow.pop %v2354
    %v2356 = vadd.f32 %v2355, 1.0
    %v2357 = vrcp.pop %v2356
    %v2358 = vmul.f32 1.0, %v2357
    %v2359 = vtanh.pop %v2352
    %v2360 = vmul.f32 %v2358, %v2099
    %2362 = vrot.lane.b32.xlu0 %v2359, 64
    %v2363 = vpop.permute.xlu0 %2362
    %v2365 = vmul.f32 %v2358, %v2363
    %2367 = vrot.lane.b32.xlu0 %v2365, 32
    %v2368 = vpop.permute.xlu0 %2367
    %v2370 = vadd.f32 %v2360, %v2368
    %v2371 = vtanh.pop %v2370
    %2373 = vrot.lane.b32.xlu0 %v2371, 64
    %v2374 = vpop.permute.xlu0 %2373
    %v2376 = vmul.f32 %v2358, %v2374
    %vm2378 = vcmask 253952
    %2379 = vst.msk [vmem:[#allocation3] sm:$0x1] %vm2378, %v2279
    %2381 = vrot.lane.b32.xlu0 %v2195, 96
    %v2382 = vpop.permute.xlu0 %2381
    %2384 = vst.msk [vmem:[#allocation4] sm:$0x1] %vm2378, %v2382
    %2386 = vrot.lane.b32.xlu0 %v2376, 32
    %v2387 = vpop.permute.xlu0 %2386
    %2389 = vst.msk [vmem:[#allocation5] sm:$0x1] %vm2378, %v2387
    %2391 = vrot.lane.b32.xlu0 %v2370, 96
    %v2392 = vpop.permute.xlu0 %2391
    %2394 = vst.msk [vmem:[#allocation6] sm:$0x1] %vm2378, %v2392
    // Predicated region
    $region54: #{tpu_custom_call.1} parent=1 // pred_check
      %p2395 = pneg %p97
    $region55: #{tpu_custom_call.1} parent=1 // pred_check_branch
      %2397 = sbr.rel (%p2395) target = $region57
    $region56: #{tpu_custom_call.1} parent=1 // pred_region
      %2398 = vst.msk [vmem:[#allocation16] sm:$0x1] %vm2378, %v2279
      %s2399 = scalar_lea.vmem [#allocation16], 1
      %2400 = vst.msk [vmem:[%s2399] sm:$0x1] %vm2378, %v2387
      %2401 = vst.msk [vmem:[#allocation17] sm:$0x1] %vm2378, %v2382
      %s2402 = scalar_lea.vmem [#allocation17], 1
      %2403 = vst.msk [vmem:[%s2402] sm:$0x1] %vm2378, %v2392
    $region57: #{tpu_custom_call.1} parent=1 // pred_fallthru
      _
    // Predicated region
    $region58: #{tpu_custom_call.1} parent=1 // pred_check
      _
    $region59: #{tpu_custom_call.1} parent=1 // pred_check_branch
      %2405 = sbr.rel (0) target = $region61
    $region60: #{tpu_custom_call.1} parent=1 // pred_region
      %s2407 = ssub.s32 32, 32
      %2408 = vsyncadd [#allocation9], %s2407
      %s2409 = sshll.u32 [#allocation16], 4
      %s2410 = int_to_ptr.vmem [resolvable:$true] %s2409
      %2415 = dma.vmem_to_hbm [thread:$0]  %s2410, 32, %s7, [#allocation9], 16, 16, 1
    $region61: #{tpu_custom_call.1} parent=1 // pred_fallthru
      _
    // Predicated region
    $region62: #{tpu_custom_call.1} parent=1 // pred_check
      _
    $region63: #{tpu_custom_call.1} parent=1 // pred_check_branch
      %2417 = sbr.rel (0) target = $region65
    $region64: #{tpu_custom_call.1} parent=1 // pred_region
      %s2419 = ssub.s32 32, 32
      %2420 = vsyncadd [#allocation18], %s2419
      %s2421 = sshll.u32 [#allocation17], 4
      %s2422 = int_to_ptr.vmem [resolvable:$true] %s2421
      %2427 = dma.vmem_to_hbm [thread:$0]  %s2422, 32, %s8, [#allocation18], 16, 16, 1
    $region65: #{tpu_custom_call.1} parent=1 // pred_fallthru
      _
    // Predicated region
    $region66: #{tpu_custom_call.1} parent=1 // pred_check
      _
    $region67: #{tpu_custom_call.1} parent=1 // pred_check_branch
      %2429 = sbr.rel (0) target = $region69
    $region68: #{tpu_custom_call.1} parent=1 // pred_region
      %2430 = dma.done [#allocation9], 32
    $region69: #{tpu_custom_call.1} parent=1 // pred_fallthru
      _
    // Predicated region
    $region70: #{tpu_custom_call.1} parent=1 // pred_check
      _
    $region71: #{tpu_custom_call.1} parent=1 // pred_check_branch
      %2432 = sbr.rel (0) target = $region73
    $region72: #{tpu_custom_call.1} parent=1 // pred_region
      %2433 = dma.done [#allocation18], 32
    $region73: #{tpu_custom_call.1} parent=1 // pred_fallthru
      _
    %2434 = vsyncpa [#allocation8], 1
    %2435 = vsyncpa [#allocation11], 1
    %2436 = vsyncpa [#allocation14], 1
    %2437 = vsyncpa [#allocation9], 1
    %2438 = vsyncpa [#allocation18], 1

</llo_original>
